<compile_context>
chip_gen: v7x
topology: tpu7x:2x2x1
jax: 0.10.0
libtpu: 0.0.40
codegen_flags: <defaults>
</compile_context>

<pallas_src>
import functools

import jax
import jax.numpy as jnp
from jax import lax
from jax.experimental import pallas as pl
from jax.experimental.pallas import tpu as pltpu


# ------------------------------------------------------------------
# In-kernel bidirectional LSTM layer (both directions fused)
# ------------------------------------------------------------------
def _bidir_lstm_layer(x_ref, wih_ref, whh_ref, b_ref, xg_scr, out_buf,
                      fwd_mask, T, H):
    # x_ref:   (T, D_in)        wih_ref: (D_in, 8H)  packed [i_f i_b f_f f_b g_f g_b o_f o_b]
    # whh_ref: (2H, 8H)         b_ref:   (1, 8H)
    # xg_scr:  (T, 8H) scratch  out_buf: (T, 2H)  columns [fwd H | bwd H]
    G2 = 8 * H

    # Hoisted input projection: all timesteps, both directions, one MXU pass.
    xg_scr[...] = (jnp.dot(x_ref[...], wih_ref[...],
                           preferred_element_type=jnp.float32) + b_ref[...])
    whh = whh_ref[...]                       # hoisted out of the recurrence

    def step(t, carry):
        h, c = carry                         # (1, 2H) each: [fwd | bwd]
        tr = T - 1 - t                       # in-kernel time reversal for bwd dir
        # single recurrent matmul for both directions: (1, 2H) x (2H, 8H)
        hg = jnp.dot(h, whh, preferred_element_type=jnp.float32)     # (1, 8H)
        # fwd gate columns use x[t], bwd gate columns use x[T-1-t]
        xrow = jnp.where(fwd_mask,
                         xg_scr[pl.ds(t, 1), :],
                         xg_scr[pl.ds(tr, 1), :])                    # (1, 8H)
        gates = xrow + hg
        # whole-vreg activations (EUP), then 2H-wide aligned gate slices
        sig = jax.nn.sigmoid(gates)
        th = jnp.tanh(gates)
        i = sig[:, 0:2 * H]
        f = sig[:, 2 * H:4 * H]
        g = th[:, 4 * H:6 * H]
        o = sig[:, 6 * H:8 * H]
        c_new = f * c + i * g                # (1, 2H)
        h_new = o * jnp.tanh(c_new)          # (1, 2H) = [h_fwd | h_bwd]
        out_buf[pl.ds(t, 1), 0:H] = h_new[:, 0:H]
        out_buf[pl.ds(tr, 1), H:2 * H] = h_new[:, H:2 * H]
        return (h_new, c_new)

    zero = jnp.zeros((1, 2 * H), jnp.float32)
    lax.fori_loop(0, T, step, (zero, zero), unroll=True)


# ------------------------------------------------------------------
# Fused forward kernel: LSTM stack + pair gather + 9-layer Linear stack
# ------------------------------------------------------------------
def _fused_forward_kernel(*args, T, H, num_layers, num_mlp, P):
    start_ref, end_ref, emb_ref = args[0], args[1], args[2]
    pos = 3
    lstm_refs = [args[pos + 3 * l: pos + 3 * l + 3] for l in range(num_layers)]
    pos += 3 * num_layers
    mlp_refs = [args[pos + 2 * i: pos + 2 * i + 2] for i in range(num_mlp)]
    pos += 2 * num_mlp
    out_ref = args[pos]
    xg_scr, seq_a, seq_b, span_scr = args[pos + 1: pos + 5]

    # lane mask selecting forward-direction gate columns (hoisted, built once)
    lane = lax.broadcasted_iota(jnp.int32, (1, 8 * H), 1)
    fwd_mask = (lane % (2 * H)) < H

    bufs = (seq_a, seq_b)
    cur = emb_ref
    for l in range(num_layers):
        wih_ref, whh_ref, b_ref = lstm_refs[l]
        out_buf = bufs[l % 2]
        _bidir_lstm_layer(cur, wih_ref, whh_ref, b_ref, xg_scr, out_buf,
                          fwd_mask, T, H)
        cur = out_buf                        # (T, 2H)

    # pair gather (lstm_pairs): span[p] = [h[start[p]] | h[end[p]]]
    span_scr[...] = jnp.zeros_like(span_scr)
    for p in range(P):
        s = start_ref[p]
        e = end_ref[p]
        span_scr[pl.ds(p, 1), 0:2 * H] = cur[pl.ds(s, 1), :]
        span_scr[pl.ds(p, 1), 2 * H:4 * H] = cur[pl.ds(e, 1), :]

    # fused 9-layer Linear stack; last layer is zero-padded to 128 output lanes
    hm = span_scr[...]                       # (P_pad, 4H)
    for (w_ref, bl_ref) in mlp_refs:
        hm = jnp.dot(hm, w_ref[...], preferred_element_type=jnp.float32) + bl_ref[...]
    out_ref[...] = hm                        # (P_pad, 128) lane-dense store


# ------------------------------------------------------------------
# Parameter construction (deterministic, synthetic, torch-like layout)
# ------------------------------------------------------------------
def make_params(key, num_words, num_labels, num_layers, hidden_size):
    H = hidden_size
    keys = iter(jax.random.split(key, 64))
    scale = 0.05

    def rnd(shape):
        return scale * jax.random.normal(next(keys), shape, dtype=jnp.float32)

    params = {"embedding": rnd((num_words, H)), "lstm": [], "mlp_w": [], "mlp_b": []}
    for l in range(num_layers):
        d_in = H if l == 0 else 2 * H
        params["lstm"].append({
            "wih_f": rnd((d_in, 4 * H)), "whh_f": rnd((H, 4 * H)), "b_f": rnd((4 * H,)),
            "wih_b": rnd((d_in, 4 * H)), "whh_b": rnd((H, 4 * H)), "b_b": rnd((4 * H,)),
        })
    sizes = [(4 * H, 4 * H)] * 5 + [(4 * H, H)] + [(H, H)] * 2 + [(H, num_labels)]
    for (din, dout) in sizes:
        params["mlp_w"].append(rnd((din, dout)))
        params["mlp_b"].append(rnd((dout,)))
    return params


# ------------------------------------------------------------------
# One-time packing of weights into the fused-kernel layout
# ------------------------------------------------------------------
def _pack_input_gates(w_f, w_b, H):
    # (D, 4H),(D, 4H) -> (D, 8H) columns [i_f i_b f_f f_b g_f g_b o_f o_b]
    cols = []
    for k in range(4):
        cols.append(w_f[:, k * H:(k + 1) * H])
        cols.append(w_b[:, k * H:(k + 1) * H])
    return jnp.concatenate(cols, axis=1)


def _pack_recurrent(whh_f, whh_b, H):
    # (H, 4H),(H, 4H) -> (2H, 8H) block form so [h_f | h_b] @ W gives
    # fwd gates from h_f only and bwd gates from h_b only.
    z = jnp.zeros((H, H), jnp.float32)
    top, bot = [], []
    for k in range(4):
        top += [whh_f[:, k * H:(k + 1) * H], z]
        bot += [z, whh_b[:, k * H:(k + 1) * H]]
    return jnp.concatenate([jnp.concatenate(top, axis=1),
                            jnp.concatenate(bot, axis=1)], axis=0)


def _pack_bias(b_f, b_b, H):
    segs = []
    for k in range(4):
        segs.append(b_f[k * H:(k + 1) * H])
        segs.append(b_b[k * H:(k + 1) * H])
    return jnp.concatenate(segs, axis=0).reshape(1, -1)


def pack_params(params, hidden_size, num_labels, label_pad=128):
    H = hidden_size
    packed = {"embedding": params["embedding"], "hidden_size": H,
              "num_labels": num_labels, "lstm": [], "mlp": []}
    for p in params["lstm"]:
        packed["lstm"].append((
            _pack_input_gates(p["wih_f"], p["wih_b"], H),
            _pack_recurrent(p["whh_f"], p["whh_b"], H),
            _pack_bias(p["b_f"], p["b_b"], H),
        ))
    n = len(params["mlp_w"])
    for i, (w, b) in enumerate(zip(params["mlp_w"], params["mlp_b"])):
        if i == n - 1:  # lane-dense final layer: pad num_labels -> label_pad
            w = jnp.pad(w, ((0, 0), (0, label_pad - w.shape[1])))
            b = jnp.pad(b, (0, label_pad - b.shape[0]))
        packed["mlp"].append((w, b.reshape(1, -1)))
    return packed


# ------------------------------------------------------------------
# Full forward pass (LSTMClassifier1.forward), one pallas_call
# ------------------------------------------------------------------
def forward(packed, x_ids, start_pairs, end_pairs):
    H = packed["hidden_size"]
    num_layers = len(packed["lstm"])
    num_mlp = len(packed["mlp"])
    num_labels = packed["num_labels"]
    label_pad = packed["mlp"][-1][0].shape[1]

    emb = jnp.take(packed["embedding"], x_ids[0], axis=0)      # (T, H)
    T = int(emb.shape[0])
    P = int(start_pairs.shape[0])
    P_pad = max(8, ((P + 7) // 8) * 8)

    lstm_flat = [a for triple in packed["lstm"] for a in triple]
    mlp_flat = [a for pair in packed["mlp"] for a in pair]

    kernel = functools.partial(_fused_forward_kernel, T=T, H=H,
                               num_layers=num_layers, num_mlp=num_mlp, P=P)
    n_vmem_in = 1 + 3 * num_layers + 2 * num_mlp

    out = pl.pallas_call(
        kernel,
        out_shape=jax.ShapeDtypeStruct((P_pad, label_pad), jnp.float32),
        in_specs=([pl.BlockSpec(memory_space=pltpu.MemorySpace.SMEM)] * 2
                  + [pl.BlockSpec(memory_space=pltpu.MemorySpace.VMEM)] * n_vmem_in),
        out_specs=pl.BlockSpec(memory_space=pltpu.MemorySpace.VMEM),
        scratch_shapes=[
            pltpu.VMEM((T, 8 * H), jnp.float32),       # hoisted input projection
            pltpu.VMEM((T, 2 * H), jnp.float32),       # layer output (ping)
            pltpu.VMEM((T, 2 * H), jnp.float32),       # layer output (pong)
            pltpu.VMEM((P_pad, 4 * H), jnp.float32),   # span embeddings
        ],
    )(start_pairs, end_pairs, emb, *lstm_flat, *mlp_flat)

    logits = out[:P, :num_labels]
    # torch .squeeze(0): drop dim 0 only if it is 1
    if logits.shape[0] == 1:
        logits = jnp.squeeze(logits, axis=0)
    return logits


# ------------------------------------------------------------------
# Pure-JAX reference (on the original, unpacked parameters)
# ------------------------------------------------------------------
def reference_forward(params, x_ids, start_pairs, end_pairs, num_layers):
    H = params["lstm"][0]["whh_f"].shape[0]
    emb = jnp.take(params["embedding"], x_ids[0], axis=0)

    def run_dir(x, wih, whh, b):
        def step(carry, x_t):
            hh, cc = carry
            gates = x_t @ wih + hh @ whh + b
            i = jax.nn.sigmoid(gates[0:H])
            f = jax.nn.sigmoid(gates[H:2 * H])
            g = jnp.tanh(gates[2 * H:3 * H])
            o = jax.nn.sigmoid(gates[3 * H:4 * H])
            cn = f * cc + i * g
            hn = o * jnp.tanh(cn)
            return (hn, cn), hn

        (_, _), outs = lax.scan(step, (jnp.zeros(H), jnp.zeros(H)), x)
        return outs

    h = emb
    for l in range(num_layers):
        p = params["lstm"][l]
        fwd = run_dir(h, p["wih_f"], p["whh_f"], p["b_f"])
        bwd = run_dir(h[::-1], p["wih_b"], p["whh_b"], p["b_b"])[::-1]
        h = jnp.concatenate([fwd, bwd], axis=1)

    span = jnp.concatenate([jnp.take(h, start_pairs, axis=0),
                            jnp.take(h, end_pairs, axis=0)], axis=1)
    out = span
    for w, b in zip(params["mlp_w"], params["mlp_b"]):
        out = out @ w + b
    if out.shape[0] == 1:
        out = jnp.squeeze(out, axis=0)
    return out


if __name__ == "__main__":
    num_words, num_labels, num_layers, hidden_size = 50, 3, 2, 32
    seq_len, num_pairs = 8, 4

    key = jax.random.PRNGKey(0)
    k_param, k_x, k_s, k_e = jax.random.split(key, 4)

    params = make_params(k_param, num_words, num_labels, num_layers, hidden_size)
    packed = pack_params(params, hidden_size, num_labels)

    x_ids = jax.random.randint(k_x, (1, seq_len), 0, num_words, dtype=jnp.int32)
    start_pairs = jax.random.randint(k_s, (num_pairs,), 0, seq_len, dtype=jnp.int32)
    end_pairs = jax.random.randint(k_e, (num_pairs,), 0, seq_len, dtype=jnp.int32)

    logits = forward(packed, x_ids, start_pairs, end_pairs)
    logits = jax.block_until_ready(logits)

    ref = reference_forward(params, x_ids, start_pairs, end_pairs, num_layers)
    assert logits.shape == (num_pairs, num_labels)
    assert jnp.allclose(logits, ref, atol=1e-2, rtol=1e-2)

    print("KERNEL_OK")
</pallas_src>

<mosaic_0001>
module attributes {stable_mosaic.version = 11 : i64} {
  func.func @_fused_forward_kernel(%arg0: memref<4xi32, #tpu.memory_space<smem>>, %arg1: memref<4xi32, #tpu.memory_space<smem>>, %arg2: memref<8x32xf32, #tpu.memory_space<vmem>>, %arg3: memref<32x256xf32, #tpu.memory_space<vmem>>, %arg4: memref<64x256xf32, #tpu.memory_space<vmem>>, %arg5: memref<1x256xf32, #tpu.memory_space<vmem>>, %arg6: memref<64x256xf32, #tpu.memory_space<vmem>>, %arg7: memref<64x256xf32, #tpu.memory_space<vmem>>, %arg8: memref<1x256xf32, #tpu.memory_space<vmem>>, %arg9: memref<128x128xf32, #tpu.memory_space<vmem>>, %arg10: memref<1x128xf32, #tpu.memory_space<vmem>>, %arg11: memref<128x128xf32, #tpu.memory_space<vmem>>, %arg12: memref<1x128xf32, #tpu.memory_space<vmem>>, %arg13: memref<128x128xf32, #tpu.memory_space<vmem>>, %arg14: memref<1x128xf32, #tpu.memory_space<vmem>>, %arg15: memref<128x128xf32, #tpu.memory_space<vmem>>, %arg16: memref<1x128xf32, #tpu.memory_space<vmem>>, %arg17: memref<128x128xf32, #tpu.memory_space<vmem>>, %arg18: memref<1x128xf32, #tpu.memory_space<vmem>>, %arg19: memref<128x32xf32, #tpu.memory_space<vmem>>, %arg20: memref<1x32xf32, #tpu.memory_space<vmem>>, %arg21: memref<32x32xf32, #tpu.memory_space<vmem>>, %arg22: memref<1x32xf32, #tpu.memory_space<vmem>>, %arg23: memref<32x32xf32, #tpu.memory_space<vmem>>, %arg24: memref<1x32xf32, #tpu.memory_space<vmem>>, %arg25: memref<32x128xf32, #tpu.memory_space<vmem>>, %arg26: memref<1x128xf32, #tpu.memory_space<vmem>>, %arg27: memref<8x128xf32, #tpu.memory_space<vmem>>, %arg28: memref<8x256xf32, #tpu.memory_space<vmem>>, %arg29: memref<8x64xf32, #tpu.memory_space<vmem>>, %arg30: memref<8x64xf32, #tpu.memory_space<vmem>>, %arg31: memref<8x128xf32, #tpu.memory_space<vmem>>) attributes {dimension_semantics = [], scalar_prefetch = 0 : i64, scratch_operands = 4 : i64, tpu.core_type = #tpu.core_type<tc>} {
    %0 = tpu.iota {dimensions = array<i32: 1>} : vector<1x256xi32>
    %c64_i32 = arith.constant 64 : i32
    %c0_i32 = arith.constant 0 : i32
    %1 = arith.cmpi eq, %c64_i32, %c0_i32 : i32
    %c1_i32 = arith.constant 1 : i32
    %2 = arith.select %1, %c1_i32, %c64_i32 : i32
    %3 = vector.broadcast %2 : i32 to vector<1x256xi32>
    %4 = arith.remsi %0, %3 : vector<1x256xi32>
    %c0_i32_0 = arith.constant 0 : i32
    %5 = vector.broadcast %c0_i32_0 : i32 to vector<1x256xi32>
    %6 = arith.cmpi ne, %4, %5 : vector<1x256xi32>
    %c0_i32_1 = arith.constant 0 : i32
    %7 = vector.broadcast %c0_i32_1 : i32 to vector<1x256xi32>
    %8 = arith.cmpi slt, %4, %7 : vector<1x256xi32>
    %c0_i32_2 = arith.constant 0 : i32
    %9 = arith.cmpi slt, %2, %c0_i32_2 : i32
    %10 = vector.broadcast %9 : i1 to vector<1x256xi1>
    %11 = vector.broadcast %10 : vector<1x256xi1> to vector<1x256xi1>
    %12 = arith.xori %8, %11 : vector<1x256xi1>
    %13 = arith.andi %12, %6 : vector<1x256xi1>
    %14 = vector.broadcast %2 : i32 to vector<1x256xi32>
    %15 = arith.addi %4, %14 : vector<1x256xi32>
    %16 = arith.select %13, %15, %4 : vector<1x256xi1>, vector<1x256xi32>
    %c32_i32 = arith.constant 32 : i32
    %17 = vector.broadcast %c32_i32 : i32 to vector<1x256xi32>
    %18 = arith.cmpi slt, %16, %17 : vector<1x256xi32>
    %c0 = arith.constant 0 : index
    %c0_3 = arith.constant 0 : index
    %19 = vector.load %arg2[%c0, %c0_3] : memref<8x32xf32, #tpu.memory_space<vmem>>, vector<8x32xf32>
    %c0_4 = arith.constant 0 : index
    %c0_5 = arith.constant 0 : index
    %20 = vector.load %arg3[%c0_4, %c0_5] : memref<32x256xf32, #tpu.memory_space<vmem>>, vector<32x256xf32>
    %cst = arith.constant dense<0.000000e+00> : vector<8x256xf32>
    %21 = tpu.matmul %19, %20, %cst {dimension_numbers = #tpu.dot_dimension_numbers<[1], [0], [0], [1], [0, 0, 1, 1], [], []>} : vector<8x32xf32>, vector<32x256xf32>, vector<8x256xf32> -> vector<8x256xf32>
    %c0_6 = arith.constant 0 : index
    %c0_7 = arith.constant 0 : index
    %22 = vector.load %arg5[%c0_6, %c0_7] : memref<1x256xf32, #tpu.memory_space<vmem>>, vector<1x256xf32>
    %23 = vector.broadcast %22 : vector<1x256xf32> to vector<8x256xf32>
    %24 = arith.addf %21, %23 : vector<8x256xf32>
    %c0_8 = arith.constant 0 : index
    %c0_9 = arith.constant 0 : index
    %25 = vector.load %arg28[%c0_8, %c0_9] : memref<8x256xf32, #tpu.memory_space<vmem>>, vector<8x256xf32>
    tpu.vector_store %arg28[%c0_8, %c0_9], %24 {strides = array<i32>} : memref<8x256xf32, #tpu.memory_space<vmem>>, vector<8x256xf32>,
    %c0_10 = arith.constant 0 : index
    %c0_11 = arith.constant 0 : index
    %26 = vector.load %arg4[%c0_10, %c0_11] : memref<64x256xf32, #tpu.memory_space<vmem>>, vector<64x256xf32>
    %cst_12 = arith.constant 0.000000e+00 : f32
    %27 = vector.broadcast %cst_12 : f32 to vector<1x64xf32>
    %c0_i32_13 = arith.constant 0 : i32
    %c7_i32 = arith.constant 7 : i32
    %28 = arith.subi %c7_i32, %c0_i32_13 : i32
    %cst_14 = arith.constant dense<0.000000e+00> : vector<1x256xf32>
    %29 = tpu.matmul %27, %26, %cst_14 {dimension_numbers = #tpu.dot_dimension_numbers<[1], [0], [0], [1], [0, 0, 1, 1], [], []>} : vector<1x64xf32>, vector<64x256xf32>, vector<1x256xf32> -> vector<1x256xf32>
    %30 = arith.index_cast %c0_i32_13 : i32 to index
    %c0_15 = arith.constant 0 : index
    %31 = vector.load %arg28[%30, %c0_15] : memref<8x256xf32, #tpu.memory_space<vmem>>, vector<1x256xf32>
    %32 = arith.index_cast %28 : i32 to index
    %c0_16 = arith.constant 0 : index
    %33 = vector.load %arg28[%32, %c0_16] : memref<8x256xf32, #tpu.memory_space<vmem>>, vector<1x256xf32>
    %34 = arith.select %18, %31, %33 : vector<1x256xi1>, vector<1x256xf32>
    %35 = arith.addf %34, %29 : vector<1x256xf32>
    %36 = arith.negf %35 : vector<1x256xf32>
    %37 = math.exp %36 : vector<1x256xf32>
    %cst_17 = arith.constant 1.000000e+00 : f32
    %38 = vector.broadcast %cst_17 : f32 to vector<1x256xf32>
    %39 = arith.addf %38, %37 : vector<1x256xf32>
    %40 = arith.divf %38, %39 : vector<1x256xf32>
    %41 = math.tanh %35 : vector<1x256xf32>
    %42 = vector.extract_strided_slice %40 {offsets = [0, 0], sizes = [1, 64], strides = [1, 1]} : vector<1x256xf32> to vector<1x64xf32>
    %43 = vector.extract_strided_slice %40 {offsets = [0, 64], sizes = [1, 64], strides = [1, 1]} : vector<1x256xf32> to vector<1x64xf32>
    %44 = vector.extract_strided_slice %41 {offsets = [0, 128], sizes = [1, 64], strides = [1, 1]} : vector<1x256xf32> to vector<1x64xf32>
    %45 = vector.extract_strided_slice %40 {offsets = [0, 192], sizes = [1, 64], strides = [1, 1]} : vector<1x256xf32> to vector<1x64xf32>
    %46 = arith.mulf %43, %27 : vector<1x64xf32>
    %47 = arith.mulf %42, %44 : vector<1x64xf32>
    %48 = arith.addf %46, %47 : vector<1x64xf32>
    %49 = math.tanh %48 : vector<1x64xf32>
    %50 = arith.mulf %45, %49 : vector<1x64xf32>
    %51 = vector.extract_strided_slice %50 {offsets = [0, 0], sizes = [1, 32], strides = [1, 1]} : vector<1x64xf32> to vector<1x32xf32>
    %52 = arith.index_cast %c0_i32_13 : i32 to index
    %c0_18 = arith.constant 0 : index
    %53 = vector.load %arg29[%52, %c0_18] : memref<8x64xf32, #tpu.memory_space<vmem>>, vector<1x32xf32>
    tpu.vector_store %arg29[%52, %c0_18], %51 {strides = array<i32>} : memref<8x64xf32, #tpu.memory_space<vmem>>, vector<1x32xf32>,
    %54 = vector.extract_strided_slice %50 {offsets = [0, 32], sizes = [1, 32], strides = [1, 1]} : vector<1x64xf32> to vector<1x32xf32>
    %55 = arith.index_cast %28 : i32 to index
    %c32 = arith.constant 32 : index
    %56 = vector.load %arg29[%55, %c32] : memref<8x64xf32, #tpu.memory_space<vmem>>, vector<1x32xf32>
    tpu.vector_store %arg29[%55, %c32], %54 {strides = array<i32>} : memref<8x64xf32, #tpu.memory_space<vmem>>, vector<1x32xf32>,
    %c1_i32_19 = arith.constant 1 : i32
    %c7_i32_20 = arith.constant 7 : i32
    %57 = arith.subi %c7_i32_20, %c1_i32_19 : i32
    %cst_21 = arith.constant dense<0.000000e+00> : vector<1x256xf32>
    %58 = tpu.matmul %50, %26, %cst_21 {dimension_numbers = #tpu.dot_dimension_numbers<[1], [0], [0], [1], [0, 0, 1, 1], [], []>} : vector<1x64xf32>, vector<64x256xf32>, vector<1x256xf32> -> vector<1x256xf32>
    %59 = arith.index_cast %c1_i32_19 : i32 to index
    %c0_22 = arith.constant 0 : index
    %60 = vector.load %arg28[%59, %c0_22] : memref<8x256xf32, #tpu.memory_space<vmem>>, vector<1x256xf32>
    %61 = arith.index_cast %57 : i32 to index
    %c0_23 = arith.constant 0 : index
    %62 = vector.load %arg28[%61, %c0_23] : memref<8x256xf32, #tpu.memory_space<vmem>>, vector<1x256xf32>
    %63 = arith.select %18, %60, %62 : vector<1x256xi1>, vector<1x256xf32>
    %64 = arith.addf %63, %58 : vector<1x256xf32>
    %65 = arith.negf %64 : vector<1x256xf32>
    %66 = math.exp %65 : vector<1x256xf32>
    %cst_24 = arith.constant 1.000000e+00 : f32
    %67 = vector.broadcast %cst_24 : f32 to vector<1x256xf32>
    %68 = arith.addf %67, %66 : vector<1x256xf32>
    %69 = arith.divf %67, %68 : vector<1x256xf32>
    %70 = math.tanh %64 : vector<1x256xf32>
    %71 = vector.extract_strided_slice %69 {offsets = [0, 0], sizes = [1, 64], strides = [1, 1]} : vector<1x256xf32> to vector<1x64xf32>
    %72 = vector.extract_strided_slice %69 {offsets = [0, 64], sizes = [1, 64], strides = [1, 1]} : vector<1x256xf32> to vector<1x64xf32>
    %73 = vector.extract_strided_slice %70 {offsets = [0, 128], sizes = [1, 64], strides = [1, 1]} : vector<1x256xf32> to vector<1x64xf32>
    %74 = vector.extract_strided_slice %69 {offsets = [0, 192], sizes = [1, 64], strides = [1, 1]} : vector<1x256xf32> to vector<1x64xf32>
    %75 = arith.mulf %72, %48 : vector<1x64xf32>
    %76 = arith.mulf %71, %73 : vector<1x64xf32>
    %77 = arith.addf %75, %76 : vector<1x64xf32>
    %78 = math.tanh %77 : vector<1x64xf32>
    %79 = arith.mulf %74, %78 : vector<1x64xf32>
    %80 = vector.extract_strided_slice %79 {offsets = [0, 0], sizes = [1, 32], strides = [1, 1]} : vector<1x64xf32> to vector<1x32xf32>
    %81 = arith.index_cast %c1_i32_19 : i32 to index
    %c0_25 = arith.constant 0 : index
    %82 = vector.load %arg29[%81, %c0_25] : memref<8x64xf32, #tpu.memory_space<vmem>>, vector<1x32xf32>
    tpu.vector_store %arg29[%81, %c0_25], %80 {strides = array<i32>} : memref<8x64xf32, #tpu.memory_space<vmem>>, vector<1x32xf32>,
    %83 = vector.extract_strided_slice %79 {offsets = [0, 32], sizes = [1, 32], strides = [1, 1]} : vector<1x64xf32> to vector<1x32xf32>
    %84 = arith.index_cast %57 : i32 to index
    %c32_26 = arith.constant 32 : index
    %85 = vector.load %arg29[%84, %c32_26] : memref<8x64xf32, #tpu.memory_space<vmem>>, vector<1x32xf32>
    tpu.vector_store %arg29[%84, %c32_26], %83 {strides = array<i32>} : memref<8x64xf32, #tpu.memory_space<vmem>>, vector<1x32xf32>,
    %c2_i32 = arith.constant 2 : i32
    %c7_i32_27 = arith.constant 7 : i32
    %86 = arith.subi %c7_i32_27, %c2_i32 : i32
    %cst_28 = arith.constant dense<0.000000e+00> : vector<1x256xf32>
    %87 = tpu.matmul %79, %26, %cst_28 {dimension_numbers = #tpu.dot_dimension_numbers<[1], [0], [0], [1], [0, 0, 1, 1], [], []>} : vector<1x64xf32>, vector<64x256xf32>, vector<1x256xf32> -> vector<1x256xf32>
    %88 = arith.index_cast %c2_i32 : i32 to index
    %c0_29 = arith.constant 0 : index
    %89 = vector.load %arg28[%88, %c0_29] : memref<8x256xf32, #tpu.memory_space<vmem>>, vector<1x256xf32>
    %90 = arith.index_cast %86 : i32 to index
    %c0_30 = arith.constant 0 : index
    %91 = vector.load %arg28[%90, %c0_30] : memref<8x256xf32, #tpu.memory_space<vmem>>, vector<1x256xf32>
    %92 = arith.select %18, %89, %91 : vector<1x256xi1>, vector<1x256xf32>
    %93 = arith.addf %92, %87 : vector<1x256xf32>
    %94 = arith.negf %93 : vector<1x256xf32>
    %95 = math.exp %94 : vector<1x256xf32>
    %cst_31 = arith.constant 1.000000e+00 : f32
    %96 = vector.broadcast %cst_31 : f32 to vector<1x256xf32>
    %97 = arith.addf %96, %95 : vector<1x256xf32>
    %98 = arith.divf %96, %97 : vector<1x256xf32>
    %99 = math.tanh %93 : vector<1x256xf32>
    %100 = vector.extract_strided_slice %98 {offsets = [0, 0], sizes = [1, 64], strides = [1, 1]} : vector<1x256xf32> to vector<1x64xf32>
    %101 = vector.extract_strided_slice %98 {offsets = [0, 64], sizes = [1, 64], strides = [1, 1]} : vector<1x256xf32> to vector<1x64xf32>
    %102 = vector.extract_strided_slice %99 {offsets = [0, 128], sizes = [1, 64], strides = [1, 1]} : vector<1x256xf32> to vector<1x64xf32>
    %103 = vector.extract_strided_slice %98 {offsets = [0, 192], sizes = [1, 64], strides = [1, 1]} : vector<1x256xf32> to vector<1x64xf32>
    %104 = arith.mulf %101, %77 : vector<1x64xf32>
    %105 = arith.mulf %100, %102 : vector<1x64xf32>
    %106 = arith.addf %104, %105 : vector<1x64xf32>
    %107 = math.tanh %106 : vector<1x64xf32>
    %108 = arith.mulf %103, %107 : vector<1x64xf32>
    %109 = vector.extract_strided_slice %108 {offsets = [0, 0], sizes = [1, 32], strides = [1, 1]} : vector<1x64xf32> to vector<1x32xf32>
    %110 = arith.index_cast %c2_i32 : i32 to index
    %c0_32 = arith.constant 0 : index
    %111 = vector.load %arg29[%110, %c0_32] : memref<8x64xf32, #tpu.memory_space<vmem>>, vector<1x32xf32>
    tpu.vector_store %arg29[%110, %c0_32], %109 {strides = array<i32>} : memref<8x64xf32, #tpu.memory_space<vmem>>, vector<1x32xf32>,
    %112 = vector.extract_strided_slice %108 {offsets = [0, 32], sizes = [1, 32], strides = [1, 1]} : vector<1x64xf32> to vector<1x32xf32>
    %113 = arith.index_cast %86 : i32 to index
    %c32_33 = arith.constant 32 : index
    %114 = vector.load %arg29[%113, %c32_33] : memref<8x64xf32, #tpu.memory_space<vmem>>, vector<1x32xf32>
    tpu.vector_store %arg29[%113, %c32_33], %112 {strides = array<i32>} : memref<8x64xf32, #tpu.memory_space<vmem>>, vector<1x32xf32>,
    %c3_i32 = arith.constant 3 : i32
    %c7_i32_34 = arith.constant 7 : i32
    %115 = arith.subi %c7_i32_34, %c3_i32 : i32
    %cst_35 = arith.constant dense<0.000000e+00> : vector<1x256xf32>
    %116 = tpu.matmul %108, %26, %cst_35 {dimension_numbers = #tpu.dot_dimension_numbers<[1], [0], [0], [1], [0, 0, 1, 1], [], []>} : vector<1x64xf32>, vector<64x256xf32>, vector<1x256xf32> -> vector<1x256xf32>
    %117 = arith.index_cast %c3_i32 : i32 to index
    %c0_36 = arith.constant 0 : index
    %118 = vector.load %arg28[%117, %c0_36] : memref<8x256xf32, #tpu.memory_space<vmem>>, vector<1x256xf32>
    %119 = arith.index_cast %115 : i32 to index
    %c0_37 = arith.constant 0 : index
    %120 = vector.load %arg28[%119, %c0_37] : memref<8x256xf32, #tpu.memory_space<vmem>>, vector<1x256xf32>
    %121 = arith.select %18, %118, %120 : vector<1x256xi1>, vector<1x256xf32>
    %122 = arith.addf %121, %116 : vector<1x256xf32>
    %123 = arith.negf %122 : vector<1x256xf32>
    %124 = math.exp %123 : vector<1x256xf32>
    %cst_38 = arith.constant 1.000000e+00 : f32
    %125 = vector.broadcast %cst_38 : f32 to vector<1x256xf32>
    %126 = arith.addf %125, %124 : vector<1x256xf32>
    %127 = arith.divf %125, %126 : vector<1x256xf32>
    %128 = math.tanh %122 : vector<1x256xf32>
    %129 = vector.extract_strided_slice %127 {offsets = [0, 0], sizes = [1, 64], strides = [1, 1]} : vector<1x256xf32> to vector<1x64xf32>
    %130 = vector.extract_strided_slice %127 {offsets = [0, 64], sizes = [1, 64], strides = [1, 1]} : vector<1x256xf32> to vector<1x64xf32>
    %131 = vector.extract_strided_slice %128 {offsets = [0, 128], sizes = [1, 64], strides = [1, 1]} : vector<1x256xf32> to vector<1x64xf32>
    %132 = vector.extract_strided_slice %127 {offsets = [0, 192], sizes = [1, 64], strides = [1, 1]} : vector<1x256xf32> to vector<1x64xf32>
    %133 = arith.mulf %130, %106 : vector<1x64xf32>
    %134 = arith.mulf %129, %131 : vector<1x64xf32>
    %135 = arith.addf %133, %134 : vector<1x64xf32>
    %136 = math.tanh %135 : vector<1x64xf32>
    %137 = arith.mulf %132, %136 : vector<1x64xf32>
    %138 = vector.extract_strided_slice %137 {offsets = [0, 0], sizes = [1, 32], strides = [1, 1]} : vector<1x64xf32> to vector<1x32xf32>
    %139 = arith.index_cast %c3_i32 : i32 to index
    %c0_39 = arith.constant 0 : index
    %140 = vector.load %arg29[%139, %c0_39] : memref<8x64xf32, #tpu.memory_space<vmem>>, vector<1x32xf32>
    tpu.vector_store %arg29[%139, %c0_39], %138 {strides = array<i32>} : memref<8x64xf32, #tpu.memory_space<vmem>>, vector<1x32xf32>,
    %141 = vector.extract_strided_slice %137 {offsets = [0, 32], sizes = [1, 32], strides = [1, 1]} : vector<1x64xf32> to vector<1x32xf32>
    %142 = arith.index_cast %115 : i32 to index
    %c32_40 = arith.constant 32 : index
    %143 = vector.load %arg29[%142, %c32_40] : memref<8x64xf32, #tpu.memory_space<vmem>>, vector<1x32xf32>
    tpu.vector_store %arg29[%142, %c32_40], %141 {strides = array<i32>} : memref<8x64xf32, #tpu.memory_space<vmem>>, vector<1x32xf32>,
    %c4_i32 = arith.constant 4 : i32
    %c7_i32_41 = arith.constant 7 : i32
    %144 = arith.subi %c7_i32_41, %c4_i32 : i32
    %cst_42 = arith.constant dense<0.000000e+00> : vector<1x256xf32>
    %145 = tpu.matmul %137, %26, %cst_42 {dimension_numbers = #tpu.dot_dimension_numbers<[1], [0], [0], [1], [0, 0, 1, 1], [], []>} : vector<1x64xf32>, vector<64x256xf32>, vector<1x256xf32> -> vector<1x256xf32>
    %146 = arith.index_cast %c4_i32 : i32 to index
    %c0_43 = arith.constant 0 : index
    %147 = vector.load %arg28[%146, %c0_43] : memref<8x256xf32, #tpu.memory_space<vmem>>, vector<1x256xf32>
    %148 = arith.index_cast %144 : i32 to index
    %c0_44 = arith.constant 0 : index
    %149 = vector.load %arg28[%148, %c0_44] : memref<8x256xf32, #tpu.memory_space<vmem>>, vector<1x256xf32>
    %150 = arith.select %18, %147, %149 : vector<1x256xi1>, vector<1x256xf32>
    %151 = arith.addf %150, %145 : vector<1x256xf32>
    %152 = arith.negf %151 : vector<1x256xf32>
    %153 = math.exp %152 : vector<1x256xf32>
    %cst_45 = arith.constant 1.000000e+00 : f32
    %154 = vector.broadcast %cst_45 : f32 to vector<1x256xf32>
    %155 = arith.addf %154, %153 : vector<1x256xf32>
    %156 = arith.divf %154, %155 : vector<1x256xf32>
    %157 = math.tanh %151 : vector<1x256xf32>
    %158 = vector.extract_strided_slice %156 {offsets = [0, 0], sizes = [1, 64], strides = [1, 1]} : vector<1x256xf32> to vector<1x64xf32>
    %159 = vector.extract_strided_slice %156 {offsets = [0, 64], sizes = [1, 64], strides = [1, 1]} : vector<1x256xf32> to vector<1x64xf32>
    %160 = vector.extract_strided_slice %157 {offsets = [0, 128], sizes = [1, 64], strides = [1, 1]} : vector<1x256xf32> to vector<1x64xf32>
    %161 = vector.extract_strided_slice %156 {offsets = [0, 192], sizes = [1, 64], strides = [1, 1]} : vector<1x256xf32> to vector<1x64xf32>
    %162 = arith.mulf %159, %135 : vector<1x64xf32>
    %163 = arith.mulf %158, %160 : vector<1x64xf32>
    %164 = arith.addf %162, %163 : vector<1x64xf32>
    %165 = math.tanh %164 : vector<1x64xf32>
    %166 = arith.mulf %161, %165 : vector<1x64xf32>
    %167 = vector.extract_strided_slice %166 {offsets = [0, 0], sizes = [1, 32], strides = [1, 1]} : vector<1x64xf32> to vector<1x32xf32>
    %168 = arith.index_cast %c4_i32 : i32 to index
    %c0_46 = arith.constant 0 : index
    %169 = vector.load %arg29[%168, %c0_46] : memref<8x64xf32, #tpu.memory_space<vmem>>, vector<1x32xf32>
    tpu.vector_store %arg29[%168, %c0_46], %167 {strides = array<i32>} : memref<8x64xf32, #tpu.memory_space<vmem>>, vector<1x32xf32>,
    %170 = vector.extract_strided_slice %166 {offsets = [0, 32], sizes = [1, 32], strides = [1, 1]} : vector<1x64xf32> to vector<1x32xf32>
    %171 = arith.index_cast %144 : i32 to index
    %c32_47 = arith.constant 32 : index
    %172 = vector.load %arg29[%171, %c32_47] : memref<8x64xf32, #tpu.memory_space<vmem>>, vector<1x32xf32>
    tpu.vector_store %arg29[%171, %c32_47], %170 {strides = array<i32>} : memref<8x64xf32, #tpu.memory_space<vmem>>, vector<1x32xf32>,
    %c5_i32 = arith.constant 5 : i32
    %c7_i32_48 = arith.constant 7 : i32
    %173 = arith.subi %c7_i32_48, %c5_i32 : i32
    %cst_49 = arith.constant dense<0.000000e+00> : vector<1x256xf32>
    %174 = tpu.matmul %166, %26, %cst_49 {dimension_numbers = #tpu.dot_dimension_numbers<[1], [0], [0], [1], [0, 0, 1, 1], [], []>} : vector<1x64xf32>, vector<64x256xf32>, vector<1x256xf32> -> vector<1x256xf32>
    %175 = arith.index_cast %c5_i32 : i32 to index
    %c0_50 = arith.constant 0 : index
    %176 = vector.load %arg28[%175, %c0_50] : memref<8x256xf32, #tpu.memory_space<vmem>>, vector<1x256xf32>
    %177 = arith.index_cast %173 : i32 to index
    %c0_51 = arith.constant 0 : index
    %178 = vector.load %arg28[%177, %c0_51] : memref<8x256xf32, #tpu.memory_space<vmem>>, vector<1x256xf32>
    %179 = arith.select %18, %176, %178 : vector<1x256xi1>, vector<1x256xf32>
    %180 = arith.addf %179, %174 : vector<1x256xf32>
    %181 = arith.negf %180 : vector<1x256xf32>
    %182 = math.exp %181 : vector<1x256xf32>
    %cst_52 = arith.constant 1.000000e+00 : f32
    %183 = vector.broadcast %cst_52 : f32 to vector<1x256xf32>
    %184 = arith.addf %183, %182 : vector<1x256xf32>
    %185 = arith.divf %183, %184 : vector<1x256xf32>
    %186 = math.tanh %180 : vector<1x256xf32>
    %187 = vector.extract_strided_slice %185 {offsets = [0, 0], sizes = [1, 64], strides = [1, 1]} : vector<1x256xf32> to vector<1x64xf32>
    %188 = vector.extract_strided_slice %185 {offsets = [0, 64], sizes = [1, 64], strides = [1, 1]} : vector<1x256xf32> to vector<1x64xf32>
    %189 = vector.extract_strided_slice %186 {offsets = [0, 128], sizes = [1, 64], strides = [1, 1]} : vector<1x256xf32> to vector<1x64xf32>
    %190 = vector.extract_strided_slice %185 {offsets = [0, 192], sizes = [1, 64], strides = [1, 1]} : vector<1x256xf32> to vector<1x64xf32>
    %191 = arith.mulf %188, %164 : vector<1x64xf32>
    %192 = arith.mulf %187, %189 : vector<1x64xf32>
    %193 = arith.addf %191, %192 : vector<1x64xf32>
    %194 = math.tanh %193 : vector<1x64xf32>
    %195 = arith.mulf %190, %194 : vector<1x64xf32>
    %196 = vector.extract_strided_slice %195 {offsets = [0, 0], sizes = [1, 32], strides = [1, 1]} : vector<1x64xf32> to vector<1x32xf32>
    %197 = arith.index_cast %c5_i32 : i32 to index
    %c0_53 = arith.constant 0 : index
    %198 = vector.load %arg29[%197, %c0_53] : memref<8x64xf32, #tpu.memory_space<vmem>>, vector<1x32xf32>
    tpu.vector_store %arg29[%197, %c0_53], %196 {strides = array<i32>} : memref<8x64xf32, #tpu.memory_space<vmem>>, vector<1x32xf32>,
    %199 = vector.extract_strided_slice %195 {offsets = [0, 32], sizes = [1, 32], strides = [1, 1]} : vector<1x64xf32> to vector<1x32xf32>
    %200 = arith.index_cast %173 : i32 to index
    %c32_54 = arith.constant 32 : index
    %201 = vector.load %arg29[%200, %c32_54] : memref<8x64xf32, #tpu.memory_space<vmem>>, vector<1x32xf32>
    tpu.vector_store %arg29[%200, %c32_54], %199 {strides = array<i32>} : memref<8x64xf32, #tpu.memory_space<vmem>>, vector<1x32xf32>,
    %c6_i32 = arith.constant 6 : i32
    %c7_i32_55 = arith.constant 7 : i32
    %202 = arith.subi %c7_i32_55, %c6_i32 : i32
    %cst_56 = arith.constant dense<0.000000e+00> : vector<1x256xf32>
    %203 = tpu.matmul %195, %26, %cst_56 {dimension_numbers = #tpu.dot_dimension_numbers<[1], [0], [0], [1], [0, 0, 1, 1], [], []>} : vector<1x64xf32>, vector<64x256xf32>, vector<1x256xf32> -> vector<1x256xf32>
    %204 = arith.index_cast %c6_i32 : i32 to index
    %c0_57 = arith.constant 0 : index
    %205 = vector.load %arg28[%204, %c0_57] : memref<8x256xf32, #tpu.memory_space<vmem>>, vector<1x256xf32>
    %206 = arith.index_cast %202 : i32 to index
    %c0_58 = arith.constant 0 : index
    %207 = vector.load %arg28[%206, %c0_58] : memref<8x256xf32, #tpu.memory_space<vmem>>, vector<1x256xf32>
    %208 = arith.select %18, %205, %207 : vector<1x256xi1>, vector<1x256xf32>
    %209 = arith.addf %208, %203 : vector<1x256xf32>
    %210 = arith.negf %209 : vector<1x256xf32>
    %211 = math.exp %210 : vector<1x256xf32>
    %cst_59 = arith.constant 1.000000e+00 : f32
    %212 = vector.broadcast %cst_59 : f32 to vector<1x256xf32>
    %213 = arith.addf %212, %211 : vector<1x256xf32>
    %214 = arith.divf %212, %213 : vector<1x256xf32>
    %215 = math.tanh %209 : vector<1x256xf32>
    %216 = vector.extract_strided_slice %214 {offsets = [0, 0], sizes = [1, 64], strides = [1, 1]} : vector<1x256xf32> to vector<1x64xf32>
    %217 = vector.extract_strided_slice %214 {offsets = [0, 64], sizes = [1, 64], strides = [1, 1]} : vector<1x256xf32> to vector<1x64xf32>
    %218 = vector.extract_strided_slice %215 {offsets = [0, 128], sizes = [1, 64], strides = [1, 1]} : vector<1x256xf32> to vector<1x64xf32>
    %219 = vector.extract_strided_slice %214 {offsets = [0, 192], sizes = [1, 64], strides = [1, 1]} : vector<1x256xf32> to vector<1x64xf32>
    %220 = arith.mulf %217, %193 : vector<1x64xf32>
    %221 = arith.mulf %216, %218 : vector<1x64xf32>
    %222 = arith.addf %220, %221 : vector<1x64xf32>
    %223 = math.tanh %222 : vector<1x64xf32>
    %224 = arith.mulf %219, %223 : vector<1x64xf32>
    %225 = vector.extract_strided_slice %224 {offsets = [0, 0], sizes = [1, 32], strides = [1, 1]} : vector<1x64xf32> to vector<1x32xf32>
    %226 = arith.index_cast %c6_i32 : i32 to index
    %c0_60 = arith.constant 0 : index
    %227 = vector.load %arg29[%226, %c0_60] : memref<8x64xf32, #tpu.memory_space<vmem>>, vector<1x32xf32>
    tpu.vector_store %arg29[%226, %c0_60], %225 {strides = array<i32>} : memref<8x64xf32, #tpu.memory_space<vmem>>, vector<1x32xf32>,
    %228 = vector.extract_strided_slice %224 {offsets = [0, 32], sizes = [1, 32], strides = [1, 1]} : vector<1x64xf32> to vector<1x32xf32>
    %229 = arith.index_cast %202 : i32 to index
    %c32_61 = arith.constant 32 : index
    %230 = vector.load %arg29[%229, %c32_61] : memref<8x64xf32, #tpu.memory_space<vmem>>, vector<1x32xf32>
    tpu.vector_store %arg29[%229, %c32_61], %228 {strides = array<i32>} : memref<8x64xf32, #tpu.memory_space<vmem>>, vector<1x32xf32>,
    %c7_i32_62 = arith.constant 7 : i32
    %c7_i32_63 = arith.constant 7 : i32
    %231 = arith.subi %c7_i32_63, %c7_i32_62 : i32
    %cst_64 = arith.constant dense<0.000000e+00> : vector<1x256xf32>
    %232 = tpu.matmul %224, %26, %cst_64 {dimension_numbers = #tpu.dot_dimension_numbers<[1], [0], [0], [1], [0, 0, 1, 1], [], []>} : vector<1x64xf32>, vector<64x256xf32>, vector<1x256xf32> -> vector<1x256xf32>
    %233 = arith.index_cast %c7_i32_62 : i32 to index
    %c0_65 = arith.constant 0 : index
    %234 = vector.load %arg28[%233, %c0_65] : memref<8x256xf32, #tpu.memory_space<vmem>>, vector<1x256xf32>
    %235 = arith.index_cast %231 : i32 to index
    %c0_66 = arith.constant 0 : index
    %236 = vector.load %arg28[%235, %c0_66] : memref<8x256xf32, #tpu.memory_space<vmem>>, vector<1x256xf32>
    %237 = arith.select %18, %234, %236 : vector<1x256xi1>, vector<1x256xf32>
    %238 = arith.addf %237, %232 : vector<1x256xf32>
    %239 = arith.negf %238 : vector<1x256xf32>
    %240 = math.exp %239 : vector<1x256xf32>
    %cst_67 = arith.constant 1.000000e+00 : f32
    %241 = vector.broadcast %cst_67 : f32 to vector<1x256xf32>
    %242 = arith.addf %241, %240 : vector<1x256xf32>
    %243 = arith.divf %241, %242 : vector<1x256xf32>
    %244 = math.tanh %238 : vector<1x256xf32>
    %245 = vector.extract_strided_slice %243 {offsets = [0, 0], sizes = [1, 64], strides = [1, 1]} : vector<1x256xf32> to vector<1x64xf32>
    %246 = vector.extract_strided_slice %243 {offsets = [0, 64], sizes = [1, 64], strides = [1, 1]} : vector<1x256xf32> to vector<1x64xf32>
    %247 = vector.extract_strided_slice %244 {offsets = [0, 128], sizes = [1, 64], strides = [1, 1]} : vector<1x256xf32> to vector<1x64xf32>
    %248 = vector.extract_strided_slice %243 {offsets = [0, 192], sizes = [1, 64], strides = [1, 1]} : vector<1x256xf32> to vector<1x64xf32>
    %249 = arith.mulf %246, %222 : vector<1x64xf32>
    %250 = arith.mulf %245, %247 : vector<1x64xf32>
    %251 = arith.addf %249, %250 : vector<1x64xf32>
    %252 = math.tanh %251 : vector<1x64xf32>
    %253 = arith.mulf %248, %252 : vector<1x64xf32>
    %254 = vector.extract_strided_slice %253 {offsets = [0, 0], sizes = [1, 32], strides = [1, 1]} : vector<1x64xf32> to vector<1x32xf32>
    %255 = arith.index_cast %c7_i32_62 : i32 to index
    %c0_68 = arith.constant 0 : index
    %256 = vector.load %arg29[%255, %c0_68] : memref<8x64xf32, #tpu.memory_space<vmem>>, vector<1x32xf32>
    tpu.vector_store %arg29[%255, %c0_68], %254 {strides = array<i32>} : memref<8x64xf32, #tpu.memory_space<vmem>>, vector<1x32xf32>,
    %257 = vector.extract_strided_slice %253 {offsets = [0, 32], sizes = [1, 32], strides = [1, 1]} : vector<1x64xf32> to vector<1x32xf32>
    %258 = arith.index_cast %231 : i32 to index
    %c32_69 = arith.constant 32 : index
    %259 = vector.load %arg29[%258, %c32_69] : memref<8x64xf32, #tpu.memory_space<vmem>>, vector<1x32xf32>
    tpu.vector_store %arg29[%258, %c32_69], %257 {strides = array<i32>} : memref<8x64xf32, #tpu.memory_space<vmem>>, vector<1x32xf32>,
    %c8_i32 = arith.constant 8 : i32
    %c0_70 = arith.constant 0 : index
    %c0_71 = arith.constant 0 : index
    %260 = vector.load %arg29[%c0_70, %c0_71] : memref<8x64xf32, #tpu.memory_space<vmem>>, vector<8x64xf32>
    %c0_72 = arith.constant 0 : index
    %c0_73 = arith.constant 0 : index
    %261 = vector.load %arg6[%c0_72, %c0_73] : memref<64x256xf32, #tpu.memory_space<vmem>>, vector<64x256xf32>
    %cst_74 = arith.constant dense<0.000000e+00> : vector<8x256xf32>
    %262 = tpu.matmul %260, %261, %cst_74 {dimension_numbers = #tpu.dot_dimension_numbers<[1], [0], [0], [1], [0, 0, 1, 1], [], []>} : vector<8x64xf32>, vector<64x256xf32>, vector<8x256xf32> -> vector<8x256xf32>
    %c0_75 = arith.constant 0 : index
    %c0_76 = arith.constant 0 : index
    %263 = vector.load %arg8[%c0_75, %c0_76] : memref<1x256xf32, #tpu.memory_space<vmem>>, vector<1x256xf32>
    %264 = vector.broadcast %263 : vector<1x256xf32> to vector<8x256xf32>
    %265 = arith.addf %262, %264 : vector<8x256xf32>
    %c0_77 = arith.constant 0 : index
    %c0_78 = arith.constant 0 : index
    %266 = vector.load %arg28[%c0_77, %c0_78] : memref<8x256xf32, #tpu.memory_space<vmem>>, vector<8x256xf32>
    tpu.vector_store %arg28[%c0_77, %c0_78], %265 {strides = array<i32>} : memref<8x256xf32, #tpu.memory_space<vmem>>, vector<8x256xf32>,
    %c0_79 = arith.constant 0 : index
    %c0_80 = arith.constant 0 : index
    %267 = vector.load %arg7[%c0_79, %c0_80] : memref<64x256xf32, #tpu.memory_space<vmem>>, vector<64x256xf32>
    %cst_81 = arith.constant 0.000000e+00 : f32
    %268 = vector.broadcast %cst_81 : f32 to vector<1x64xf32>
    %c0_i32_82 = arith.constant 0 : i32
    %c7_i32_83 = arith.constant 7 : i32
    %269 = arith.subi %c7_i32_83, %c0_i32_82 : i32
    %cst_84 = arith.constant dense<0.000000e+00> : vector<1x256xf32>
    %270 = tpu.matmul %268, %267, %cst_84 {dimension_numbers = #tpu.dot_dimension_numbers<[1], [0], [0], [1], [0, 0, 1, 1], [], []>} : vector<1x64xf32>, vector<64x256xf32>, vector<1x256xf32> -> vector<1x256xf32>
    %271 = arith.index_cast %c0_i32_82 : i32 to index
    %c0_85 = arith.constant 0 : index
    %272 = vector.load %arg28[%271, %c0_85] : memref<8x256xf32, #tpu.memory_space<vmem>>, vector<1x256xf32>
    %273 = arith.index_cast %269 : i32 to index
    %c0_86 = arith.constant 0 : index
    %274 = vector.load %arg28[%273, %c0_86] : memref<8x256xf32, #tpu.memory_space<vmem>>, vector<1x256xf32>
    %275 = arith.select %18, %272, %274 : vector<1x256xi1>, vector<1x256xf32>
    %276 = arith.addf %275, %270 : vector<1x256xf32>
    %277 = arith.negf %276 : vector<1x256xf32>
    %278 = math.exp %277 : vector<1x256xf32>
    %cst_87 = arith.constant 1.000000e+00 : f32
    %279 = vector.broadcast %cst_87 : f32 to vector<1x256xf32>
    %280 = arith.addf %279, %278 : vector<1x256xf32>
    %281 = arith.divf %279, %280 : vector<1x256xf32>
    %282 = math.tanh %276 : vector<1x256xf32>
    %283 = vector.extract_strided_slice %281 {offsets = [0, 0], sizes = [1, 64], strides = [1, 1]} : vector<1x256xf32> to vector<1x64xf32>
    %284 = vector.extract_strided_slice %281 {offsets = [0, 64], sizes = [1, 64], strides = [1, 1]} : vector<1x256xf32> to vector<1x64xf32>
    %285 = vector.extract_strided_slice %282 {offsets = [0, 128], sizes = [1, 64], strides = [1, 1]} : vector<1x256xf32> to vector<1x64xf32>
    %286 = vector.extract_strided_slice %281 {offsets = [0, 192], sizes = [1, 64], strides = [1, 1]} : vector<1x256xf32> to vector<1x64xf32>
    %287 = arith.mulf %284, %268 : vector<1x64xf32>
    %288 = arith.mulf %283, %285 : vector<1x64xf32>
    %289 = arith.addf %287, %288 : vector<1x64xf32>
    %290 = math.tanh %289 : vector<1x64xf32>
    %291 = arith.mulf %286, %290 : vector<1x64xf32>
    %292 = vector.extract_strided_slice %291 {offsets = [0, 0], sizes = [1, 32], strides = [1, 1]} : vector<1x64xf32> to vector<1x32xf32>
    %293 = arith.index_cast %c0_i32_82 : i32 to index
    %c0_88 = arith.constant 0 : index
    %294 = vector.load %arg30[%293, %c0_88] : memref<8x64xf32, #tpu.memory_space<vmem>>, vector<1x32xf32>
    tpu.vector_store %arg30[%293, %c0_88], %292 {strides = array<i32>} : memref<8x64xf32, #tpu.memory_space<vmem>>, vector<1x32xf32>,
    %295 = vector.extract_strided_slice %291 {offsets = [0, 32], sizes = [1, 32], strides = [1, 1]} : vector<1x64xf32> to vector<1x32xf32>
    %296 = arith.index_cast %269 : i32 to index
    %c32_89 = arith.constant 32 : index
    %297 = vector.load %arg30[%296, %c32_89] : memref<8x64xf32, #tpu.memory_space<vmem>>, vector<1x32xf32>
    tpu.vector_store %arg30[%296, %c32_89], %295 {strides = array<i32>} : memref<8x64xf32, #tpu.memory_space<vmem>>, vector<1x32xf32>,
    %c1_i32_90 = arith.constant 1 : i32
    %c7_i32_91 = arith.constant 7 : i32
    %298 = arith.subi %c7_i32_91, %c1_i32_90 : i32
    %cst_92 = arith.constant dense<0.000000e+00> : vector<1x256xf32>
    %299 = tpu.matmul %291, %267, %cst_92 {dimension_numbers = #tpu.dot_dimension_numbers<[1], [0], [0], [1], [0, 0, 1, 1], [], []>} : vector<1x64xf32>, vector<64x256xf32>, vector<1x256xf32> -> vector<1x256xf32>
    %300 = arith.index_cast %c1_i32_90 : i32 to index
    %c0_93 = arith.constant 0 : index
    %301 = vector.load %arg28[%300, %c0_93] : memref<8x256xf32, #tpu.memory_space<vmem>>, vector<1x256xf32>
    %302 = arith.index_cast %298 : i32 to index
    %c0_94 = arith.constant 0 : index
    %303 = vector.load %arg28[%302, %c0_94] : memref<8x256xf32, #tpu.memory_space<vmem>>, vector<1x256xf32>
    %304 = arith.select %18, %301, %303 : vector<1x256xi1>, vector<1x256xf32>
    %305 = arith.addf %304, %299 : vector<1x256xf32>
    %306 = arith.negf %305 : vector<1x256xf32>
    %307 = math.exp %306 : vector<1x256xf32>
    %cst_95 = arith.constant 1.000000e+00 : f32
    %308 = vector.broadcast %cst_95 : f32 to vector<1x256xf32>
    %309 = arith.addf %308, %307 : vector<1x256xf32>
    %310 = arith.divf %308, %309 : vector<1x256xf32>
    %311 = math.tanh %305 : vector<1x256xf32>
    %312 = vector.extract_strided_slice %310 {offsets = [0, 0], sizes = [1, 64], strides = [1, 1]} : vector<1x256xf32> to vector<1x64xf32>
    %313 = vector.extract_strided_slice %310 {offsets = [0, 64], sizes = [1, 64], strides = [1, 1]} : vector<1x256xf32> to vector<1x64xf32>
    %314 = vector.extract_strided_slice %311 {offsets = [0, 128], sizes = [1, 64], strides = [1, 1]} : vector<1x256xf32> to vector<1x64xf32>
    %315 = vector.extract_strided_slice %310 {offsets = [0, 192], sizes = [1, 64], strides = [1, 1]} : vector<1x256xf32> to vector<1x64xf32>
    %316 = arith.mulf %313, %289 : vector<1x64xf32>
    %317 = arith.mulf %312, %314 : vector<1x64xf32>
    %318 = arith.addf %316, %317 : vector<1x64xf32>
    %319 = math.tanh %318 : vector<1x64xf32>
    %320 = arith.mulf %315, %319 : vector<1x64xf32>
    %321 = vector.extract_strided_slice %320 {offsets = [0, 0], sizes = [1, 32], strides = [1, 1]} : vector<1x64xf32> to vector<1x32xf32>
    %322 = arith.index_cast %c1_i32_90 : i32 to index
    %c0_96 = arith.constant 0 : index
    %323 = vector.load %arg30[%322, %c0_96] : memref<8x64xf32, #tpu.memory_space<vmem>>, vector<1x32xf32>
    tpu.vector_store %arg30[%322, %c0_96], %321 {strides = array<i32>} : memref<8x64xf32, #tpu.memory_space<vmem>>, vector<1x32xf32>,
    %324 = vector.extract_strided_slice %320 {offsets = [0, 32], sizes = [1, 32], strides = [1, 1]} : vector<1x64xf32> to vector<1x32xf32>
    %325 = arith.index_cast %298 : i32 to index
    %c32_97 = arith.constant 32 : index
    %326 = vector.load %arg30[%325, %c32_97] : memref<8x64xf32, #tpu.memory_space<vmem>>, vector<1x32xf32>
    tpu.vector_store %arg30[%325, %c32_97], %324 {strides = array<i32>} : memref<8x64xf32, #tpu.memory_space<vmem>>, vector<1x32xf32>,
    %c2_i32_98 = arith.constant 2 : i32
    %c7_i32_99 = arith.constant 7 : i32
    %327 = arith.subi %c7_i32_99, %c2_i32_98 : i32
    %cst_100 = arith.constant dense<0.000000e+00> : vector<1x256xf32>
    %328 = tpu.matmul %320, %267, %cst_100 {dimension_numbers = #tpu.dot_dimension_numbers<[1], [0], [0], [1], [0, 0, 1, 1], [], []>} : vector<1x64xf32>, vector<64x256xf32>, vector<1x256xf32> -> vector<1x256xf32>
    %329 = arith.index_cast %c2_i32_98 : i32 to index
    %c0_101 = arith.constant 0 : index
    %330 = vector.load %arg28[%329, %c0_101] : memref<8x256xf32, #tpu.memory_space<vmem>>, vector<1x256xf32>
    %331 = arith.index_cast %327 : i32 to index
    %c0_102 = arith.constant 0 : index
    %332 = vector.load %arg28[%331, %c0_102] : memref<8x256xf32, #tpu.memory_space<vmem>>, vector<1x256xf32>
    %333 = arith.select %18, %330, %332 : vector<1x256xi1>, vector<1x256xf32>
    %334 = arith.addf %333, %328 : vector<1x256xf32>
    %335 = arith.negf %334 : vector<1x256xf32>
    %336 = math.exp %335 : vector<1x256xf32>
    %cst_103 = arith.constant 1.000000e+00 : f32
    %337 = vector.broadcast %cst_103 : f32 to vector<1x256xf32>
    %338 = arith.addf %337, %336 : vector<1x256xf32>
    %339 = arith.divf %337, %338 : vector<1x256xf32>
    %340 = math.tanh %334 : vector<1x256xf32>
    %341 = vector.extract_strided_slice %339 {offsets = [0, 0], sizes = [1, 64], strides = [1, 1]} : vector<1x256xf32> to vector<1x64xf32>
    %342 = vector.extract_strided_slice %339 {offsets = [0, 64], sizes = [1, 64], strides = [1, 1]} : vector<1x256xf32> to vector<1x64xf32>
    %343 = vector.extract_strided_slice %340 {offsets = [0, 128], sizes = [1, 64], strides = [1, 1]} : vector<1x256xf32> to vector<1x64xf32>
    %344 = vector.extract_strided_slice %339 {offsets = [0, 192], sizes = [1, 64], strides = [1, 1]} : vector<1x256xf32> to vector<1x64xf32>
    %345 = arith.mulf %342, %318 : vector<1x64xf32>
    %346 = arith.mulf %341, %343 : vector<1x64xf32>
    %347 = arith.addf %345, %346 : vector<1x64xf32>
    %348 = math.tanh %347 : vector<1x64xf32>
    %349 = arith.mulf %344, %348 : vector<1x64xf32>
    %350 = vector.extract_strided_slice %349 {offsets = [0, 0], sizes = [1, 32], strides = [1, 1]} : vector<1x64xf32> to vector<1x32xf32>
    %351 = arith.index_cast %c2_i32_98 : i32 to index
    %c0_104 = arith.constant 0 : index
    %352 = vector.load %arg30[%351, %c0_104] : memref<8x64xf32, #tpu.memory_space<vmem>>, vector<1x32xf32>
    tpu.vector_store %arg30[%351, %c0_104], %350 {strides = array<i32>} : memref<8x64xf32, #tpu.memory_space<vmem>>, vector<1x32xf32>,
    %353 = vector.extract_strided_slice %349 {offsets = [0, 32], sizes = [1, 32], strides = [1, 1]} : vector<1x64xf32> to vector<1x32xf32>
    %354 = arith.index_cast %327 : i32 to index
    %c32_105 = arith.constant 32 : index
    %355 = vector.load %arg30[%354, %c32_105] : memref<8x64xf32, #tpu.memory_space<vmem>>, vector<1x32xf32>
    tpu.vector_store %arg30[%354, %c32_105], %353 {strides = array<i32>} : memref<8x64xf32, #tpu.memory_space<vmem>>, vector<1x32xf32>,
    %c3_i32_106 = arith.constant 3 : i32
    %c7_i32_107 = arith.constant 7 : i32
    %356 = arith.subi %c7_i32_107, %c3_i32_106 : i32
    %cst_108 = arith.constant dense<0.000000e+00> : vector<1x256xf32>
    %357 = tpu.matmul %349, %267, %cst_108 {dimension_numbers = #tpu.dot_dimension_numbers<[1], [0], [0], [1], [0, 0, 1, 1], [], []>} : vector<1x64xf32>, vector<64x256xf32>, vector<1x256xf32> -> vector<1x256xf32>
    %358 = arith.index_cast %c3_i32_106 : i32 to index
    %c0_109 = arith.constant 0 : index
    %359 = vector.load %arg28[%358, %c0_109] : memref<8x256xf32, #tpu.memory_space<vmem>>, vector<1x256xf32>
    %360 = arith.index_cast %356 : i32 to index
    %c0_110 = arith.constant 0 : index
    %361 = vector.load %arg28[%360, %c0_110] : memref<8x256xf32, #tpu.memory_space<vmem>>, vector<1x256xf32>
    %362 = arith.select %18, %359, %361 : vector<1x256xi1>, vector<1x256xf32>
    %363 = arith.addf %362, %357 : vector<1x256xf32>
    %364 = arith.negf %363 : vector<1x256xf32>
    %365 = math.exp %364 : vector<1x256xf32>
    %cst_111 = arith.constant 1.000000e+00 : f32
    %366 = vector.broadcast %cst_111 : f32 to vector<1x256xf32>
    %367 = arith.addf %366, %365 : vector<1x256xf32>
    %368 = arith.divf %366, %367 : vector<1x256xf32>
    %369 = math.tanh %363 : vector<1x256xf32>
    %370 = vector.extract_strided_slice %368 {offsets = [0, 0], sizes = [1, 64], strides = [1, 1]} : vector<1x256xf32> to vector<1x64xf32>
    %371 = vector.extract_strided_slice %368 {offsets = [0, 64], sizes = [1, 64], strides = [1, 1]} : vector<1x256xf32> to vector<1x64xf32>
    %372 = vector.extract_strided_slice %369 {offsets = [0, 128], sizes = [1, 64], strides = [1, 1]} : vector<1x256xf32> to vector<1x64xf32>
    %373 = vector.extract_strided_slice %368 {offsets = [0, 192], sizes = [1, 64], strides = [1, 1]} : vector<1x256xf32> to vector<1x64xf32>
    %374 = arith.mulf %371, %347 : vector<1x64xf32>
    %375 = arith.mulf %370, %372 : vector<1x64xf32>
    %376 = arith.addf %374, %375 : vector<1x64xf32>
    %377 = math.tanh %376 : vector<1x64xf32>
    %378 = arith.mulf %373, %377 : vector<1x64xf32>
    %379 = vector.extract_strided_slice %378 {offsets = [0, 0], sizes = [1, 32], strides = [1, 1]} : vector<1x64xf32> to vector<1x32xf32>
    %380 = arith.index_cast %c3_i32_106 : i32 to index
    %c0_112 = arith.constant 0 : index
    %381 = vector.load %arg30[%380, %c0_112] : memref<8x64xf32, #tpu.memory_space<vmem>>, vector<1x32xf32>
    tpu.vector_store %arg30[%380, %c0_112], %379 {strides = array<i32>} : memref<8x64xf32, #tpu.memory_space<vmem>>, vector<1x32xf32>,
    %382 = vector.extract_strided_slice %378 {offsets = [0, 32], sizes = [1, 32], strides = [1, 1]} : vector<1x64xf32> to vector<1x32xf32>
    %383 = arith.index_cast %356 : i32 to index
    %c32_113 = arith.constant 32 : index
    %384 = vector.load %arg30[%383, %c32_113] : memref<8x64xf32, #tpu.memory_space<vmem>>, vector<1x32xf32>
    tpu.vector_store %arg30[%383, %c32_113], %382 {strides = array<i32>} : memref<8x64xf32, #tpu.memory_space<vmem>>, vector<1x32xf32>,
    %c4_i32_114 = arith.constant 4 : i32
    %c7_i32_115 = arith.constant 7 : i32
    %385 = arith.subi %c7_i32_115, %c4_i32_114 : i32
    %cst_116 = arith.constant dense<0.000000e+00> : vector<1x256xf32>
    %386 = tpu.matmul %378, %267, %cst_116 {dimension_numbers = #tpu.dot_dimension_numbers<[1], [0], [0], [1], [0, 0, 1, 1], [], []>} : vector<1x64xf32>, vector<64x256xf32>, vector<1x256xf32> -> vector<1x256xf32>
    %387 = arith.index_cast %c4_i32_114 : i32 to index
    %c0_117 = arith.constant 0 : index
    %388 = vector.load %arg28[%387, %c0_117] : memref<8x256xf32, #tpu.memory_space<vmem>>, vector<1x256xf32>
    %389 = arith.index_cast %385 : i32 to index
    %c0_118 = arith.constant 0 : index
    %390 = vector.load %arg28[%389, %c0_118] : memref<8x256xf32, #tpu.memory_space<vmem>>, vector<1x256xf32>
    %391 = arith.select %18, %388, %390 : vector<1x256xi1>, vector<1x256xf32>
    %392 = arith.addf %391, %386 : vector<1x256xf32>
    %393 = arith.negf %392 : vector<1x256xf32>
    %394 = math.exp %393 : vector<1x256xf32>
    %cst_119 = arith.constant 1.000000e+00 : f32
    %395 = vector.broadcast %cst_119 : f32 to vector<1x256xf32>
    %396 = arith.addf %395, %394 : vector<1x256xf32>
    %397 = arith.divf %395, %396 : vector<1x256xf32>
    %398 = math.tanh %392 : vector<1x256xf32>
    %399 = vector.extract_strided_slice %397 {offsets = [0, 0], sizes = [1, 64], strides = [1, 1]} : vector<1x256xf32> to vector<1x64xf32>
    %400 = vector.extract_strided_slice %397 {offsets = [0, 64], sizes = [1, 64], strides = [1, 1]} : vector<1x256xf32> to vector<1x64xf32>
    %401 = vector.extract_strided_slice %398 {offsets = [0, 128], sizes = [1, 64], strides = [1, 1]} : vector<1x256xf32> to vector<1x64xf32>
    %402 = vector.extract_strided_slice %397 {offsets = [0, 192], sizes = [1, 64], strides = [1, 1]} : vector<1x256xf32> to vector<1x64xf32>
    %403 = arith.mulf %400, %376 : vector<1x64xf32>
    %404 = arith.mulf %399, %401 : vector<1x64xf32>
    %405 = arith.addf %403, %404 : vector<1x64xf32>
    %406 = math.tanh %405 : vector<1x64xf32>
    %407 = arith.mulf %402, %406 : vector<1x64xf32>
    %408 = vector.extract_strided_slice %407 {offsets = [0, 0], sizes = [1, 32], strides = [1, 1]} : vector<1x64xf32> to vector<1x32xf32>
    %409 = arith.index_cast %c4_i32_114 : i32 to index
    %c0_120 = arith.constant 0 : index
    %410 = vector.load %arg30[%409, %c0_120] : memref<8x64xf32, #tpu.memory_space<vmem>>, vector<1x32xf32>
    tpu.vector_store %arg30[%409, %c0_120], %408 {strides = array<i32>} : memref<8x64xf32, #tpu.memory_space<vmem>>, vector<1x32xf32>,
    %411 = vector.extract_strided_slice %407 {offsets = [0, 32], sizes = [1, 32], strides = [1, 1]} : vector<1x64xf32> to vector<1x32xf32>
    %412 = arith.index_cast %385 : i32 to index
    %c32_121 = arith.constant 32 : index
    %413 = vector.load %arg30[%412, %c32_121] : memref<8x64xf32, #tpu.memory_space<vmem>>, vector<1x32xf32>
    tpu.vector_store %arg30[%412, %c32_121], %411 {strides = array<i32>} : memref<8x64xf32, #tpu.memory_space<vmem>>, vector<1x32xf32>,
    %c5_i32_122 = arith.constant 5 : i32
    %c7_i32_123 = arith.constant 7 : i32
    %414 = arith.subi %c7_i32_123, %c5_i32_122 : i32
    %cst_124 = arith.constant dense<0.000000e+00> : vector<1x256xf32>
    %415 = tpu.matmul %407, %267, %cst_124 {dimension_numbers = #tpu.dot_dimension_numbers<[1], [0], [0], [1], [0, 0, 1, 1], [], []>} : vector<1x64xf32>, vector<64x256xf32>, vector<1x256xf32> -> vector<1x256xf32>
    %416 = arith.index_cast %c5_i32_122 : i32 to index
    %c0_125 = arith.constant 0 : index
    %417 = vector.load %arg28[%416, %c0_125] : memref<8x256xf32, #tpu.memory_space<vmem>>, vector<1x256xf32>
    %418 = arith.index_cast %414 : i32 to index
    %c0_126 = arith.constant 0 : index
    %419 = vector.load %arg28[%418, %c0_126] : memref<8x256xf32, #tpu.memory_space<vmem>>, vector<1x256xf32>
    %420 = arith.select %18, %417, %419 : vector<1x256xi1>, vector<1x256xf32>
    %421 = arith.addf %420, %415 : vector<1x256xf32>
    %422 = arith.negf %421 : vector<1x256xf32>
    %423 = math.exp %422 : vector<1x256xf32>
    %cst_127 = arith.constant 1.000000e+00 : f32
    %424 = vector.broadcast %cst_127 : f32 to vector<1x256xf32>
    %425 = arith.addf %424, %423 : vector<1x256xf32>
    %426 = arith.divf %424, %425 : vector<1x256xf32>
    %427 = math.tanh %421 : vector<1x256xf32>
    %428 = vector.extract_strided_slice %426 {offsets = [0, 0], sizes = [1, 64], strides = [1, 1]} : vector<1x256xf32> to vector<1x64xf32>
    %429 = vector.extract_strided_slice %426 {offsets = [0, 64], sizes = [1, 64], strides = [1, 1]} : vector<1x256xf32> to vector<1x64xf32>
    %430 = vector.extract_strided_slice %427 {offsets = [0, 128], sizes = [1, 64], strides = [1, 1]} : vector<1x256xf32> to vector<1x64xf32>
    %431 = vector.extract_strided_slice %426 {offsets = [0, 192], sizes = [1, 64], strides = [1, 1]} : vector<1x256xf32> to vector<1x64xf32>
    %432 = arith.mulf %429, %405 : vector<1x64xf32>
    %433 = arith.mulf %428, %430 : vector<1x64xf32>
    %434 = arith.addf %432, %433 : vector<1x64xf32>
    %435 = math.tanh %434 : vector<1x64xf32>
    %436 = arith.mulf %431, %435 : vector<1x64xf32>
    %437 = vector.extract_strided_slice %436 {offsets = [0, 0], sizes = [1, 32], strides = [1, 1]} : vector<1x64xf32> to vector<1x32xf32>
    %438 = arith.index_cast %c5_i32_122 : i32 to index
    %c0_128 = arith.constant 0 : index
    %439 = vector.load %arg30[%438, %c0_128] : memref<8x64xf32, #tpu.memory_space<vmem>>, vector<1x32xf32>
    tpu.vector_store %arg30[%438, %c0_128], %437 {strides = array<i32>} : memref<8x64xf32, #tpu.memory_space<vmem>>, vector<1x32xf32>,
    %440 = vector.extract_strided_slice %436 {offsets = [0, 32], sizes = [1, 32], strides = [1, 1]} : vector<1x64xf32> to vector<1x32xf32>
    %441 = arith.index_cast %414 : i32 to index
    %c32_129 = arith.constant 32 : index
    %442 = vector.load %arg30[%441, %c32_129] : memref<8x64xf32, #tpu.memory_space<vmem>>, vector<1x32xf32>
    tpu.vector_store %arg30[%441, %c32_129], %440 {strides = array<i32>} : memref<8x64xf32, #tpu.memory_space<vmem>>, vector<1x32xf32>,
    %c6_i32_130 = arith.constant 6 : i32
    %c7_i32_131 = arith.constant 7 : i32
    %443 = arith.subi %c7_i32_131, %c6_i32_130 : i32
    %cst_132 = arith.constant dense<0.000000e+00> : vector<1x256xf32>
    %444 = tpu.matmul %436, %267, %cst_132 {dimension_numbers = #tpu.dot_dimension_numbers<[1], [0], [0], [1], [0, 0, 1, 1], [], []>} : vector<1x64xf32>, vector<64x256xf32>, vector<1x256xf32> -> vector<1x256xf32>
    %445 = arith.index_cast %c6_i32_130 : i32 to index
    %c0_133 = arith.constant 0 : index
    %446 = vector.load %arg28[%445, %c0_133] : memref<8x256xf32, #tpu.memory_space<vmem>>, vector<1x256xf32>
    %447 = arith.index_cast %443 : i32 to index
    %c0_134 = arith.constant 0 : index
    %448 = vector.load %arg28[%447, %c0_134] : memref<8x256xf32, #tpu.memory_space<vmem>>, vector<1x256xf32>
    %449 = arith.select %18, %446, %448 : vector<1x256xi1>, vector<1x256xf32>
    %450 = arith.addf %449, %444 : vector<1x256xf32>
    %451 = arith.negf %450 : vector<1x256xf32>
    %452 = math.exp %451 : vector<1x256xf32>
    %cst_135 = arith.constant 1.000000e+00 : f32
    %453 = vector.broadcast %cst_135 : f32 to vector<1x256xf32>
    %454 = arith.addf %453, %452 : vector<1x256xf32>
    %455 = arith.divf %453, %454 : vector<1x256xf32>
    %456 = math.tanh %450 : vector<1x256xf32>
    %457 = vector.extract_strided_slice %455 {offsets = [0, 0], sizes = [1, 64], strides = [1, 1]} : vector<1x256xf32> to vector<1x64xf32>
    %458 = vector.extract_strided_slice %455 {offsets = [0, 64], sizes = [1, 64], strides = [1, 1]} : vector<1x256xf32> to vector<1x64xf32>
    %459 = vector.extract_strided_slice %456 {offsets = [0, 128], sizes = [1, 64], strides = [1, 1]} : vector<1x256xf32> to vector<1x64xf32>
    %460 = vector.extract_strided_slice %455 {offsets = [0, 192], sizes = [1, 64], strides = [1, 1]} : vector<1x256xf32> to vector<1x64xf32>
    %461 = arith.mulf %458, %434 : vector<1x64xf32>
    %462 = arith.mulf %457, %459 : vector<1x64xf32>
    %463 = arith.addf %461, %462 : vector<1x64xf32>
    %464 = math.tanh %463 : vector<1x64xf32>
    %465 = arith.mulf %460, %464 : vector<1x64xf32>
    %466 = vector.extract_strided_slice %465 {offsets = [0, 0], sizes = [1, 32], strides = [1, 1]} : vector<1x64xf32> to vector<1x32xf32>
    %467 = arith.index_cast %c6_i32_130 : i32 to index
    %c0_136 = arith.constant 0 : index
    %468 = vector.load %arg30[%467, %c0_136] : memref<8x64xf32, #tpu.memory_space<vmem>>, vector<1x32xf32>
    tpu.vector_store %arg30[%467, %c0_136], %466 {strides = array<i32>} : memref<8x64xf32, #tpu.memory_space<vmem>>, vector<1x32xf32>,
    %469 = vector.extract_strided_slice %465 {offsets = [0, 32], sizes = [1, 32], strides = [1, 1]} : vector<1x64xf32> to vector<1x32xf32>
    %470 = arith.index_cast %443 : i32 to index
    %c32_137 = arith.constant 32 : index
    %471 = vector.load %arg30[%470, %c32_137] : memref<8x64xf32, #tpu.memory_space<vmem>>, vector<1x32xf32>
    tpu.vector_store %arg30[%470, %c32_137], %469 {strides = array<i32>} : memref<8x64xf32, #tpu.memory_space<vmem>>, vector<1x32xf32>,
    %c7_i32_138 = arith.constant 7 : i32
    %c7_i32_139 = arith.constant 7 : i32
    %472 = arith.subi %c7_i32_139, %c7_i32_138 : i32
    %cst_140 = arith.constant dense<0.000000e+00> : vector<1x256xf32>
    %473 = tpu.matmul %465, %267, %cst_140 {dimension_numbers = #tpu.dot_dimension_numbers<[1], [0], [0], [1], [0, 0, 1, 1], [], []>} : vector<1x64xf32>, vector<64x256xf32>, vector<1x256xf32> -> vector<1x256xf32>
    %474 = arith.index_cast %c7_i32_138 : i32 to index
    %c0_141 = arith.constant 0 : index
    %475 = vector.load %arg28[%474, %c0_141] : memref<8x256xf32, #tpu.memory_space<vmem>>, vector<1x256xf32>
    %476 = arith.index_cast %472 : i32 to index
    %c0_142 = arith.constant 0 : index
    %477 = vector.load %arg28[%476, %c0_142] : memref<8x256xf32, #tpu.memory_space<vmem>>, vector<1x256xf32>
    %478 = arith.select %18, %475, %477 : vector<1x256xi1>, vector<1x256xf32>
    %479 = arith.addf %478, %473 : vector<1x256xf32>
    %480 = arith.negf %479 : vector<1x256xf32>
    %481 = math.exp %480 : vector<1x256xf32>
    %cst_143 = arith.constant 1.000000e+00 : f32
    %482 = vector.broadcast %cst_143 : f32 to vector<1x256xf32>
    %483 = arith.addf %482, %481 : vector<1x256xf32>
    %484 = arith.divf %482, %483 : vector<1x256xf32>
    %485 = math.tanh %479 : vector<1x256xf32>
    %486 = vector.extract_strided_slice %484 {offsets = [0, 0], sizes = [1, 64], strides = [1, 1]} : vector<1x256xf32> to vector<1x64xf32>
    %487 = vector.extract_strided_slice %484 {offsets = [0, 64], sizes = [1, 64], strides = [1, 1]} : vector<1x256xf32> to vector<1x64xf32>
    %488 = vector.extract_strided_slice %485 {offsets = [0, 128], sizes = [1, 64], strides = [1, 1]} : vector<1x256xf32> to vector<1x64xf32>
    %489 = vector.extract_strided_slice %484 {offsets = [0, 192], sizes = [1, 64], strides = [1, 1]} : vector<1x256xf32> to vector<1x64xf32>
    %490 = arith.mulf %487, %463 : vector<1x64xf32>
    %491 = arith.mulf %486, %488 : vector<1x64xf32>
    %492 = arith.addf %490, %491 : vector<1x64xf32>
    %493 = math.tanh %492 : vector<1x64xf32>
    %494 = arith.mulf %489, %493 : vector<1x64xf32>
    %495 = vector.extract_strided_slice %494 {offsets = [0, 0], sizes = [1, 32], strides = [1, 1]} : vector<1x64xf32> to vector<1x32xf32>
    %496 = arith.index_cast %c7_i32_138 : i32 to index
    %c0_144 = arith.constant 0 : index
    %497 = vector.load %arg30[%496, %c0_144] : memref<8x64xf32, #tpu.memory_space<vmem>>, vector<1x32xf32>
    tpu.vector_store %arg30[%496, %c0_144], %495 {strides = array<i32>} : memref<8x64xf32, #tpu.memory_space<vmem>>, vector<1x32xf32>,
    %498 = vector.extract_strided_slice %494 {offsets = [0, 32], sizes = [1, 32], strides = [1, 1]} : vector<1x64xf32> to vector<1x32xf32>
    %499 = arith.index_cast %472 : i32 to index
    %c32_145 = arith.constant 32 : index
    %500 = vector.load %arg30[%499, %c32_145] : memref<8x64xf32, #tpu.memory_space<vmem>>, vector<1x32xf32>
    tpu.vector_store %arg30[%499, %c32_145], %498 {strides = array<i32>} : memref<8x64xf32, #tpu.memory_space<vmem>>, vector<1x32xf32>,
    %c8_i32_146 = arith.constant 8 : i32
    %cst_147 = arith.constant 0.000000e+00 : f32
    %501 = vector.broadcast %cst_147 : f32 to vector<8x128xf32>
    %c0_148 = arith.constant 0 : index
    %c0_149 = arith.constant 0 : index
    %502 = vector.load %arg31[%c0_148, %c0_149] : memref<8x128xf32, #tpu.memory_space<vmem>>, vector<8x128xf32>
    tpu.vector_store %arg31[%c0_148, %c0_149], %501 {strides = array<i32>} : memref<8x128xf32, #tpu.memory_space<vmem>>, vector<8x128xf32>,
    %c0_150 = arith.constant 0 : index
    %503 = memref.load %arg0[%c0_150] : memref<4xi32, #tpu.memory_space<smem>>
    %c0_151 = arith.constant 0 : index
    %504 = memref.load %arg1[%c0_151] : memref<4xi32, #tpu.memory_space<smem>>
    %505 = arith.index_cast %503 : i32 to index
    %c0_152 = arith.constant 0 : index
    %506 = vector.load %arg30[%505, %c0_152] : memref<8x64xf32, #tpu.memory_space<vmem>>, vector<1x64xf32>
    %c0_153 = arith.constant 0 : index
    %c0_154 = arith.constant 0 : index
    %507 = vector.load %arg31[%c0_153, %c0_154] : memref<8x128xf32, #tpu.memory_space<vmem>>, vector<1x64xf32>
    tpu.vector_store %arg31[%c0_153, %c0_154], %506 {strides = array<i32>} : memref<8x128xf32, #tpu.memory_space<vmem>>, vector<1x64xf32>,
    %508 = arith.index_cast %504 : i32 to index
    %c0_155 = arith.constant 0 : index
    %509 = vector.load %arg30[%508, %c0_155] : memref<8x64xf32, #tpu.memory_space<vmem>>, vector<1x64xf32>
    %c0_156 = arith.constant 0 : index
    %c64 = arith.constant 64 : index
    %510 = vector.load %arg31[%c0_156, %c64] : memref<8x128xf32, #tpu.memory_space<vmem>>, vector<1x64xf32>
    tpu.vector_store %arg31[%c0_156, %c64], %509 {strides = array<i32>} : memref<8x128xf32, #tpu.memory_space<vmem>>, vector<1x64xf32>,
    %c1 = arith.constant 1 : index
    %511 = memref.load %arg0[%c1] : memref<4xi32, #tpu.memory_space<smem>>
    %c1_157 = arith.constant 1 : index
    %512 = memref.load %arg1[%c1_157] : memref<4xi32, #tpu.memory_space<smem>>
    %513 = arith.index_cast %511 : i32 to index
    %c0_158 = arith.constant 0 : index
    %514 = vector.load %arg30[%513, %c0_158] : memref<8x64xf32, #tpu.memory_space<vmem>>, vector<1x64xf32>
    %c1_159 = arith.constant 1 : index
    %c0_160 = arith.constant 0 : index
    %515 = vector.load %arg31[%c1_159, %c0_160] : memref<8x128xf32, #tpu.memory_space<vmem>>, vector<1x64xf32>
    tpu.vector_store %arg31[%c1_159, %c0_160], %514 {strides = array<i32>} : memref<8x128xf32, #tpu.memory_space<vmem>>, vector<1x64xf32>,
    %516 = arith.index_cast %512 : i32 to index
    %c0_161 = arith.constant 0 : index
    %517 = vector.load %arg30[%516, %c0_161] : memref<8x64xf32, #tpu.memory_space<vmem>>, vector<1x64xf32>
    %c1_162 = arith.constant 1 : index
    %c64_163 = arith.constant 64 : index
    %518 = vector.load %arg31[%c1_162, %c64_163] : memref<8x128xf32, #tpu.memory_space<vmem>>, vector<1x64xf32>
    tpu.vector_store %arg31[%c1_162, %c64_163], %517 {strides = array<i32>} : memref<8x128xf32, #tpu.memory_space<vmem>>, vector<1x64xf32>,
    %c2 = arith.constant 2 : index
    %519 = memref.load %arg0[%c2] : memref<4xi32, #tpu.memory_space<smem>>
    %c2_164 = arith.constant 2 : index
    %520 = memref.load %arg1[%c2_164] : memref<4xi32, #tpu.memory_space<smem>>
    %521 = arith.index_cast %519 : i32 to index
    %c0_165 = arith.constant 0 : index
    %522 = vector.load %arg30[%521, %c0_165] : memref<8x64xf32, #tpu.memory_space<vmem>>, vector<1x64xf32>
    %c2_166 = arith.constant 2 : index
    %c0_167 = arith.constant 0 : index
    %523 = vector.load %arg31[%c2_166, %c0_167] : memref<8x128xf32, #tpu.memory_space<vmem>>, vector<1x64xf32>
    tpu.vector_store %arg31[%c2_166, %c0_167], %522 {strides = array<i32>} : memref<8x128xf32, #tpu.memory_space<vmem>>, vector<1x64xf32>,
    %524 = arith.index_cast %520 : i32 to index
    %c0_168 = arith.constant 0 : index
    %525 = vector.load %arg30[%524, %c0_168] : memref<8x64xf32, #tpu.memory_space<vmem>>, vector<1x64xf32>
    %c2_169 = arith.constant 2 : index
    %c64_170 = arith.constant 64 : index
    %526 = vector.load %arg31[%c2_169, %c64_170] : memref<8x128xf32, #tpu.memory_space<vmem>>, vector<1x64xf32>
    tpu.vector_store %arg31[%c2_169, %c64_170], %525 {strides = array<i32>} : memref<8x128xf32, #tpu.memory_space<vmem>>, vector<1x64xf32>,
    %c3 = arith.constant 3 : index
    %527 = memref.load %arg0[%c3] : memref<4xi32, #tpu.memory_space<smem>>
    %c3_171 = arith.constant 3 : index
    %528 = memref.load %arg1[%c3_171] : memref<4xi32, #tpu.memory_space<smem>>
    %529 = arith.index_cast %527 : i32 to index
    %c0_172 = arith.constant 0 : index
    %530 = vector.load %arg30[%529, %c0_172] : memref<8x64xf32, #tpu.memory_space<vmem>>, vector<1x64xf32>
    %c3_173 = arith.constant 3 : index
    %c0_174 = arith.constant 0 : index
    %531 = vector.load %arg31[%c3_173, %c0_174] : memref<8x128xf32, #tpu.memory_space<vmem>>, vector<1x64xf32>
    tpu.vector_store %arg31[%c3_173, %c0_174], %530 {strides = array<i32>} : memref<8x128xf32, #tpu.memory_space<vmem>>, vector<1x64xf32>,
    %532 = arith.index_cast %528 : i32 to index
    %c0_175 = arith.constant 0 : index
    %533 = vector.load %arg30[%532, %c0_175] : memref<8x64xf32, #tpu.memory_space<vmem>>, vector<1x64xf32>
    %c3_176 = arith.constant 3 : index
    %c64_177 = arith.constant 64 : index
    %534 = vector.load %arg31[%c3_176, %c64_177] : memref<8x128xf32, #tpu.memory_space<vmem>>, vector<1x64xf32>
    tpu.vector_store %arg31[%c3_176, %c64_177], %533 {strides = array<i32>} : memref<8x128xf32, #tpu.memory_space<vmem>>, vector<1x64xf32>,
    %c0_178 = arith.constant 0 : index
    %c0_179 = arith.constant 0 : index
    %535 = vector.load %arg31[%c0_178, %c0_179] : memref<8x128xf32, #tpu.memory_space<vmem>>, vector<8x128xf32>
    %c0_180 = arith.constant 0 : index
    %c0_181 = arith.constant 0 : index
    %536 = vector.load %arg9[%c0_180, %c0_181] : memref<128x128xf32, #tpu.memory_space<vmem>>, vector<128x128xf32>
    %cst_182 = arith.constant dense<0.000000e+00> : vector<8x128xf32>
    %537 = tpu.matmul %535, %536, %cst_182 {dimension_numbers = #tpu.dot_dimension_numbers<[1], [0], [0], [1], [0, 0, 1, 1], [], []>} : vector<8x128xf32>, vector<128x128xf32>, vector<8x128xf32> -> vector<8x128xf32>
    %c0_183 = arith.constant 0 : index
    %c0_184 = arith.constant 0 : index
    %538 = vector.load %arg10[%c0_183, %c0_184] : memref<1x128xf32, #tpu.memory_space<vmem>>, vector<1x128xf32>
    %539 = vector.broadcast %538 : vector<1x128xf32> to vector<8x128xf32>
    %540 = arith.addf %537, %539 : vector<8x128xf32>
    %c0_185 = arith.constant 0 : index
    %c0_186 = arith.constant 0 : index
    %541 = vector.load %arg11[%c0_185, %c0_186] : memref<128x128xf32, #tpu.memory_space<vmem>>, vector<128x128xf32>
    %cst_187 = arith.constant dense<0.000000e+00> : vector<8x128xf32>
    %542 = tpu.matmul %540, %541, %cst_187 {dimension_numbers = #tpu.dot_dimension_numbers<[1], [0], [0], [1], [0, 0, 1, 1], [], []>} : vector<8x128xf32>, vector<128x128xf32>, vector<8x128xf32> -> vector<8x128xf32>
    %c0_188 = arith.constant 0 : index
    %c0_189 = arith.constant 0 : index
    %543 = vector.load %arg12[%c0_188, %c0_189] : memref<1x128xf32, #tpu.memory_space<vmem>>, vector<1x128xf32>
    %544 = vector.broadcast %543 : vector<1x128xf32> to vector<8x128xf32>
    %545 = arith.addf %542, %544 : vector<8x128xf32>
    %c0_190 = arith.constant 0 : index
    %c0_191 = arith.constant 0 : index
    %546 = vector.load %arg13[%c0_190, %c0_191] : memref<128x128xf32, #tpu.memory_space<vmem>>, vector<128x128xf32>
    %cst_192 = arith.constant dense<0.000000e+00> : vector<8x128xf32>
    %547 = tpu.matmul %545, %546, %cst_192 {dimension_numbers = #tpu.dot_dimension_numbers<[1], [0], [0], [1], [0, 0, 1, 1], [], []>} : vector<8x128xf32>, vector<128x128xf32>, vector<8x128xf32> -> vector<8x128xf32>
    %c0_193 = arith.constant 0 : index
    %c0_194 = arith.constant 0 : index
    %548 = vector.load %arg14[%c0_193, %c0_194] : memref<1x128xf32, #tpu.memory_space<vmem>>, vector<1x128xf32>
    %549 = vector.broadcast %548 : vector<1x128xf32> to vector<8x128xf32>
    %550 = arith.addf %547, %549 : vector<8x128xf32>
    %c0_195 = arith.constant 0 : index
    %c0_196 = arith.constant 0 : index
    %551 = vector.load %arg15[%c0_195, %c0_196] : memref<128x128xf32, #tpu.memory_space<vmem>>, vector<128x128xf32>
    %cst_197 = arith.constant dense<0.000000e+00> : vector<8x128xf32>
    %552 = tpu.matmul %550, %551, %cst_197 {dimension_numbers = #tpu.dot_dimension_numbers<[1], [0], [0], [1], [0, 0, 1, 1], [], []>} : vector<8x128xf32>, vector<128x128xf32>, vector<8x128xf32> -> vector<8x128xf32>
    %c0_198 = arith.constant 0 : index
    %c0_199 = arith.constant 0 : index
    %553 = vector.load %arg16[%c0_198, %c0_199] : memref<1x128xf32, #tpu.memory_space<vmem>>, vector<1x128xf32>
    %554 = vector.broadcast %553 : vector<1x128xf32> to vector<8x128xf32>
    %555 = arith.addf %552, %554 : vector<8x128xf32>
    %c0_200 = arith.constant 0 : index
    %c0_201 = arith.constant 0 : index
    %556 = vector.load %arg17[%c0_200, %c0_201] : memref<128x128xf32, #tpu.memory_space<vmem>>, vector<128x128xf32>
    %cst_202 = arith.constant dense<0.000000e+00> : vector<8x128xf32>
    %557 = tpu.matmul %555, %556, %cst_202 {dimension_numbers = #tpu.dot_dimension_numbers<[1], [0], [0], [1], [0, 0, 1, 1], [], []>} : vector<8x128xf32>, vector<128x128xf32>, vector<8x128xf32> -> vector<8x128xf32>
    %c0_203 = arith.constant 0 : index
    %c0_204 = arith.constant 0 : index
    %558 = vector.load %arg18[%c0_203, %c0_204] : memref<1x128xf32, #tpu.memory_space<vmem>>, vector<1x128xf32>
    %559 = vector.broadcast %558 : vector<1x128xf32> to vector<8x128xf32>
    %560 = arith.addf %557, %559 : vector<8x128xf32>
    %c0_205 = arith.constant 0 : index
    %c0_206 = arith.constant 0 : index
    %561 = vector.load %arg19[%c0_205, %c0_206] : memref<128x32xf32, #tpu.memory_space<vmem>>, vector<128x32xf32>
    %cst_207 = arith.constant dense<0.000000e+00> : vector<8x32xf32>
    %562 = tpu.matmul %560, %561, %cst_207 {dimension_numbers = #tpu.dot_dimension_numbers<[1], [0], [0], [1], [0, 0, 1, 1], [], []>} : vector<8x128xf32>, vector<128x32xf32>, vector<8x32xf32> -> vector<8x32xf32>
    %c0_208 = arith.constant 0 : index
    %c0_209 = arith.constant 0 : index
    %563 = vector.load %arg20[%c0_208, %c0_209] : memref<1x32xf32, #tpu.memory_space<vmem>>, vector<1x32xf32>
    %564 = vector.broadcast %563 : vector<1x32xf32> to vector<8x32xf32>
    %565 = arith.addf %562, %564 : vector<8x32xf32>
    %c0_210 = arith.constant 0 : index
    %c0_211 = arith.constant 0 : index
    %566 = vector.load %arg21[%c0_210, %c0_211] : memref<32x32xf32, #tpu.memory_space<vmem>>, vector<32x32xf32>
    %cst_212 = arith.constant dense<0.000000e+00> : vector<8x32xf32>
    %567 = tpu.matmul %565, %566, %cst_212 {dimension_numbers = #tpu.dot_dimension_numbers<[1], [0], [0], [1], [0, 0, 1, 1], [], []>} : vector<8x32xf32>, vector<32x32xf32>, vector<8x32xf32> -> vector<8x32xf32>
    %c0_213 = arith.constant 0 : index
    %c0_214 = arith.constant 0 : index
    %568 = vector.load %arg22[%c0_213, %c0_214] : memref<1x32xf32, #tpu.memory_space<vmem>>, vector<1x32xf32>
    %569 = vector.broadcast %568 : vector<1x32xf32> to vector<8x32xf32>
    %570 = arith.addf %567, %569 : vector<8x32xf32>
    %c0_215 = arith.constant 0 : index
    %c0_216 = arith.constant 0 : index
    %571 = vector.load %arg23[%c0_215, %c0_216] : memref<32x32xf32, #tpu.memory_space<vmem>>, vector<32x32xf32>
    %cst_217 = arith.constant dense<0.000000e+00> : vector<8x32xf32>
    %572 = tpu.matmul %570, %571, %cst_217 {dimension_numbers = #tpu.dot_dimension_numbers<[1], [0], [0], [1], [0, 0, 1, 1], [], []>} : vector<8x32xf32>, vector<32x32xf32>, vector<8x32xf32> -> vector<8x32xf32>
    %c0_218 = arith.constant 0 : index
    %c0_219 = arith.constant 0 : index
    %573 = vector.load %arg24[%c0_218, %c0_219] : memref<1x32xf32, #tpu.memory_space<vmem>>, vector<1x32xf32>
    %574 = vector.broadcast %573 : vector<1x32xf32> to vector<8x32xf32>
    %575 = arith.addf %572, %574 : vector<8x32xf32>
    %c0_220 = arith.constant 0 : index
    %c0_221 = arith.constant 0 : index
    %576 = vector.load %arg25[%c0_220, %c0_221] : memref<32x128xf32, #tpu.memory_space<vmem>>, vector<32x128xf32>
    %cst_222 = arith.constant dense<0.000000e+00> : vector<8x128xf32>
    %577 = tpu.matmul %575, %576, %cst_222 {dimension_numbers = #tpu.dot_dimension_numbers<[1], [0], [0], [1], [0, 0, 1, 1], [], []>} : vector<8x32xf32>, vector<32x128xf32>, vector<8x128xf32> -> vector<8x128xf32>
    %c0_223 = arith.constant 0 : index
    %c0_224 = arith.constant 0 : index
    %578 = vector.load %arg26[%c0_223, %c0_224] : memref<1x128xf32, #tpu.memory_space<vmem>>, vector<1x128xf32>
    %579 = vector.broadcast %578 : vector<1x128xf32> to vector<8x128xf32>
    %580 = arith.addf %577, %579 : vector<8x128xf32>
    %c0_225 = arith.constant 0 : index
    %c0_226 = arith.constant 0 : index
    %581 = vector.load %arg27[%c0_225, %c0_226] : memref<8x128xf32, #tpu.memory_space<vmem>>, vector<8x128xf32>
    tpu.vector_store %arg27[%c0_225, %c0_226], %580 {strides = array<i32>} : memref<8x128xf32, #tpu.memory_space<vmem>>, vector<8x128xf32>,
    return
  }
}

</mosaic_0001>

<llo_original>
// kernel: tpu_custom_call.1
$region0: #{tpu_custom_call.1}
  #allocation0 [shape = 'u32[]', space=smem, size = 0x4, offset = 0x4, fixed_abs, tag = 'smem constant byte address 0x4 - core index']
  #allocation1 [shape = 'u32[144,128]{1,0:T(1,128)}', space=vmem, size = 0x12000, scoped, tag = 'internal scratch']
  #allocation2 [shape = 'f32[8,256]{1,0:T(8,128)}', space=vmem, size = 0x2000, scoped, tag = 'scratch operand']
  #allocation3 [shape = 'f32[8,64]{1,0:T(8,128)}', space=vmem, size = 0x1000, scoped, tag = 'scratch operand']
  #allocation4 [shape = 'f32[8,64]{1,0:T(8,128)}', space=vmem, size = 0x1000, scoped, tag = 'scratch operand']
  #allocation5 [shape = 'f32[8,128]{1,0:T(8,128)}', space=vmem, size = 0x1000, scoped, tag = 'scratch operand']
  %s0 = inlined_call_operand.hbm [shape: s32[4], index: 0, kind: input, shape index: {}]
  %s1 = inlined_call_operand.hbm [shape: s32[4], index: 1, kind: input, shape index: {}]
  %s2 = inlined_call_operand.hbm [shape: f32[8,32], index: 2, kind: input, shape index: {}]
  %s3 = inlined_call_operand.hbm [shape: f32[32,256], index: 3, kind: input, shape index: {}]
  %s4 = inlined_call_operand.vmem [shape: f32[64,256], index: 4, kind: input, shape index: {}]
  %s5 = inlined_call_operand.hbm [shape: f32[1,256], index: 5, kind: input, shape index: {}]
  %s6 = inlined_call_operand.hbm [shape: f32[64,256], index: 6, kind: input, shape index: {}]
  %s7 = inlined_call_operand.hbm [shape: f32[64,256], index: 7, kind: input, shape index: {}]
  %s8 = inlined_call_operand.hbm [shape: f32[1,256], index: 8, kind: input, shape index: {}]
  %s9 = inlined_call_operand.hbm [shape: f32[128,128], index: 9, kind: input, shape index: {}]
  %s10 = inlined_call_operand.hbm [shape: f32[1,128], index: 10, kind: input, shape index: {}]
  %s11 = inlined_call_operand.hbm [shape: f32[128,128], index: 11, kind: input, shape index: {}]
  %s12 = inlined_call_operand.hbm [shape: f32[1,128], index: 12, kind: input, shape index: {}]
  %s13 = inlined_call_operand.hbm [shape: f32[128,128], index: 13, kind: input, shape index: {}]
  %s14 = inlined_call_operand.hbm [shape: f32[1,128], index: 14, kind: input, shape index: {}]
  %s15 = inlined_call_operand.hbm [shape: f32[128,128], index: 15, kind: input, shape index: {}]
  %s16 = inlined_call_operand.hbm [shape: f32[1,128], index: 16, kind: input, shape index: {}]
  %s17 = inlined_call_operand.hbm [shape: f32[128,128], index: 17, kind: input, shape index: {}]
  %s18 = inlined_call_operand.vmem [shape: f32[1,128], index: 18, kind: input, shape index: {}]
  %s19 = inlined_call_operand.vmem [shape: f32[128,32], index: 19, kind: input, shape index: {}]
  %s20 = inlined_call_operand.vmem [shape: f32[1,32], index: 20, kind: input, shape index: {}]
  %s21 = inlined_call_operand.vmem [shape: f32[32,32], index: 21, kind: input, shape index: {}]
  %s22 = inlined_call_operand.vmem [shape: f32[1,32], index: 22, kind: input, shape index: {}]
  %s23 = inlined_call_operand.vmem [shape: f32[32,32], index: 23, kind: input, shape index: {}]
  %s24 = inlined_call_operand.vmem [shape: f32[1,32], index: 24, kind: input, shape index: {}]
  %s25 = inlined_call_operand.hbm [shape: f32[32,128], index: 25, kind: input, shape index: {}]
  %s26 = inlined_call_operand.vmem [shape: f32[1,128], index: 26, kind: input, shape index: {}]
  %s27 = inlined_call_operand.hbm [shape: f32[8,128], index: 27, kind: output, shape index: {}]
  %s28 = sld [smem:[#allocation0]]
  $region190: #{tpu_custom_call.1} parent=0
    _
  %s30 = ssub.s32 1, %s28
  %s31 = scalar_select 0, %s30, %s28
  $region1: #{tpu_custom_call.1} parent=0
    #allocation6 [shape = 'u8[512]{0}', space=smem, size = 0x200, scoped, tag = 'input window, operand 0, single buffered']
    #allocation7 [shape = 's32[1]{0}', space=sflag, size = 0x4, scoped, tag = 'scoped memory for tpu_custom_call.1']
    #allocation8 [shape = 's32[1]{0}', space=sflag, size = 0x4, scoped, tag = 'scoped memory for tpu_custom_call.1']
    #allocation9 [shape = 's32[1]{0}', space=sflag, size = 0x4, scoped, tag = 'scoped memory for tpu_custom_call.1']
    #allocation10 [shape = 'u8[512]{0}', space=smem, size = 0x200, scoped, tag = 'input window, operand 1, single buffered']
    #allocation11 [shape = 's32[1]{0}', space=sflag, size = 0x4, scoped, tag = 'scoped memory for tpu_custom_call.1']
    #allocation12 [shape = 'u8[4096]{0}', space=vmem, size = 0x1000, scoped, tag = 'input window, operand 2, single buffered']
    #allocation13 [shape = 'u8[32768]{0}', space=vmem, size = 0x8000, scoped, tag = 'input window, operand 3, single buffered']
    #allocation14 [shape = 's32[1]{0}', space=sflag, size = 0x4, scoped, tag = 'scoped memory for tpu_custom_call.1']
    #allocation15 [shape = 'u8[1024]{0}', space=vmem, size = 0x400, scoped, tag = 'input window, operand 5, single buffered']
    #allocation16 [shape = 'u8[65536]{0}', space=vmem, size = 0x10000, scoped, tag = 'input window, operand 6, single buffered']
    #allocation17 [shape = 's32[1]{0}', space=sflag, size = 0x4, scoped, tag = 'scoped memory for tpu_custom_call.1']
    #allocation18 [shape = 'u8[65536]{0}', space=vmem, size = 0x10000, scoped, tag = 'input window, operand 7, single buffered']
    #allocation19 [shape = 'u8[1024]{0}', space=vmem, size = 0x400, scoped, tag = 'input window, operand 8, single buffered']
    #allocation20 [shape = 's32[1]{0}', space=sflag, size = 0x4, scoped, tag = 'scoped memory for tpu_custom_call.1']
    #allocation21 [shape = 'u8[65536]{0}', space=vmem, size = 0x10000, scoped, tag = 'input window, operand 9, single buffered']
    #allocation22 [shape = 'u8[512]{0}', space=vmem, size = 0x400, scoped, tag = 'input window, operand 10, single buffered']
    #allocation23 [shape = 's32[1]{0}', space=sflag, size = 0x4, scoped, tag = 'scoped memory for tpu_custom_call.1']
    #allocation24 [shape = 'u8[65536]{0}', space=vmem, size = 0x10000, scoped, tag = 'input window, operand 11, single buffered']
    #allocation25 [shape = 'u8[512]{0}', space=vmem, size = 0x400, scoped, tag = 'input window, operand 12, single buffered']
    #allocation26 [shape = 's32[1]{0}', space=sflag, size = 0x4, scoped, tag = 'scoped memory for tpu_custom_call.1']
    #allocation27 [shape = 'u8[65536]{0}', space=vmem, size = 0x10000, scoped, tag = 'input window, operand 13, single buffered']
    #allocation28 [shape = 'u8[512]{0}', space=vmem, size = 0x400, scoped, tag = 'input window, operand 14, single buffered']
    #allocation29 [shape = 's32[1]{0}', space=sflag, size = 0x4, scoped, tag = 'scoped memory for tpu_custom_call.1']
    #allocation30 [shape = 'u8[65536]{0}', space=vmem, size = 0x10000, scoped, tag = 'input window, operand 15, single buffered']
    #allocation31 [shape = 'u8[512]{0}', space=vmem, size = 0x400, scoped, tag = 'input window, operand 16, single buffered']
    #allocation32 [shape = 's32[1]{0}', space=sflag, size = 0x4, scoped, tag = 'scoped memory for tpu_custom_call.1']
    #allocation33 [shape = 'u8[65536]{0}', space=vmem, size = 0x10000, scoped, tag = 'input window, operand 17, single buffered']
    #allocation34 [shape = 'u8[16384]{0}', space=vmem, size = 0x4000, scoped, tag = 'input window, operand 25, single buffered']
    #allocation35 [shape = 's32[1]{0}', space=sflag, size = 0x4, scoped, tag = 'scoped memory for tpu_custom_call.1']
    #allocation36 [shape = 'u8[4096]{0}', space=vmem, size = 0x1000, scoped, tag = 'output window, operand 0, single buffered']
    %32 = vsyncpa [#allocation9], 0
    %33 = vsyncpa [#allocation11], 0
    %34 = vsyncpa [#allocation7], 0
    %35 = vsyncpa [#allocation14], 0
    %36 = vsyncpa [#allocation17], 0
    %37 = vsyncpa [#allocation20], 0
    %38 = vsyncpa [#allocation23], 0
    %39 = vsyncpa [#allocation26], 0
    %40 = vsyncpa [#allocation29], 0
    %41 = vsyncpa [#allocation32], 0
    %42 = vsyncpa [#allocation35], 0
    %43 = vsyncpa [#allocation8], 0
    // Predicated region
    $region2: #{tpu_custom_call.1} parent=1 // pred_check
      _
    $region3: #{tpu_custom_call.1} parent=1 // pred_check_branch
      %45 = sbr.rel (0) target = $region5
    $region4: #{tpu_custom_call.1} parent=1 // pred_region
      %s47 = ssub.s32 16, 16
      %48 = vsyncadd [#allocation9], %s47
      %51 = dma.hbm_to_smem %s0, 16, [#allocation6], [#allocation9]
    $region5: #{tpu_custom_call.1} parent=1 // pred_fallthru
      _
    // Predicated region
    $region6: #{tpu_custom_call.1} parent=1 // pred_check
      _
    $region7: #{tpu_custom_call.1} parent=1 // pred_check_branch
      %53 = sbr.rel (0) target = $region9
    $region8: #{tpu_custom_call.1} parent=1 // pred_region
      %s55 = ssub.s32 16, 16
      %56 = vsyncadd [#allocation11], %s55
      %59 = dma.hbm_to_smem %s1, 16, [#allocation10], [#allocation11]
    $region9: #{tpu_custom_call.1} parent=1 // pred_fallthru
      _
    // Predicated region
    $region10: #{tpu_custom_call.1} parent=1 // pred_check
      _
    $region11: #{tpu_custom_call.1} parent=1 // pred_check_branch
      %61 = sbr.rel (0) target = $region13
    $region12: #{tpu_custom_call.1} parent=1 // pred_region
      %s63 = ssub.s32 128, 128
      %64 = vsyncadd [#allocation7], %s63
      %s66 = sshll.u32 [#allocation12], 4
      %s67 = int_to_ptr.vmem [resolvable:$true] %s66
      %69 = dma.hbm_to_vmem [thread:$0]  %s2, 128, %s67, [#allocation7]
    $region13: #{tpu_custom_call.1} parent=1 // pred_fallthru
      _
    // Predicated region
    $region14: #{tpu_custom_call.1} parent=1 // pred_check
      _
    $region15: #{tpu_custom_call.1} parent=1 // pred_check_branch
      %71 = sbr.rel (0) target = $region17
    $region16: #{tpu_custom_call.1} parent=1 // pred_region
      %s73 = ssub.s32 1024, 1024
      %74 = vsyncadd [#allocation14], %s73
      %s75 = sshll.u32 [#allocation13], 4
      %s76 = int_to_ptr.vmem [resolvable:$true] %s75
      %81 = dma.hbm_to_vmem [thread:$0]  %s3, 1024, %s76, [#allocation14], 256, 256, 16
    $region17: #{tpu_custom_call.1} parent=1 // pred_fallthru
      _
    // Predicated region
    $region18: #{tpu_custom_call.1} parent=1 // pred_check
      _
    $region19: #{tpu_custom_call.1} parent=1 // pred_check_branch
      %83 = sbr.rel (0) target = $region21
    $region20: #{tpu_custom_call.1} parent=1 // pred_region
      _
    $region21: #{tpu_custom_call.1} parent=1 // pred_fallthru
      _
    // Predicated region
    $region22: #{tpu_custom_call.1} parent=1 // pred_check
      _
    $region23: #{tpu_custom_call.1} parent=1 // pred_check_branch
      %85 = sbr.rel (0) target = $region25
    $region24: #{tpu_custom_call.1} parent=1 // pred_region
      %s87 = ssub.s32 32, 32
      %88 = vsyncadd [#allocation14], %s87
      %s90 = sshll.u32 [#allocation15], 4
      %s91 = int_to_ptr.vmem [resolvable:$true] %s90
      %93 = dma.hbm_to_vmem [thread:$0]  %s5, 32, %s91, [#allocation14]
    $region25: #{tpu_custom_call.1} parent=1 // pred_fallthru
      _
    // Predicated region
    $region26: #{tpu_custom_call.1} parent=1 // pred_check
      _
    $region27: #{tpu_custom_call.1} parent=1 // pred_check_branch
      %95 = sbr.rel (0) target = $region29
    $region28: #{tpu_custom_call.1} parent=1 // pred_region
      %s97 = ssub.s32 2048, 2048
      %98 = vsyncadd [#allocation17], %s97
      %s99 = sshll.u32 [#allocation16], 4
      %s100 = int_to_ptr.vmem [resolvable:$true] %s99
      %105 = dma.hbm_to_vmem [thread:$0]  %s6, 2048, %s100, [#allocation17], 256, 256, 16
    $region29: #{tpu_custom_call.1} parent=1 // pred_fallthru
      _
    // Predicated region
    $region30: #{tpu_custom_call.1} parent=1 // pred_check
      _
    $region31: #{tpu_custom_call.1} parent=1 // pred_check_branch
      %107 = sbr.rel (0) target = $region33
    $region32: #{tpu_custom_call.1} parent=1 // pred_region
      %s109 = ssub.s32 2048, 2048
      %110 = vsyncadd [#allocation17], %s109
      %s111 = sshll.u32 [#allocation18], 4
      %s112 = int_to_ptr.vmem [resolvable:$true] %s111
      %117 = dma.hbm_to_vmem [thread:$0]  %s7, 2048, %s112, [#allocation17], 256, 256, 16
    $region33: #{tpu_custom_call.1} parent=1 // pred_fallthru
      _
    // Predicated region
    $region34: #{tpu_custom_call.1} parent=1 // pred_check
      _
    $region35: #{tpu_custom_call.1} parent=1 // pred_check_branch
      %119 = sbr.rel (0) target = $region37
    $region36: #{tpu_custom_call.1} parent=1 // pred_region
      %s121 = ssub.s32 32, 32
      %122 = vsyncadd [#allocation20], %s121
      %s124 = sshll.u32 [#allocation19], 4
      %s125 = int_to_ptr.vmem [resolvable:$true] %s124
      %127 = dma.hbm_to_vmem [thread:$0]  %s8, 32, %s125, [#allocation20]
    $region37: #{tpu_custom_call.1} parent=1 // pred_fallthru
      _
    // Predicated region
    $region38: #{tpu_custom_call.1} parent=1 // pred_check
      _
    $region39: #{tpu_custom_call.1} parent=1 // pred_check_branch
      %129 = sbr.rel (0) target = $region41
    $region40: #{tpu_custom_call.1} parent=1 // pred_region
      %s131 = ssub.s32 2048, 2048
      %132 = vsyncadd [#allocation20], %s131
      %s133 = sshll.u32 [#allocation21], 4
      %s134 = int_to_ptr.vmem [resolvable:$true] %s133
      %139 = dma.hbm_to_vmem [thread:$0]  %s9, 2048, %s134, [#allocation20], 128, 128, 8
    $region41: #{tpu_custom_call.1} parent=1 // pred_fallthru
      _
    // Predicated region
    $region42: #{tpu_custom_call.1} parent=1 // pred_check
      _
    $region43: #{tpu_custom_call.1} parent=1 // pred_check_branch
      %141 = sbr.rel (0) target = $region45
    $region44: #{tpu_custom_call.1} parent=1 // pred_region
      %s143 = ssub.s32 16, 16
      %144 = vsyncadd [#allocation23], %s143
      %s146 = sshll.u32 [#allocation22], 4
      %s147 = int_to_ptr.vmem [resolvable:$true] %s146
      %149 = dma.hbm_to_vmem [thread:$0]  %s10, 16, %s147, [#allocation23]
    $region45: #{tpu_custom_call.1} parent=1 // pred_fallthru
      _
    // Predicated region
    $region46: #{tpu_custom_call.1} parent=1 // pred_check
      _
    $region47: #{tpu_custom_call.1} parent=1 // pred_check_branch
      %151 = sbr.rel (0) target = $region49
    $region48: #{tpu_custom_call.1} parent=1 // pred_region
      %s153 = ssub.s32 2048, 2048
      %154 = vsyncadd [#allocation23], %s153
      %s155 = sshll.u32 [#allocation24], 4
      %s156 = int_to_ptr.vmem [resolvable:$true] %s155
      %161 = dma.hbm_to_vmem [thread:$0]  %s11, 2048, %s156, [#allocation23], 128, 128, 8
    $region49: #{tpu_custom_call.1} parent=1 // pred_fallthru
      _
    // Predicated region
    $region50: #{tpu_custom_call.1} parent=1 // pred_check
      _
    $region51: #{tpu_custom_call.1} parent=1 // pred_check_branch
      %163 = sbr.rel (0) target = $region53
    $region52: #{tpu_custom_call.1} parent=1 // pred_region
      %s165 = ssub.s32 16, 16
      %166 = vsyncadd [#allocation26], %s165
      %s168 = sshll.u32 [#allocation25], 4
      %s169 = int_to_ptr.vmem [resolvable:$true] %s168
      %171 = dma.hbm_to_vmem [thread:$0]  %s12, 16, %s169, [#allocation26]
    $region53: #{tpu_custom_call.1} parent=1 // pred_fallthru
      _
    // Predicated region
    $region54: #{tpu_custom_call.1} parent=1 // pred_check
      _
    $region55: #{tpu_custom_call.1} parent=1 // pred_check_branch
      %173 = sbr.rel (0) target = $region57
    $region56: #{tpu_custom_call.1} parent=1 // pred_region
      %s175 = ssub.s32 2048, 2048
      %176 = vsyncadd [#allocation26], %s175
      %s177 = sshll.u32 [#allocation27], 4
      %s178 = int_to_ptr.vmem [resolvable:$true] %s177
      %183 = dma.hbm_to_vmem [thread:$0]  %s13, 2048, %s178, [#allocation26], 128, 128, 8
    $region57: #{tpu_custom_call.1} parent=1 // pred_fallthru
      _
    // Predicated region
    $region58: #{tpu_custom_call.1} parent=1 // pred_check
      _
    $region59: #{tpu_custom_call.1} parent=1 // pred_check_branch
      %185 = sbr.rel (0) target = $region61
    $region60: #{tpu_custom_call.1} parent=1 // pred_region
      %s187 = ssub.s32 16, 16
      %188 = vsyncadd [#allocation29], %s187
      %s190 = sshll.u32 [#allocation28], 4
      %s191 = int_to_ptr.vmem [resolvable:$true] %s190
      %193 = dma.hbm_to_vmem [thread:$0]  %s14, 16, %s191, [#allocation29]
    $region61: #{tpu_custom_call.1} parent=1 // pred_fallthru
      _
    // Predicated region
    $region62: #{tpu_custom_call.1} parent=1 // pred_check
      _
    $region63: #{tpu_custom_call.1} parent=1 // pred_check_branch
      %195 = sbr.rel (0) target = $region65
    $region64: #{tpu_custom_call.1} parent=1 // pred_region
      %s197 = ssub.s32 2048, 2048
      %198 = vsyncadd [#allocation29], %s197
      %s199 = sshll.u32 [#allocation30], 4
      %s200 = int_to_ptr.vmem [resolvable:$true] %s199
      %205 = dma.hbm_to_vmem [thread:$0]  %s15, 2048, %s200, [#allocation29], 128, 128, 8
    $region65: #{tpu_custom_call.1} parent=1 // pred_fallthru
      _
    // Predicated region
    $region66: #{tpu_custom_call.1} parent=1 // pred_check
      _
    $region67: #{tpu_custom_call.1} parent=1 // pred_check_branch
      %207 = sbr.rel (0) target = $region69
    $region68: #{tpu_custom_call.1} parent=1 // pred_region
      %s209 = ssub.s32 16, 16
      %210 = vsyncadd [#allocation32], %s209
      %s212 = sshll.u32 [#allocation31], 4
      %s213 = int_to_ptr.vmem [resolvable:$true] %s212
      %215 = dma.hbm_to_vmem [thread:$0]  %s16, 16, %s213, [#allocation32]
    $region69: #{tpu_custom_call.1} parent=1 // pred_fallthru
      _
    // Predicated region
    $region70: #{tpu_custom_call.1} parent=1 // pred_check
      _
    $region71: #{tpu_custom_call.1} parent=1 // pred_check_branch
      %217 = sbr.rel (0) target = $region73
    $region72: #{tpu_custom_call.1} parent=1 // pred_region
      %s219 = ssub.s32 2048, 2048
      %220 = vsyncadd [#allocation32], %s219
      %s221 = sshll.u32 [#allocation33], 4
      %s222 = int_to_ptr.vmem [resolvable:$true] %s221
      %227 = dma.hbm_to_vmem [thread:$0]  %s17, 2048, %s222, [#allocation32], 128, 128, 8
    $region73: #{tpu_custom_call.1} parent=1 // pred_fallthru
      _
    // Predicated region
    $region74: #{tpu_custom_call.1} parent=1 // pred_check
      _
    $region75: #{tpu_custom_call.1} parent=1 // pred_check_branch
      %229 = sbr.rel (0) target = $region77
    $region76: #{tpu_custom_call.1} parent=1 // pred_region
      _
    $region77: #{tpu_custom_call.1} parent=1 // pred_fallthru
      _
    // Predicated region
    $region78: #{tpu_custom_call.1} parent=1 // pred_check
      _
    $region79: #{tpu_custom_call.1} parent=1 // pred_check_branch
      %231 = sbr.rel (0) target = $region81
    $region80: #{tpu_custom_call.1} parent=1 // pred_region
      _
    $region81: #{tpu_custom_call.1} parent=1 // pred_fallthru
      _
    // Predicated region
    $region82: #{tpu_custom_call.1} parent=1 // pred_check
      _
    $region83: #{tpu_custom_call.1} parent=1 // pred_check_branch
      %233 = sbr.rel (0) target = $region85
    $region84: #{tpu_custom_call.1} parent=1 // pred_region
      _
    $region85: #{tpu_custom_call.1} parent=1 // pred_fallthru
      _
    // Predicated region
    $region86: #{tpu_custom_call.1} parent=1 // pred_check
      _
    $region87: #{tpu_custom_call.1} parent=1 // pred_check_branch
      %235 = sbr.rel (0) target = $region89
    $region88: #{tpu_custom_call.1} parent=1 // pred_region
      _
    $region89: #{tpu_custom_call.1} parent=1 // pred_fallthru
      _
    // Predicated region
    $region90: #{tpu_custom_call.1} parent=1 // pred_check
      _
    $region91: #{tpu_custom_call.1} parent=1 // pred_check_branch
      %237 = sbr.rel (0) target = $region93
    $region92: #{tpu_custom_call.1} parent=1 // pred_region
      _
    $region93: #{tpu_custom_call.1} parent=1 // pred_fallthru
      _
    // Predicated region
    $region94: #{tpu_custom_call.1} parent=1 // pred_check
      _
    $region95: #{tpu_custom_call.1} parent=1 // pred_check_branch
      %239 = sbr.rel (0) target = $region97
    $region96: #{tpu_custom_call.1} parent=1 // pred_region
      _
    $region97: #{tpu_custom_call.1} parent=1 // pred_fallthru
      _
    // Predicated region
    $region98: #{tpu_custom_call.1} parent=1 // pred_check
      _
    $region99: #{tpu_custom_call.1} parent=1 // pred_check_branch
      %241 = sbr.rel (0) target = $region101
    $region100: #{tpu_custom_call.1} parent=1 // pred_region
      _
    $region101: #{tpu_custom_call.1} parent=1 // pred_fallthru
      _
    // Predicated region
    $region102: #{tpu_custom_call.1} parent=1 // pred_check
      _
    $region103: #{tpu_custom_call.1} parent=1 // pred_check_branch
      %243 = sbr.rel (0) target = $region105
    $region104: #{tpu_custom_call.1} parent=1 // pred_region
      %s245 = ssub.s32 512, 512
      %246 = vsyncadd [#allocation35], %s245
      %s247 = sshll.u32 [#allocation34], 4
      %s248 = int_to_ptr.vmem [resolvable:$true] %s247
      %253 = dma.hbm_to_vmem [thread:$0]  %s25, 512, %s248, [#allocation35], 128, 128, 8
    $region105: #{tpu_custom_call.1} parent=1 // pred_fallthru
      _
    // Predicated region
    $region106: #{tpu_custom_call.1} parent=1 // pred_check
      _
    $region107: #{tpu_custom_call.1} parent=1 // pred_check_branch
      %255 = sbr.rel (0) target = $region109
    $region108: #{tpu_custom_call.1} parent=1 // pred_region
      _
    $region109: #{tpu_custom_call.1} parent=1 // pred_fallthru
      _
    // Predicated region
    $region110: #{tpu_custom_call.1} parent=1 // pred_check
      _
    $region111: #{tpu_custom_call.1} parent=1 // pred_check_branch
      %257 = sbr.rel (0) target = $region113
    $region112: #{tpu_custom_call.1} parent=1 // pred_region
      %258 = dma.done [#allocation9], 16
    $region113: #{tpu_custom_call.1} parent=1 // pred_fallthru
      _
    // Predicated region
    $region114: #{tpu_custom_call.1} parent=1 // pred_check
      _
    $region115: #{tpu_custom_call.1} parent=1 // pred_check_branch
      %260 = sbr.rel (0) target = $region117
    $region116: #{tpu_custom_call.1} parent=1 // pred_region
      %261 = dma.done [#allocation11], 16
    $region117: #{tpu_custom_call.1} parent=1 // pred_fallthru
      _
    // Predicated region
    $region118: #{tpu_custom_call.1} parent=1 // pred_check
      _
    $region119: #{tpu_custom_call.1} parent=1 // pred_check_branch
      %263 = sbr.rel (0) target = $region121
    $region120: #{tpu_custom_call.1} parent=1 // pred_region
      %264 = dma.done [#allocation7], 128
    $region121: #{tpu_custom_call.1} parent=1 // pred_fallthru
      _
    // Predicated region
    $region122: #{tpu_custom_call.1} parent=1 // pred_check
      _
    $region123: #{tpu_custom_call.1} parent=1 // pred_check_branch
      %266 = sbr.rel (0) target = $region125
    $region124: #{tpu_custom_call.1} parent=1 // pred_region
      %267 = dma.done [#allocation14], 1024
    $region125: #{tpu_custom_call.1} parent=1 // pred_fallthru
      _
    // Predicated region
    $region126: #{tpu_custom_call.1} parent=1 // pred_check
      _
    $region127: #{tpu_custom_call.1} parent=1 // pred_check_branch
      %269 = sbr.rel (0) target = $region129
    $region128: #{tpu_custom_call.1} parent=1 // pred_region
      %270 = dma.done [#allocation14], 32
    $region129: #{tpu_custom_call.1} parent=1 // pred_fallthru
      _
    // Predicated region
    $region130: #{tpu_custom_call.1} parent=1 // pred_check
      _
    $region131: #{tpu_custom_call.1} parent=1 // pred_check_branch
      %272 = sbr.rel (0) target = $region133
    $region132: #{tpu_custom_call.1} parent=1 // pred_region
      %273 = dma.done [#allocation17], 2048
    $region133: #{tpu_custom_call.1} parent=1 // pred_fallthru
      _
    // Predicated region
    $region134: #{tpu_custom_call.1} parent=1 // pred_check
      _
    $region135: #{tpu_custom_call.1} parent=1 // pred_check_branch
      %275 = sbr.rel (0) target = $region137
    $region136: #{tpu_custom_call.1} parent=1 // pred_region
      %276 = dma.done [#allocation17], 2048
    $region137: #{tpu_custom_call.1} parent=1 // pred_fallthru
      _
    // Predicated region
    $region138: #{tpu_custom_call.1} parent=1 // pred_check
      _
    $region139: #{tpu_custom_call.1} parent=1 // pred_check_branch
      %278 = sbr.rel (0) target = $region141
    $region140: #{tpu_custom_call.1} parent=1 // pred_region
      %279 = dma.done [#allocation20], 32
    $region141: #{tpu_custom_call.1} parent=1 // pred_fallthru
      _
    // Predicated region
    $region142: #{tpu_custom_call.1} parent=1 // pred_check
      _
    $region143: #{tpu_custom_call.1} parent=1 // pred_check_branch
      %281 = sbr.rel (0) target = $region145
    $region144: #{tpu_custom_call.1} parent=1 // pred_region
      %282 = dma.done [#allocation20], 2048
    $region145: #{tpu_custom_call.1} parent=1 // pred_fallthru
      _
    // Predicated region
    $region146: #{tpu_custom_call.1} parent=1 // pred_check
      _
    $region147: #{tpu_custom_call.1} parent=1 // pred_check_branch
      %284 = sbr.rel (0) target = $region149
    $region148: #{tpu_custom_call.1} parent=1 // pred_region
      %285 = dma.done [#allocation23], 16
    $region149: #{tpu_custom_call.1} parent=1 // pred_fallthru
      _
    // Predicated region
    $region150: #{tpu_custom_call.1} parent=1 // pred_check
      _
    $region151: #{tpu_custom_call.1} parent=1 // pred_check_branch
      %287 = sbr.rel (0) target = $region153
    $region152: #{tpu_custom_call.1} parent=1 // pred_region
      %288 = dma.done [#allocation23], 2048
    $region153: #{tpu_custom_call.1} parent=1 // pred_fallthru
      _
    // Predicated region
    $region154: #{tpu_custom_call.1} parent=1 // pred_check
      _
    $region155: #{tpu_custom_call.1} parent=1 // pred_check_branch
      %290 = sbr.rel (0) target = $region157
    $region156: #{tpu_custom_call.1} parent=1 // pred_region
      %291 = dma.done [#allocation26], 16
    $region157: #{tpu_custom_call.1} parent=1 // pred_fallthru
      _
    // Predicated region
    $region158: #{tpu_custom_call.1} parent=1 // pred_check
      _
    $region159: #{tpu_custom_call.1} parent=1 // pred_check_branch
      %293 = sbr.rel (0) target = $region161
    $region160: #{tpu_custom_call.1} parent=1 // pred_region
      %294 = dma.done [#allocation26], 2048
    $region161: #{tpu_custom_call.1} parent=1 // pred_fallthru
      _
    // Predicated region
    $region162: #{tpu_custom_call.1} parent=1 // pred_check
      _
    $region163: #{tpu_custom_call.1} parent=1 // pred_check_branch
      %296 = sbr.rel (0) target = $region165
    $region164: #{tpu_custom_call.1} parent=1 // pred_region
      %297 = dma.done [#allocation29], 16
    $region165: #{tpu_custom_call.1} parent=1 // pred_fallthru
      _
    // Predicated region
    $region166: #{tpu_custom_call.1} parent=1 // pred_check
      _
    $region167: #{tpu_custom_call.1} parent=1 // pred_check_branch
      %299 = sbr.rel (0) target = $region169
    $region168: #{tpu_custom_call.1} parent=1 // pred_region
      %300 = dma.done [#allocation29], 2048
    $region169: #{tpu_custom_call.1} parent=1 // pred_fallthru
      _
    // Predicated region
    $region170: #{tpu_custom_call.1} parent=1 // pred_check
      _
    $region171: #{tpu_custom_call.1} parent=1 // pred_check_branch
      %302 = sbr.rel (0) target = $region173
    $region172: #{tpu_custom_call.1} parent=1 // pred_region
      %303 = dma.done [#allocation32], 16
    $region173: #{tpu_custom_call.1} parent=1 // pred_fallthru
      _
    // Predicated region
    $region174: #{tpu_custom_call.1} parent=1 // pred_check
      _
    $region175: #{tpu_custom_call.1} parent=1 // pred_check_branch
      %305 = sbr.rel (0) target = $region177
    $region176: #{tpu_custom_call.1} parent=1 // pred_region
      %306 = dma.done [#allocation32], 2048
    $region177: #{tpu_custom_call.1} parent=1 // pred_fallthru
      _
    // Predicated region
    $region178: #{tpu_custom_call.1} parent=1 // pred_check
      _
    $region179: #{tpu_custom_call.1} parent=1 // pred_check_branch
      %308 = sbr.rel (0) target = $region181
    $region180: #{tpu_custom_call.1} parent=1 // pred_region
      %309 = dma.done [#allocation35], 512
    $region181: #{tpu_custom_call.1} parent=1 // pred_fallthru
      _
    %310 = sfence
    %v311 = vlaneseq
    %v312 = vand.u32 %v311, 127
    %v313 = vadd.s32 %v312, 128
    %vm314 = vcmp.lt.s32.totalorder %v312, 0
    %v315 = vsub.s32 0, %v312
    %v316 = vsel %vm314, %v315, %v312
    %v317 = vshrl.u32 %v316, 6
    %v318 = vand.u32 %v316, 63
    %v319 = vsub.s32 0, %v318
    %v320 = vsel %vm314, %v319, %v318
    %vm321 = vcmp.lt.s32.totalorder %v313, 0
    %v322 = vsub.s32 0, %v313
    %v323 = vsel %vm321, %v322, %v313
    %v324 = vshrl.u32 %v323, 6
    %v325 = vand.u32 %v323, 63
    %v326 = vsub.s32 0, %v325
    %v327 = vsel %vm321, %v326, %v325
    %vm328 = vcmp.ne.s32.totalorder %v320, 0
    %vm329 = vcmp.ne.s32.totalorder %v327, 0
    %vm330 = vcmp.lt.s32.totalorder %v320, 0
    %vm331 = vcmp.lt.s32.totalorder %v327, 0
    %vm332 = vmand %vm330, %vm328
    %vm333 = vmand %vm331, %vm329
    %v334 = vadd.s32 %v320, 64
    %v335 = vadd.s32 %v327, 64
    %v336 = vsel %vm332, %v334, %v320
    %v337 = vsel %vm333, %v335, %v327
    %vm338 = vcmp.lt.s32.totalorder %v336, 32
    %vm339 = vcmp.lt.s32.totalorder %v337, 32
    %v340 = vld [vmem:[#allocation12] sm:$0xff]
    %v341 = vld [vmem:[#allocation13] sm:$0xff]
    %v342 = vld [vmem:[#allocation13 + $0x8] sm:$0xff]
    %v343 = vld [vmem:[#allocation13 + $0x10] sm:$0xff]
    %v344 = vld [vmem:[#allocation13 + $0x18] sm:$0xff]
    %v345 = vld [vmem:[#allocation13 + $0x20] sm:$0xff]
    %v346 = vld [vmem:[#allocation13 + $0x28] sm:$0xff]
    %v347 = vld [vmem:[#allocation13 + $0x30] sm:$0xff]
    %v348 = vld [vmem:[#allocation13 + $0x38] sm:$0xff]
    %v349 = vld [vmem:[#allocation15] sm:$0x3]
    %v351 = vlaneseq
    %v352 = vshrl.u32 %v351, 7
    %v353 = vsub.s32 0, %v352
    %v354 = vrot.slane %v349, %v353
    %v355 = vlaneseq
    %v356 = vshrl.u32 %v355, 7
    %v357 = vsub.s32 1, %v356
    %v358 = vrot.slane %v349, %v357
    %vm361 = vcmask 261120
    %v363 = vsel %vm361, %v340, 0
    %365 = vmatprep.subr.mxu0 %v342
    %366 = vmatpush1.msra.mxu0 %v341
    %367 = vmatprep.subr.mxu0 %v344
    %368 = vmatpush1.msra.mxu0 %v343
    %369 = vmatprep.subr.mxu0 %v346
    %370 = vmatpush1.msra.mxu0 %v345
    %371 = vmatprep.subr.mxu0 %v348
    %372 = vmatpush1.msra.mxu0 %v347
    %373 = vmatprep.subr.mxu0 0.0
    %374 = vmatpush1.msra.mxu0 0.0
    %375 = vmatprep.subr.mxu0 0.0
    %376 = vmatpush1.msra.mxu0 0.0
    %377 = vmatprep.subr.mxu0 0.0
    %378 = vmatpush1.msra.mxu0 0.0
    %379 = vmatprep.subr.mxu0 0.0
    %380 = vmatpush1.msra.mxu0 0.0
    %381 = vmatprep.subr.mxu0 0.0
    %382 = vmatpush1.msra.mxu0 0.0
    %383 = vmatprep.subr.mxu0 0.0
    %384 = vmatpush1.msra.mxu0 0.0
    %385 = vmatprep.subr.mxu0 0.0
    %386 = vmatpush1.msra.mxu0 0.0
    %387 = vmatprep.subr.mxu0 0.0
    %388 = vmatpush1.msra.mxu0 0.0
    %389 = vmatprep.subr.mxu0 0.0
    %390 = vmatpush1.msra.mxu0 0.0
    %391 = vmatprep.subr.mxu0 0.0
    %392 = vmatpush1.msra.mxu0 0.0
    %393 = vmatprep.subr.mxu0 0.0
    %394 = vmatpush1.msra.mxu0 0.0
    %395 = vmatprep.subr.mxu0 0.0
    %396 = vmatpush1.msra.mxu0 0.0
    %397 = vmatprep.subr.mxu0 0.0
    %398 = vmatpush1.msra.mxu0 0.0
    %399 = vmatprep.subr.mxu0 0.0
    %400 = vmatpush1.msra.mxu0 0.0
    %401 = vmatprep.subr.mxu0 0.0
    %402 = vmatpush1.msra.mxu0 0.0
    %403 = vmatprep.subr.mxu0 0.0
    %404 = vmatpush1.msra.mxu0 0.0
    %405 = vmatprep.subr.mxu0 0.0
    %406 = vmatpush1.msra.mxu0 0.0
    %407 = vmatprep.subr.mxu0 0.0
    %408 = vmatpush1.msra.mxu0 0.0
    %409 = vmatprep.subr.mxu0 0.0
    %410 = vmatpush1.msra.mxu0 0.0
    %411 = vmatprep.subr.mxu0 0.0
    %412 = vmatpush1.msra.mxu0 0.0
    %413 = vmatprep.subr.mxu0 0.0
    %414 = vmatpush1.msra.mxu0 0.0
    %415 = vmatprep.subr.mxu0 0.0
    %416 = vmatpush1.msra.mxu0 0.0
    %417 = vmatprep.subr.mxu0 0.0
    %418 = vmatpush1.msra.mxu0 0.0
    %419 = vmatprep.subr.mxu0 0.0
    %420 = vmatpush1.msra.mxu0 0.0
    %421 = vmatprep.subr.mxu0 0.0
    %422 = vmatpush1.msra.mxu0 0.0
    %423 = vmatprep.subr.mxu0 0.0
    %424 = vmatpush1.msra.mxu0 0.0
    %425 = vmatprep.subr.mxu0 0.0
    %426 = vmatpush1.msra.mxu0 0.0
    %427 = vmatprep.subr.mxu0 0.0
    %428 = vmatpush1.msra.mxu0 0.0
    %429 = vmatprep.mubr.f32.mxu0 0.0
    %430 = vmatmul.mubr.f32.gmra.mrb[0].mxu0 %v363
    %v431 = vpop.f32.mrb[0].mxu0
    %v432 = vadd.f32 %v354, %v431
    %v433 = vpop.f32.mrb[0].mxu0
    %v434 = vadd.f32 %v358, %v433
    %435 = vdwg.mxu0
    %436 = vst [vmem:[#allocation2] sm:$0xff] %v432
    %437 = vst [vmem:[#allocation2 + $0x8] sm:$0xff] %v434
    %v438 = vld [vmem:[%s4] sm:$0xff]
    %v439 = vld [vmem:[%s4 + $0x8] sm:$0xff]
    %v440 = vld [vmem:[%s4 + $0x10] sm:$0xff]
    %v441 = vld [vmem:[%s4 + $0x18] sm:$0xff]
    %v442 = vld [vmem:[%s4 + $0x20] sm:$0xff]
    %v443 = vld [vmem:[%s4 + $0x28] sm:$0xff]
    %v444 = vld [vmem:[%s4 + $0x30] sm:$0xff]
    %v445 = vld [vmem:[%s4 + $0x38] sm:$0xff]
    %v446 = vld [vmem:[%s4 + $0x40] sm:$0xff]
    %v447 = vld [vmem:[%s4 + $0x48] sm:$0xff]
    %v448 = vld [vmem:[%s4 + $0x50] sm:$0xff]
    %v449 = vld [vmem:[%s4 + $0x58] sm:$0xff]
    %v450 = vld [vmem:[%s4 + $0x60] sm:$0xff]
    %v451 = vld [vmem:[%s4 + $0x68] sm:$0xff]
    %v452 = vld [vmem:[%s4 + $0x70] sm:$0xff]
    %v453 = vld [vmem:[%s4 + $0x78] sm:$0xff]
    %vm454 = vcmask 523264
    %v456 = vsel %vm454, 0.0, 0
    %458 = vmatprep.subr.mxu0 %v439
    %459 = vmatpush1.msra.mxu0 %v438
    %460 = vmatprep.subr.mxu0 %v441
    %461 = vmatpush1.msra.mxu0 %v440
    %462 = vmatprep.subr.mxu0 %v443
    %463 = vmatpush1.msra.mxu0 %v442
    %464 = vmatprep.subr.mxu0 %v445
    %465 = vmatpush1.msra.mxu0 %v444
    %466 = vmatprep.subr.mxu0 %v447
    %467 = vmatpush1.msra.mxu0 %v446
    %468 = vmatprep.subr.mxu0 %v449
    %469 = vmatpush1.msra.mxu0 %v448
    %470 = vmatprep.subr.mxu0 %v451
    %471 = vmatpush1.msra.mxu0 %v450
    %472 = vmatprep.subr.mxu0 %v453
    %473 = vmatpush1.msra.mxu0 %v452
    %474 = vmatprep.subr.mxu0 0.0
    %475 = vmatpush1.msra.mxu0 0.0
    %476 = vmatprep.subr.mxu0 0.0
    %477 = vmatpush1.msra.mxu0 0.0
    %478 = vmatprep.subr.mxu0 0.0
    %479 = vmatpush1.msra.mxu0 0.0
    %480 = vmatprep.subr.mxu0 0.0
    %481 = vmatpush1.msra.mxu0 0.0
    %482 = vmatprep.subr.mxu0 0.0
    %483 = vmatpush1.msra.mxu0 0.0
    %484 = vmatprep.subr.mxu0 0.0
    %485 = vmatpush1.msra.mxu0 0.0
    %486 = vmatprep.subr.mxu0 0.0
    %487 = vmatpush1.msra.mxu0 0.0
    %488 = vmatprep.subr.mxu0 0.0
    %489 = vmatpush1.msra.mxu0 0.0
    %490 = vmatprep.subr.mxu0 0.0
    %491 = vmatpush1.msra.mxu0 0.0
    %492 = vmatprep.subr.mxu0 0.0
    %493 = vmatpush1.msra.mxu0 0.0
    %494 = vmatprep.subr.mxu0 0.0
    %495 = vmatpush1.msra.mxu0 0.0
    %496 = vmatprep.subr.mxu0 0.0
    %497 = vmatpush1.msra.mxu0 0.0
    %498 = vmatprep.subr.mxu0 0.0
    %499 = vmatpush1.msra.mxu0 0.0
    %500 = vmatprep.subr.mxu0 0.0
    %501 = vmatpush1.msra.mxu0 0.0
    %502 = vmatprep.subr.mxu0 0.0
    %503 = vmatpush1.msra.mxu0 0.0
    %504 = vmatprep.subr.mxu0 0.0
    %505 = vmatpush1.msra.mxu0 0.0
    %506 = vmatprep.subr.mxu0 0.0
    %507 = vmatpush1.msra.mxu0 0.0
    %508 = vmatprep.subr.mxu0 0.0
    %509 = vmatpush1.msra.mxu0 0.0
    %510 = vmatprep.subr.mxu0 0.0
    %511 = vmatpush1.msra.mxu0 0.0
    %512 = vmatprep.subr.mxu0 0.0
    %513 = vmatpush1.msra.mxu0 0.0
    %514 = vmatprep.subr.mxu0 0.0
    %515 = vmatpush1.msra.mxu0 0.0
    %516 = vmatprep.subr.mxu0 0.0
    %517 = vmatpush1.msra.mxu0 0.0
    %518 = vmatprep.subr.mxu0 0.0
    %519 = vmatpush1.msra.mxu0 0.0
    %520 = vmatprep.subr.mxu0 0.0
    %521 = vmatpush1.msra.mxu0 0.0
    %522 = vmatprep.mubr.f32.mxu0 0.0
    %523 = vmatmul.mubr.f32.gmra.mrb[0].mxu0 %v456
    %v524 = vpop.f32.mrb[0].mxu0
    %v525 = vadd.f32 0.0, %v524
    %v526 = vpop.f32.mrb[0].mxu0
    %v527 = vadd.f32 0.0, %v526
    %528 = vdwg.mxu0
    %v529 = vld [vmem:[#allocation2] ss:$8 sm:$0x3]
    %s530 = scalar_lea.vmem [#allocation2], 7
    %v531 = vld [vmem:[%s530] ss:$8 sm:$0x3]
    %v533 = vlaneseq
    %v534 = vshrl.u32 %v533, 7
    %v535 = vsub.s32 0, %v534
    %v536 = vrot.slane %v529, %v535
    %v537 = vlaneseq
    %v538 = vshrl.u32 %v537, 7
    %v539 = vsub.s32 1, %v538
    %v540 = vrot.slane %v529, %v539
    %v544 = vlaneseq
    %v545 = vshrl.u32 %v544, 7
    %v546 = vsub.s32 0, %v545
    %v547 = vrot.slane %v531, %v546
    %v548 = vlaneseq
    %v549 = vshrl.u32 %v548, 7
    %v550 = vsub.s32 1, %v549
    %v551 = vrot.slane %v531, %v550
    %v554 = vsel %vm338, %v536, %v547
    %v555 = vsel %vm339, %v540, %v551
    %v556 = vadd.f32 %v554, %v525
    %v557 = vadd.f32 %v555, %v527
    %v558 = vxor.u32 %v556, 2147483648
    %v559 = vxor.u32 %v557, 2147483648
    %v560 = vmul.f32 %v558, 1.442695
    %v561 = vpow.pop %v560
    %v562 = vmul.f32 %v559, 1.442695
    %v563 = vpow.pop %v562
    %v564 = vadd.f32 %v561, 1.0
    %v565 = vadd.f32 %v563, 1.0
    %v566 = vrcp.pop %v564
    %v567 = vmul.f32 1.0, %v566
    %v568 = vrcp.pop %v565
    %v569 = vmul.f32 1.0, %v568
    %v570 = vtanh.pop %v557
    %v571 = vmul.f32 %v567, 0.0
    %v572 = vmul.f32 %v567, %v570
    %574 = vrot.lane.b32.xlu0 %v572, 64
    %v575 = vpop.permute.xlu0 %574
    %v577 = vadd.f32 %v571, %v575
    %v578 = vtanh.pop %v577
    %v579 = vmul.f32 %v569, %v578
    %581 = vrot.lane.b32.xlu0 %v579, 64
    %v582 = vpop.permute.xlu0 %581
    %vm584 = vcmask 253952
    %585 = vst.msk [vmem:[#allocation3] sm:$0x1] %vm584, %v582
    %vm586 = vcmask 516352
    %587 = vst.msk [vmem:[#allocation3 + $0x7] sm:$0x1] %vm586, %v582
    %v588 = vsel %vm454, %v582, 0
    %590 = vmatprep.subr.mxu0 %v439
    %591 = vmatpush1.msra.mxu0 %v438
    %592 = vmatprep.subr.mxu0 %v441
    %593 = vmatpush1.msra.mxu0 %v440
    %594 = vmatprep.subr.mxu0 %v443
    %595 = vmatpush1.msra.mxu0 %v442
    %596 = vmatprep.subr.mxu0 %v445
    %597 = vmatpush1.msra.mxu0 %v444
    %598 = vmatprep.subr.mxu0 %v447
    %599 = vmatpush1.msra.mxu0 %v446
    %600 = vmatprep.subr.mxu0 %v449
    %601 = vmatpush1.msra.mxu0 %v448
    %602 = vmatprep.subr.mxu0 %v451
    %603 = vmatpush1.msra.mxu0 %v450
    %604 = vmatprep.subr.mxu0 %v453
    %605 = vmatpush1.msra.mxu0 %v452
    %606 = vmatprep.subr.mxu0 0.0
    %607 = vmatpush1.msra.mxu0 0.0
    %608 = vmatprep.subr.mxu0 0.0
    %609 = vmatpush1.msra.mxu0 0.0
    %610 = vmatprep.subr.mxu0 0.0
    %611 = vmatpush1.msra.mxu0 0.0
    %612 = vmatprep.subr.mxu0 0.0
    %613 = vmatpush1.msra.mxu0 0.0
    %614 = vmatprep.subr.mxu0 0.0
    %615 = vmatpush1.msra.mxu0 0.0
    %616 = vmatprep.subr.mxu0 0.0
    %617 = vmatpush1.msra.mxu0 0.0
    %618 = vmatprep.subr.mxu0 0.0
    %619 = vmatpush1.msra.mxu0 0.0
    %620 = vmatprep.subr.mxu0 0.0
    %621 = vmatpush1.msra.mxu0 0.0
    %622 = vmatprep.subr.mxu0 0.0
    %623 = vmatpush1.msra.mxu0 0.0
    %624 = vmatprep.subr.mxu0 0.0
    %625 = vmatpush1.msra.mxu0 0.0
    %626 = vmatprep.subr.mxu0 0.0
    %627 = vmatpush1.msra.mxu0 0.0
    %628 = vmatprep.subr.mxu0 0.0
    %629 = vmatpush1.msra.mxu0 0.0
    %630 = vmatprep.subr.mxu0 0.0
    %631 = vmatpush1.msra.mxu0 0.0
    %632 = vmatprep.subr.mxu0 0.0
    %633 = vmatpush1.msra.mxu0 0.0
    %634 = vmatprep.subr.mxu0 0.0
    %635 = vmatpush1.msra.mxu0 0.0
    %636 = vmatprep.subr.mxu0 0.0
    %637 = vmatpush1.msra.mxu0 0.0
    %638 = vmatprep.subr.mxu0 0.0
    %639 = vmatpush1.msra.mxu0 0.0
    %640 = vmatprep.subr.mxu0 0.0
    %641 = vmatpush1.msra.mxu0 0.0
    %642 = vmatprep.subr.mxu0 0.0
    %643 = vmatpush1.msra.mxu0 0.0
    %644 = vmatprep.subr.mxu0 0.0
    %645 = vmatpush1.msra.mxu0 0.0
    %646 = vmatprep.subr.mxu0 0.0
    %647 = vmatpush1.msra.mxu0 0.0
    %648 = vmatprep.subr.mxu0 0.0
    %649 = vmatpush1.msra.mxu0 0.0
    %650 = vmatprep.subr.mxu0 0.0
    %651 = vmatpush1.msra.mxu0 0.0
    %652 = vmatprep.subr.mxu0 0.0
    %653 = vmatpush1.msra.mxu0 0.0
    %654 = vmatprep.mubr.f32.mxu0 0.0
    %655 = vmatmul.mubr.f32.gmra.mrb[0].mxu0 %v588
    %v656 = vpop.f32.mrb[0].mxu0
    %v657 = vadd.f32 0.0, %v656
    %v658 = vpop.f32.mrb[0].mxu0
    %v659 = vadd.f32 0.0, %v658
    %660 = vdwg.mxu0
    %s661 = scalar_lea.vmem [#allocation2], 1
    %v662 = vld [vmem:[%s661] ss:$8 sm:$0x3]
    %s663 = scalar_lea.vmem [#allocation2], 6
    %v664 = vld [vmem:[%s663] ss:$8 sm:$0x3]
    %v666 = vlaneseq
    %v667 = vshrl.u32 %v666, 7
    %v668 = vsub.s32 0, %v667
    %v669 = vrot.slane %v662, %v668
    %v670 = vlaneseq
    %v671 = vshrl.u32 %v670, 7
    %v672 = vsub.s32 1, %v671
    %v673 = vrot.slane %v662, %v672
    %v677 = vlaneseq
    %v678 = vshrl.u32 %v677, 7
    %v679 = vsub.s32 0, %v678
    %v680 = vrot.slane %v664, %v679
    %v681 = vlaneseq
    %v682 = vshrl.u32 %v681, 7
    %v683 = vsub.s32 1, %v682
    %v684 = vrot.slane %v664, %v683
    %v687 = vsel %vm338, %v669, %v680
    %v688 = vsel %vm339, %v673, %v684
    %v689 = vadd.f32 %v687, %v657
    %v690 = vadd.f32 %v688, %v659
    %v691 = vxor.u32 %v689, 2147483648
    %v692 = vxor.u32 %v690, 2147483648
    %v693 = vmul.f32 %v691, 1.442695
    %v694 = vpow.pop %v693
    %v695 = vmul.f32 %v692, 1.442695
    %v696 = vpow.pop %v695
    %v697 = vadd.f32 %v694, 1.0
    %v698 = vadd.f32 %v696, 1.0
    %v699 = vrcp.pop %v697
    %v700 = vmul.f32 1.0, %v699
    %v701 = vrcp.pop %v698
    %v702 = vmul.f32 1.0, %v701
    %v703 = vtanh.pop %v690
    %v704 = vmul.f32 %v700, %v577
    %v705 = vmul.f32 %v700, %v703
    %707 = vrot.lane.b32.xlu0 %v705, 64
    %v708 = vpop.permute.xlu0 %707
    %v710 = vadd.f32 %v704, %v708
    %v711 = vtanh.pop %v710
    %v712 = vmul.f32 %v702, %v711
    %714 = vrot.lane.b32.xlu0 %v712, 64
    %v715 = vpop.permute.xlu0 %714
    %717 = vst.msk [vmem:[#allocation3 + $0x1] sm:$0x1] %vm584, %v715
    %718 = vst.msk [vmem:[#allocation3 + $0x6] sm:$0x1] %vm586, %v715
    %v719 = vsel %vm454, %v715, 0
    %721 = vmatprep.subr.mxu0 %v439
    %722 = vmatpush1.msra.mxu0 %v438
    %723 = vmatprep.subr.mxu0 %v441
    %724 = vmatpush1.msra.mxu0 %v440
    %725 = vmatprep.subr.mxu0 %v443
    %726 = vmatpush1.msra.mxu0 %v442
    %727 = vmatprep.subr.mxu0 %v445
    %728 = vmatpush1.msra.mxu0 %v444
    %729 = vmatprep.subr.mxu0 %v447
    %730 = vmatpush1.msra.mxu0 %v446
    %731 = vmatprep.subr.mxu0 %v449
    %732 = vmatpush1.msra.mxu0 %v448
    %733 = vmatprep.subr.mxu0 %v451
    %734 = vmatpush1.msra.mxu0 %v450
    %735 = vmatprep.subr.mxu0 %v453
    %736 = vmatpush1.msra.mxu0 %v452
    %737 = vmatprep.subr.mxu0 0.0
    %738 = vmatpush1.msra.mxu0 0.0
    %739 = vmatprep.subr.mxu0 0.0
    %740 = vmatpush1.msra.mxu0 0.0
    %741 = vmatprep.subr.mxu0 0.0
    %742 = vmatpush1.msra.mxu0 0.0
    %743 = vmatprep.subr.mxu0 0.0
    %744 = vmatpush1.msra.mxu0 0.0
    %745 = vmatprep.subr.mxu0 0.0
    %746 = vmatpush1.msra.mxu0 0.0
    %747 = vmatprep.subr.mxu0 0.0
    %748 = vmatpush1.msra.mxu0 0.0
    %749 = vmatprep.subr.mxu0 0.0
    %750 = vmatpush1.msra.mxu0 0.0
    %751 = vmatprep.subr.mxu0 0.0
    %752 = vmatpush1.msra.mxu0 0.0
    %753 = vmatprep.subr.mxu0 0.0
    %754 = vmatpush1.msra.mxu0 0.0
    %755 = vmatprep.subr.mxu0 0.0
    %756 = vmatpush1.msra.mxu0 0.0
    %757 = vmatprep.subr.mxu0 0.0
    %758 = vmatpush1.msra.mxu0 0.0
    %759 = vmatprep.subr.mxu0 0.0
    %760 = vmatpush1.msra.mxu0 0.0
    %761 = vmatprep.subr.mxu0 0.0
    %762 = vmatpush1.msra.mxu0 0.0
    %763 = vmatprep.subr.mxu0 0.0
    %764 = vmatpush1.msra.mxu0 0.0
    %765 = vmatprep.subr.mxu0 0.0
    %766 = vmatpush1.msra.mxu0 0.0
    %767 = vmatprep.subr.mxu0 0.0
    %768 = vmatpush1.msra.mxu0 0.0
    %769 = vmatprep.subr.mxu0 0.0
    %770 = vmatpush1.msra.mxu0 0.0
    %771 = vmatprep.subr.mxu0 0.0
    %772 = vmatpush1.msra.mxu0 0.0
    %773 = vmatprep.subr.mxu0 0.0
    %774 = vmatpush1.msra.mxu0 0.0
    %775 = vmatprep.subr.mxu0 0.0
    %776 = vmatpush1.msra.mxu0 0.0
    %777 = vmatprep.subr.mxu0 0.0
    %778 = vmatpush1.msra.mxu0 0.0
    %779 = vmatprep.subr.mxu0 0.0
    %780 = vmatpush1.msra.mxu0 0.0
    %781 = vmatprep.subr.mxu0 0.0
    %782 = vmatpush1.msra.mxu0 0.0
    %783 = vmatprep.subr.mxu0 0.0
    %784 = vmatpush1.msra.mxu0 0.0
    %785 = vmatprep.mubr.f32.mxu0 0.0
    %786 = vmatmul.mubr.f32.gmra.mrb[0].mxu0 %v719
    %v787 = vpop.f32.mrb[0].mxu0
    %v788 = vadd.f32 0.0, %v787
    %v789 = vpop.f32.mrb[0].mxu0
    %v790 = vadd.f32 0.0, %v789
    %791 = vdwg.mxu0
    %s792 = scalar_lea.vmem [#allocation2], 2
    %v793 = vld [vmem:[%s792] ss:$8 sm:$0x3]
    %s794 = scalar_lea.vmem [#allocation2], 5
    %v795 = vld [vmem:[%s794] ss:$8 sm:$0x3]
    %v797 = vlaneseq
    %v798 = vshrl.u32 %v797, 7
    %v799 = vsub.s32 0, %v798
    %v800 = vrot.slane %v793, %v799
    %v801 = vlaneseq
    %v802 = vshrl.u32 %v801, 7
    %v803 = vsub.s32 1, %v802
    %v804 = vrot.slane %v793, %v803
    %v808 = vlaneseq
    %v809 = vshrl.u32 %v808, 7
    %v810 = vsub.s32 0, %v809
    %v811 = vrot.slane %v795, %v810
    %v812 = vlaneseq
    %v813 = vshrl.u32 %v812, 7
    %v814 = vsub.s32 1, %v813
    %v815 = vrot.slane %v795, %v814
    %v818 = vsel %vm338, %v800, %v811
    %v819 = vsel %vm339, %v804, %v815
    %v820 = vadd.f32 %v818, %v788
    %v821 = vadd.f32 %v819, %v790
    %v822 = vxor.u32 %v820, 2147483648
    %v823 = vxor.u32 %v821, 2147483648
    %v824 = vmul.f32 %v822, 1.442695
    %v825 = vpow.pop %v824
    %v826 = vmul.f32 %v823, 1.442695
    %v827 = vpow.pop %v826
    %v828 = vadd.f32 %v825, 1.0
    %v829 = vadd.f32 %v827, 1.0
    %v830 = vrcp.pop %v828
    %v831 = vmul.f32 1.0, %v830
    %v832 = vrcp.pop %v829
    %v833 = vmul.f32 1.0, %v832
    %v834 = vtanh.pop %v821
    %v835 = vmul.f32 %v831, %v710
    %v836 = vmul.f32 %v831, %v834
    %838 = vrot.lane.b32.xlu0 %v836, 64
    %v839 = vpop.permute.xlu0 %838
    %v841 = vadd.f32 %v835, %v839
    %v842 = vtanh.pop %v841
    %v843 = vmul.f32 %v833, %v842
    %845 = vrot.lane.b32.xlu0 %v843, 64
    %v846 = vpop.permute.xlu0 %845
    %848 = vst.msk [vmem:[#allocation3 + $0x2] sm:$0x1] %vm584, %v846
    %849 = vst.msk [vmem:[#allocation3 + $0x5] sm:$0x1] %vm586, %v846
    %v850 = vsel %vm454, %v846, 0
    %852 = vmatprep.subr.mxu0 %v439
    %853 = vmatpush1.msra.mxu0 %v438
    %854 = vmatprep.subr.mxu0 %v441
    %855 = vmatpush1.msra.mxu0 %v440
    %856 = vmatprep.subr.mxu0 %v443
    %857 = vmatpush1.msra.mxu0 %v442
    %858 = vmatprep.subr.mxu0 %v445
    %859 = vmatpush1.msra.mxu0 %v444
    %860 = vmatprep.subr.mxu0 %v447
    %861 = vmatpush1.msra.mxu0 %v446
    %862 = vmatprep.subr.mxu0 %v449
    %863 = vmatpush1.msra.mxu0 %v448
    %864 = vmatprep.subr.mxu0 %v451
    %865 = vmatpush1.msra.mxu0 %v450
    %866 = vmatprep.subr.mxu0 %v453
    %867 = vmatpush1.msra.mxu0 %v452
    %868 = vmatprep.subr.mxu0 0.0
    %869 = vmatpush1.msra.mxu0 0.0
    %870 = vmatprep.subr.mxu0 0.0
    %871 = vmatpush1.msra.mxu0 0.0
    %872 = vmatprep.subr.mxu0 0.0
    %873 = vmatpush1.msra.mxu0 0.0
    %874 = vmatprep.subr.mxu0 0.0
    %875 = vmatpush1.msra.mxu0 0.0
    %876 = vmatprep.subr.mxu0 0.0
    %877 = vmatpush1.msra.mxu0 0.0
    %878 = vmatprep.subr.mxu0 0.0
    %879 = vmatpush1.msra.mxu0 0.0
    %880 = vmatprep.subr.mxu0 0.0
    %881 = vmatpush1.msra.mxu0 0.0
    %882 = vmatprep.subr.mxu0 0.0
    %883 = vmatpush1.msra.mxu0 0.0
    %884 = vmatprep.subr.mxu0 0.0
    %885 = vmatpush1.msra.mxu0 0.0
    %886 = vmatprep.subr.mxu0 0.0
    %887 = vmatpush1.msra.mxu0 0.0
    %888 = vmatprep.subr.mxu0 0.0
    %889 = vmatpush1.msra.mxu0 0.0
    %890 = vmatprep.subr.mxu0 0.0
    %891 = vmatpush1.msra.mxu0 0.0
    %892 = vmatprep.subr.mxu0 0.0
    %893 = vmatpush1.msra.mxu0 0.0
    %894 = vmatprep.subr.mxu0 0.0
    %895 = vmatpush1.msra.mxu0 0.0
    %896 = vmatprep.subr.mxu0 0.0
    %897 = vmatpush1.msra.mxu0 0.0
    %898 = vmatprep.subr.mxu0 0.0
    %899 = vmatpush1.msra.mxu0 0.0
    %900 = vmatprep.subr.mxu0 0.0
    %901 = vmatpush1.msra.mxu0 0.0
    %902 = vmatprep.subr.mxu0 0.0
    %903 = vmatpush1.msra.mxu0 0.0
    %904 = vmatprep.subr.mxu0 0.0
    %905 = vmatpush1.msra.mxu0 0.0
    %906 = vmatprep.subr.mxu0 0.0
    %907 = vmatpush1.msra.mxu0 0.0
    %908 = vmatprep.subr.mxu0 0.0
    %909 = vmatpush1.msra.mxu0 0.0
    %910 = vmatprep.subr.mxu0 0.0
    %911 = vmatpush1.msra.mxu0 0.0
    %912 = vmatprep.subr.mxu0 0.0
    %913 = vmatpush1.msra.mxu0 0.0
    %914 = vmatprep.subr.mxu0 0.0
    %915 = vmatpush1.msra.mxu0 0.0
    %916 = vmatprep.mubr.f32.mxu0 0.0
    %917 = vmatmul.mubr.f32.gmra.mrb[0].mxu0 %v850
    %v918 = vpop.f32.mrb[0].mxu0
    %v919 = vadd.f32 0.0, %v918
    %v920 = vpop.f32.mrb[0].mxu0
    %v921 = vadd.f32 0.0, %v920
    %922 = vdwg.mxu0
    %s923 = scalar_lea.vmem [#allocation2], 3
    %v924 = vld [vmem:[%s923] ss:$8 sm:$0x3]
    %s925 = scalar_lea.vmem [#allocation2], 4
    %v926 = vld [vmem:[%s925] ss:$8 sm:$0x3]
    %v928 = vlaneseq
    %v929 = vshrl.u32 %v928, 7
    %v930 = vsub.s32 0, %v929
    %v931 = vrot.slane %v924, %v930
    %v932 = vlaneseq
    %v933 = vshrl.u32 %v932, 7
    %v934 = vsub.s32 1, %v933
    %v935 = vrot.slane %v924, %v934
    %v939 = vlaneseq
    %v940 = vshrl.u32 %v939, 7
    %v941 = vsub.s32 0, %v940
    %v942 = vrot.slane %v926, %v941
    %v943 = vlaneseq
    %v944 = vshrl.u32 %v943, 7
    %v945 = vsub.s32 1, %v944
    %v946 = vrot.slane %v926, %v945
    %v949 = vsel %vm338, %v931, %v942
    %v950 = vsel %vm339, %v935, %v946
    %v951 = vadd.f32 %v949, %v919
    %v952 = vadd.f32 %v950, %v921
    %v953 = vxor.u32 %v951, 2147483648
    %v954 = vxor.u32 %v952, 2147483648
    %v955 = vmul.f32 %v953, 1.442695
    %v956 = vpow.pop %v955
    %v957 = vmul.f32 %v954, 1.442695
    %v958 = vpow.pop %v957
    %v959 = vadd.f32 %v956, 1.0
    %v960 = vadd.f32 %v958, 1.0
    %v961 = vrcp.pop %v959
    %v962 = vmul.f32 1.0, %v961
    %v963 = vrcp.pop %v960
    %v964 = vmul.f32 1.0, %v963
    %v965 = vtanh.pop %v952
    %v966 = vmul.f32 %v962, %v841
    %v967 = vmul.f32 %v962, %v965
    %969 = vrot.lane.b32.xlu0 %v967, 64
    %v970 = vpop.permute.xlu0 %969
    %v972 = vadd.f32 %v966, %v970
    %v973 = vtanh.pop %v972
    %v974 = vmul.f32 %v964, %v973
    %976 = vrot.lane.b32.xlu0 %v974, 64
    %v977 = vpop.permute.xlu0 %976
    %979 = vst.msk [vmem:[#allocation3 + $0x3] sm:$0x1] %vm584, %v977
    %980 = vst.msk [vmem:[#allocation3 + $0x4] sm:$0x1] %vm586, %v977
    %v981 = vsel %vm454, %v977, 0
    %983 = vmatprep.subr.mxu0 %v439
    %984 = vmatpush1.msra.mxu0 %v438
    %985 = vmatprep.subr.mxu0 %v441
    %986 = vmatpush1.msra.mxu0 %v440
    %987 = vmatprep.subr.mxu0 %v443
    %988 = vmatpush1.msra.mxu0 %v442
    %989 = vmatprep.subr.mxu0 %v445
    %990 = vmatpush1.msra.mxu0 %v444
    %991 = vmatprep.subr.mxu0 %v447
    %992 = vmatpush1.msra.mxu0 %v446
    %993 = vmatprep.subr.mxu0 %v449
    %994 = vmatpush1.msra.mxu0 %v448
    %995 = vmatprep.subr.mxu0 %v451
    %996 = vmatpush1.msra.mxu0 %v450
    %997 = vmatprep.subr.mxu0 %v453
    %998 = vmatpush1.msra.mxu0 %v452
    %999 = vmatprep.subr.mxu0 0.0
    %1000 = vmatpush1.msra.mxu0 0.0
    %1001 = vmatprep.subr.mxu0 0.0
    %1002 = vmatpush1.msra.mxu0 0.0
    %1003 = vmatprep.subr.mxu0 0.0
    %1004 = vmatpush1.msra.mxu0 0.0
    %1005 = vmatprep.subr.mxu0 0.0
    %1006 = vmatpush1.msra.mxu0 0.0
    %1007 = vmatprep.subr.mxu0 0.0
    %1008 = vmatpush1.msra.mxu0 0.0
    %1009 = vmatprep.subr.mxu0 0.0
    %1010 = vmatpush1.msra.mxu0 0.0
    %1011 = vmatprep.subr.mxu0 0.0
    %1012 = vmatpush1.msra.mxu0 0.0
    %1013 = vmatprep.subr.mxu0 0.0
    %1014 = vmatpush1.msra.mxu0 0.0
    %1015 = vmatprep.subr.mxu0 0.0
    %1016 = vmatpush1.msra.mxu0 0.0
    %1017 = vmatprep.subr.mxu0 0.0
    %1018 = vmatpush1.msra.mxu0 0.0
    %1019 = vmatprep.subr.mxu0 0.0
    %1020 = vmatpush1.msra.mxu0 0.0
    %1021 = vmatprep.subr.mxu0 0.0
    %1022 = vmatpush1.msra.mxu0 0.0
    %1023 = vmatprep.subr.mxu0 0.0
    %1024 = vmatpush1.msra.mxu0 0.0
    %1025 = vmatprep.subr.mxu0 0.0
    %1026 = vmatpush1.msra.mxu0 0.0
    %1027 = vmatprep.subr.mxu0 0.0
    %1028 = vmatpush1.msra.mxu0 0.0
    %1029 = vmatprep.subr.mxu0 0.0
    %1030 = vmatpush1.msra.mxu0 0.0
    %1031 = vmatprep.subr.mxu0 0.0
    %1032 = vmatpush1.msra.mxu0 0.0
    %1033 = vmatprep.subr.mxu0 0.0
    %1034 = vmatpush1.msra.mxu0 0.0
    %1035 = vmatprep.subr.mxu0 0.0
    %1036 = vmatpush1.msra.mxu0 0.0
    %1037 = vmatprep.subr.mxu0 0.0
    %1038 = vmatpush1.msra.mxu0 0.0
    %1039 = vmatprep.subr.mxu0 0.0
    %1040 = vmatpush1.msra.mxu0 0.0
    %1041 = vmatprep.subr.mxu0 0.0
    %1042 = vmatpush1.msra.mxu0 0.0
    %1043 = vmatprep.subr.mxu0 0.0
    %1044 = vmatpush1.msra.mxu0 0.0
    %1045 = vmatprep.subr.mxu0 0.0
    %1046 = vmatpush1.msra.mxu0 0.0
    %1047 = vmatprep.mubr.f32.mxu0 0.0
    %1048 = vmatmul.mubr.f32.gmra.mrb[0].mxu0 %v981
    %v1049 = vpop.f32.mrb[0].mxu0
    %v1050 = vadd.f32 0.0, %v1049
    %v1051 = vpop.f32.mrb[0].mxu0
    %v1052 = vadd.f32 0.0, %v1051
    %1053 = vdwg.mxu0
    %v1054 = vld [vmem:[%s925] ss:$8 sm:$0x3]
    %v1055 = vld [vmem:[%s923] ss:$8 sm:$0x3]
    %v1057 = vlaneseq
    %v1058 = vshrl.u32 %v1057, 7
    %v1059 = vsub.s32 0, %v1058
    %v1060 = vrot.slane %v1054, %v1059
    %v1061 = vlaneseq
    %v1062 = vshrl.u32 %v1061, 7
    %v1063 = vsub.s32 1, %v1062
    %v1064 = vrot.slane %v1054, %v1063
    %v1068 = vlaneseq
    %v1069 = vshrl.u32 %v1068, 7
    %v1070 = vsub.s32 0, %v1069
    %v1071 = vrot.slane %v1055, %v1070
    %v1072 = vlaneseq
    %v1073 = vshrl.u32 %v1072, 7
    %v1074 = vsub.s32 1, %v1073
    %v1075 = vrot.slane %v1055, %v1074
    %v1078 = vsel %vm338, %v1060, %v1071
    %v1079 = vsel %vm339, %v1064, %v1075
    %v1080 = vadd.f32 %v1078, %v1050
    %v1081 = vadd.f32 %v1079, %v1052
    %v1082 = vxor.u32 %v1080, 2147483648
    %v1083 = vxor.u32 %v1081, 2147483648
    %v1084 = vmul.f32 %v1082, 1.442695
    %v1085 = vpow.pop %v1084
    %v1086 = vmul.f32 %v1083, 1.442695
    %v1087 = vpow.pop %v1086
    %v1088 = vadd.f32 %v1085, 1.0
    %v1089 = vadd.f32 %v1087, 1.0
    %v1090 = vrcp.pop %v1088
    %v1091 = vmul.f32 1.0, %v1090
    %v1092 = vrcp.pop %v1089
    %v1093 = vmul.f32 1.0, %v1092
    %v1094 = vtanh.pop %v1081
    %v1095 = vmul.f32 %v1091, %v972
    %v1096 = vmul.f32 %v1091, %v1094
    %1098 = vrot.lane.b32.xlu0 %v1096, 64
    %v1099 = vpop.permute.xlu0 %1098
    %v1101 = vadd.f32 %v1095, %v1099
    %v1102 = vtanh.pop %v1101
    %v1103 = vmul.f32 %v1093, %v1102
    %1105 = vrot.lane.b32.xlu0 %v1103, 64
    %v1106 = vpop.permute.xlu0 %1105
    %1108 = vst.msk [vmem:[#allocation3 + $0x4] sm:$0x1] %vm584, %v1106
    %1109 = vst.msk [vmem:[#allocation3 + $0x3] sm:$0x1] %vm586, %v1106
    %v1110 = vsel %vm454, %v1106, 0
    %1112 = vmatprep.subr.mxu0 %v439
    %1113 = vmatpush1.msra.mxu0 %v438
    %1114 = vmatprep.subr.mxu0 %v441
    %1115 = vmatpush1.msra.mxu0 %v440
    %1116 = vmatprep.subr.mxu0 %v443
    %1117 = vmatpush1.msra.mxu0 %v442
    %1118 = vmatprep.subr.mxu0 %v445
    %1119 = vmatpush1.msra.mxu0 %v444
    %1120 = vmatprep.subr.mxu0 %v447
    %1121 = vmatpush1.msra.mxu0 %v446
    %1122 = vmatprep.subr.mxu0 %v449
    %1123 = vmatpush1.msra.mxu0 %v448
    %1124 = vmatprep.subr.mxu0 %v451
    %1125 = vmatpush1.msra.mxu0 %v450
    %1126 = vmatprep.subr.mxu0 %v453
    %1127 = vmatpush1.msra.mxu0 %v452
    %1128 = vmatprep.subr.mxu0 0.0
    %1129 = vmatpush1.msra.mxu0 0.0
    %1130 = vmatprep.subr.mxu0 0.0
    %1131 = vmatpush1.msra.mxu0 0.0
    %1132 = vmatprep.subr.mxu0 0.0
    %1133 = vmatpush1.msra.mxu0 0.0
    %1134 = vmatprep.subr.mxu0 0.0
    %1135 = vmatpush1.msra.mxu0 0.0
    %1136 = vmatprep.subr.mxu0 0.0
    %1137 = vmatpush1.msra.mxu0 0.0
    %1138 = vmatprep.subr.mxu0 0.0
    %1139 = vmatpush1.msra.mxu0 0.0
    %1140 = vmatprep.subr.mxu0 0.0
    %1141 = vmatpush1.msra.mxu0 0.0
    %1142 = vmatprep.subr.mxu0 0.0
    %1143 = vmatpush1.msra.mxu0 0.0
    %1144 = vmatprep.subr.mxu0 0.0
    %1145 = vmatpush1.msra.mxu0 0.0
    %1146 = vmatprep.subr.mxu0 0.0
    %1147 = vmatpush1.msra.mxu0 0.0
    %1148 = vmatprep.subr.mxu0 0.0
    %1149 = vmatpush1.msra.mxu0 0.0
    %1150 = vmatprep.subr.mxu0 0.0
    %1151 = vmatpush1.msra.mxu0 0.0
    %1152 = vmatprep.subr.mxu0 0.0
    %1153 = vmatpush1.msra.mxu0 0.0
    %1154 = vmatprep.subr.mxu0 0.0
    %1155 = vmatpush1.msra.mxu0 0.0
    %1156 = vmatprep.subr.mxu0 0.0
    %1157 = vmatpush1.msra.mxu0 0.0
    %1158 = vmatprep.subr.mxu0 0.0
    %1159 = vmatpush1.msra.mxu0 0.0
    %1160 = vmatprep.subr.mxu0 0.0
    %1161 = vmatpush1.msra.mxu0 0.0
    %1162 = vmatprep.subr.mxu0 0.0
    %1163 = vmatpush1.msra.mxu0 0.0
    %1164 = vmatprep.subr.mxu0 0.0
    %1165 = vmatpush1.msra.mxu0 0.0
    %1166 = vmatprep.subr.mxu0 0.0
    %1167 = vmatpush1.msra.mxu0 0.0
    %1168 = vmatprep.subr.mxu0 0.0
    %1169 = vmatpush1.msra.mxu0 0.0
    %1170 = vmatprep.subr.mxu0 0.0
    %1171 = vmatpush1.msra.mxu0 0.0
    %1172 = vmatprep.subr.mxu0 0.0
    %1173 = vmatpush1.msra.mxu0 0.0
    %1174 = vmatprep.subr.mxu0 0.0
    %1175 = vmatpush1.msra.mxu0 0.0
    %1176 = vmatprep.mubr.f32.mxu0 0.0
    %1177 = vmatmul.mubr.f32.gmra.mrb[0].mxu0 %v1110
    %v1178 = vpop.f32.mrb[0].mxu0
    %v1179 = vadd.f32 0.0, %v1178
    %v1180 = vpop.f32.mrb[0].mxu0
    %v1181 = vadd.f32 0.0, %v1180
    %1182 = vdwg.mxu0
    %v1183 = vld [vmem:[%s794] ss:$8 sm:$0x3]
    %v1184 = vld [vmem:[%s792] ss:$8 sm:$0x3]
    %v1186 = vlaneseq
    %v1187 = vshrl.u32 %v1186, 7
    %v1188 = vsub.s32 0, %v1187
    %v1189 = vrot.slane %v1183, %v1188
    %v1190 = vlaneseq
    %v1191 = vshrl.u32 %v1190, 7
    %v1192 = vsub.s32 1, %v1191
    %v1193 = vrot.slane %v1183, %v1192
    %v1197 = vlaneseq
    %v1198 = vshrl.u32 %v1197, 7
    %v1199 = vsub.s32 0, %v1198
    %v1200 = vrot.slane %v1184, %v1199
    %v1201 = vlaneseq
    %v1202 = vshrl.u32 %v1201, 7
    %v1203 = vsub.s32 1, %v1202
    %v1204 = vrot.slane %v1184, %v1203
    %v1207 = vsel %vm338, %v1189, %v1200
    %v1208 = vsel %vm339, %v1193, %v1204
    %v1209 = vadd.f32 %v1207, %v1179
    %v1210 = vadd.f32 %v1208, %v1181
    %v1211 = vxor.u32 %v1209, 2147483648
    %v1212 = vxor.u32 %v1210, 2147483648
    %v1213 = vmul.f32 %v1211, 1.442695
    %v1214 = vpow.pop %v1213
    %v1215 = vmul.f32 %v1212, 1.442695
    %v1216 = vpow.pop %v1215
    %v1217 = vadd.f32 %v1214, 1.0
    %v1218 = vadd.f32 %v1216, 1.0
    %v1219 = vrcp.pop %v1217
    %v1220 = vmul.f32 1.0, %v1219
    %v1221 = vrcp.pop %v1218
    %v1222 = vmul.f32 1.0, %v1221
    %v1223 = vtanh.pop %v1210
    %v1224 = vmul.f32 %v1220, %v1101
    %v1225 = vmul.f32 %v1220, %v1223
    %1227 = vrot.lane.b32.xlu0 %v1225, 64
    %v1228 = vpop.permute.xlu0 %1227
    %v1230 = vadd.f32 %v1224, %v1228
    %v1231 = vtanh.pop %v1230
    %v1232 = vmul.f32 %v1222, %v1231
    %1234 = vrot.lane.b32.xlu0 %v1232, 64
    %v1235 = vpop.permute.xlu0 %1234
    %1237 = vst.msk [vmem:[#allocation3 + $0x5] sm:$0x1] %vm584, %v1235
    %1238 = vst.msk [vmem:[#allocation3 + $0x2] sm:$0x1] %vm586, %v1235
    %v1239 = vsel %vm454, %v1235, 0
    %1241 = vmatprep.subr.mxu0 %v439
    %1242 = vmatpush1.msra.mxu0 %v438
    %1243 = vmatprep.subr.mxu0 %v441
    %1244 = vmatpush1.msra.mxu0 %v440
    %1245 = vmatprep.subr.mxu0 %v443
    %1246 = vmatpush1.msra.mxu0 %v442
    %1247 = vmatprep.subr.mxu0 %v445
    %1248 = vmatpush1.msra.mxu0 %v444
    %1249 = vmatprep.subr.mxu0 %v447
    %1250 = vmatpush1.msra.mxu0 %v446
    %1251 = vmatprep.subr.mxu0 %v449
    %1252 = vmatpush1.msra.mxu0 %v448
    %1253 = vmatprep.subr.mxu0 %v451
    %1254 = vmatpush1.msra.mxu0 %v450
    %1255 = vmatprep.subr.mxu0 %v453
    %1256 = vmatpush1.msra.mxu0 %v452
    %1257 = vmatprep.subr.mxu0 0.0
    %1258 = vmatpush1.msra.mxu0 0.0
    %1259 = vmatprep.subr.mxu0 0.0
    %1260 = vmatpush1.msra.mxu0 0.0
    %1261 = vmatprep.subr.mxu0 0.0
    %1262 = vmatpush1.msra.mxu0 0.0
    %1263 = vmatprep.subr.mxu0 0.0
    %1264 = vmatpush1.msra.mxu0 0.0
    %1265 = vmatprep.subr.mxu0 0.0
    %1266 = vmatpush1.msra.mxu0 0.0
    %1267 = vmatprep.subr.mxu0 0.0
    %1268 = vmatpush1.msra.mxu0 0.0
    %1269 = vmatprep.subr.mxu0 0.0
    %1270 = vmatpush1.msra.mxu0 0.0
    %1271 = vmatprep.subr.mxu0 0.0
    %1272 = vmatpush1.msra.mxu0 0.0
    %1273 = vmatprep.subr.mxu0 0.0
    %1274 = vmatpush1.msra.mxu0 0.0
    %1275 = vmatprep.subr.mxu0 0.0
    %1276 = vmatpush1.msra.mxu0 0.0
    %1277 = vmatprep.subr.mxu0 0.0
    %1278 = vmatpush1.msra.mxu0 0.0
    %1279 = vmatprep.subr.mxu0 0.0
    %1280 = vmatpush1.msra.mxu0 0.0
    %1281 = vmatprep.subr.mxu0 0.0
    %1282 = vmatpush1.msra.mxu0 0.0
    %1283 = vmatprep.subr.mxu0 0.0
    %1284 = vmatpush1.msra.mxu0 0.0
    %1285 = vmatprep.subr.mxu0 0.0
    %1286 = vmatpush1.msra.mxu0 0.0
    %1287 = vmatprep.subr.mxu0 0.0
    %1288 = vmatpush1.msra.mxu0 0.0
    %1289 = vmatprep.subr.mxu0 0.0
    %1290 = vmatpush1.msra.mxu0 0.0
    %1291 = vmatprep.subr.mxu0 0.0
    %1292 = vmatpush1.msra.mxu0 0.0
    %1293 = vmatprep.subr.mxu0 0.0
    %1294 = vmatpush1.msra.mxu0 0.0
    %1295 = vmatprep.subr.mxu0 0.0
    %1296 = vmatpush1.msra.mxu0 0.0
    %1297 = vmatprep.subr.mxu0 0.0
    %1298 = vmatpush1.msra.mxu0 0.0
    %1299 = vmatprep.subr.mxu0 0.0
    %1300 = vmatpush1.msra.mxu0 0.0
    %1301 = vmatprep.subr.mxu0 0.0
    %1302 = vmatpush1.msra.mxu0 0.0
    %1303 = vmatprep.subr.mxu0 0.0
    %1304 = vmatpush1.msra.mxu0 0.0
    %1305 = vmatprep.mubr.f32.mxu0 0.0
    %1306 = vmatmul.mubr.f32.gmra.mrb[0].mxu0 %v1239
    %v1307 = vpop.f32.mrb[0].mxu0
    %v1308 = vadd.f32 0.0, %v1307
    %v1309 = vpop.f32.mrb[0].mxu0
    %v1310 = vadd.f32 0.0, %v1309
    %1311 = vdwg.mxu0
    %v1312 = vld [vmem:[%s663] ss:$8 sm:$0x3]
    %v1313 = vld [vmem:[%s661] ss:$8 sm:$0x3]
    %v1315 = vlaneseq
    %v1316 = vshrl.u32 %v1315, 7
    %v1317 = vsub.s32 0, %v1316
    %v1318 = vrot.slane %v1312, %v1317
    %v1319 = vlaneseq
    %v1320 = vshrl.u32 %v1319, 7
    %v1321 = vsub.s32 1, %v1320
    %v1322 = vrot.slane %v1312, %v1321
    %v1326 = vlaneseq
    %v1327 = vshrl.u32 %v1326, 7
    %v1328 = vsub.s32 0, %v1327
    %v1329 = vrot.slane %v1313, %v1328
    %v1330 = vlaneseq
    %v1331 = vshrl.u32 %v1330, 7
    %v1332 = vsub.s32 1, %v1331
    %v1333 = vrot.slane %v1313, %v1332
    %v1336 = vsel %vm338, %v1318, %v1329
    %v1337 = vsel %vm339, %v1322, %v1333
    %v1338 = vadd.f32 %v1336, %v1308
    %v1339 = vadd.f32 %v1337, %v1310
    %v1340 = vxor.u32 %v1338, 2147483648
    %v1341 = vxor.u32 %v1339, 2147483648
    %v1342 = vmul.f32 %v1340, 1.442695
    %v1343 = vpow.pop %v1342
    %v1344 = vmul.f32 %v1341, 1.442695
    %v1345 = vpow.pop %v1344
    %v1346 = vadd.f32 %v1343, 1.0
    %v1347 = vadd.f32 %v1345, 1.0
    %v1348 = vrcp.pop %v1346
    %v1349 = vmul.f32 1.0, %v1348
    %v1350 = vrcp.pop %v1347
    %v1351 = vmul.f32 1.0, %v1350
    %v1352 = vtanh.pop %v1339
    %v1353 = vmul.f32 %v1349, %v1230
    %v1354 = vmul.f32 %v1349, %v1352
    %1356 = vrot.lane.b32.xlu0 %v1354, 64
    %v1357 = vpop.permute.xlu0 %1356
    %v1359 = vadd.f32 %v1353, %v1357
    %v1360 = vtanh.pop %v1359
    %v1361 = vmul.f32 %v1351, %v1360
    %1363 = vrot.lane.b32.xlu0 %v1361, 64
    %v1364 = vpop.permute.xlu0 %1363
    %1366 = vst.msk [vmem:[#allocation3 + $0x6] sm:$0x1] %vm584, %v1364
    %1367 = vst.msk [vmem:[#allocation3 + $0x1] sm:$0x1] %vm586, %v1364
    %v1368 = vsel %vm454, %v1364, 0
    %1370 = vmatprep.subr.mxu0 %v439
    %1371 = vmatpush1.msra.mxu0 %v438
    %1372 = vmatprep.subr.mxu0 %v441
    %1373 = vmatpush1.msra.mxu0 %v440
    %1374 = vmatprep.subr.mxu0 %v443
    %1375 = vmatpush1.msra.mxu0 %v442
    %1376 = vmatprep.subr.mxu0 %v445
    %1377 = vmatpush1.msra.mxu0 %v444
    %1378 = vmatprep.subr.mxu0 %v447
    %1379 = vmatpush1.msra.mxu0 %v446
    %1380 = vmatprep.subr.mxu0 %v449
    %1381 = vmatpush1.msra.mxu0 %v448
    %1382 = vmatprep.subr.mxu0 %v451
    %1383 = vmatpush1.msra.mxu0 %v450
    %1384 = vmatprep.subr.mxu0 %v453
    %1385 = vmatpush1.msra.mxu0 %v452
    %1386 = vmatprep.subr.mxu0 0.0
    %1387 = vmatpush1.msra.mxu0 0.0
    %1388 = vmatprep.subr.mxu0 0.0
    %1389 = vmatpush1.msra.mxu0 0.0
    %1390 = vmatprep.subr.mxu0 0.0
    %1391 = vmatpush1.msra.mxu0 0.0
    %1392 = vmatprep.subr.mxu0 0.0
    %1393 = vmatpush1.msra.mxu0 0.0
    %1394 = vmatprep.subr.mxu0 0.0
    %1395 = vmatpush1.msra.mxu0 0.0
    %1396 = vmatprep.subr.mxu0 0.0
    %1397 = vmatpush1.msra.mxu0 0.0
    %1398 = vmatprep.subr.mxu0 0.0
    %1399 = vmatpush1.msra.mxu0 0.0
    %1400 = vmatprep.subr.mxu0 0.0
    %1401 = vmatpush1.msra.mxu0 0.0
    %1402 = vmatprep.subr.mxu0 0.0
    %1403 = vmatpush1.msra.mxu0 0.0
    %1404 = vmatprep.subr.mxu0 0.0
    %1405 = vmatpush1.msra.mxu0 0.0
    %1406 = vmatprep.subr.mxu0 0.0
    %1407 = vmatpush1.msra.mxu0 0.0
    %1408 = vmatprep.subr.mxu0 0.0
    %1409 = vmatpush1.msra.mxu0 0.0
    %1410 = vmatprep.subr.mxu0 0.0
    %1411 = vmatpush1.msra.mxu0 0.0
    %1412 = vmatprep.subr.mxu0 0.0
    %1413 = vmatpush1.msra.mxu0 0.0
    %1414 = vmatprep.subr.mxu0 0.0
    %1415 = vmatpush1.msra.mxu0 0.0
    %1416 = vmatprep.subr.mxu0 0.0
    %1417 = vmatpush1.msra.mxu0 0.0
    %1418 = vmatprep.subr.mxu0 0.0
    %1419 = vmatpush1.msra.mxu0 0.0
    %1420 = vmatprep.subr.mxu0 0.0
    %1421 = vmatpush1.msra.mxu0 0.0
    %1422 = vmatprep.subr.mxu0 0.0
    %1423 = vmatpush1.msra.mxu0 0.0
    %1424 = vmatprep.subr.mxu0 0.0
    %1425 = vmatpush1.msra.mxu0 0.0
    %1426 = vmatprep.subr.mxu0 0.0
    %1427 = vmatpush1.msra.mxu0 0.0
    %1428 = vmatprep.subr.mxu0 0.0
    %1429 = vmatpush1.msra.mxu0 0.0
    %1430 = vmatprep.subr.mxu0 0.0
    %1431 = vmatpush1.msra.mxu0 0.0
    %1432 = vmatprep.subr.mxu0 0.0
    %1433 = vmatpush1.msra.mxu0 0.0
    %1434 = vmatprep.mubr.f32.mxu0 0.0
    %1435 = vmatmul.mubr.f32.gmra.mrb[0].mxu0 %v1368
    %v1436 = vpop.f32.mrb[0].mxu0
    %v1437 = vadd.f32 0.0, %v1436
    %v1438 = vpop.f32.mrb[0].mxu0
    %v1439 = vadd.f32 0.0, %v1438
    %1440 = vdwg.mxu0
    %v1441 = vld [vmem:[%s530] ss:$8 sm:$0x3]
    %v1442 = vld [vmem:[#allocation2] ss:$8 sm:$0x3]
    %v1444 = vlaneseq
    %v1445 = vshrl.u32 %v1444, 7
    %v1446 = vsub.s32 0, %v1445
    %v1447 = vrot.slane %v1441, %v1446
    %v1448 = vlaneseq
    %v1449 = vshrl.u32 %v1448, 7
    %v1450 = vsub.s32 1, %v1449
    %v1451 = vrot.slane %v1441, %v1450
    %v1455 = vlaneseq
    %v1456 = vshrl.u32 %v1455, 7
    %v1457 = vsub.s32 0, %v1456
    %v1458 = vrot.slane %v1442, %v1457
    %v1459 = vlaneseq
    %v1460 = vshrl.u32 %v1459, 7
    %v1461 = vsub.s32 1, %v1460
    %v1462 = vrot.slane %v1442, %v1461
    %v1465 = vsel %vm338, %v1447, %v1458
    %v1466 = vsel %vm339, %v1451, %v1462
    %v1467 = vadd.f32 %v1465, %v1437
    %v1468 = vadd.f32 %v1466, %v1439
    %v1469 = vxor.u32 %v1467, 2147483648
    %v1470 = vxor.u32 %v1468, 2147483648
    %v1471 = vmul.f32 %v1469, 1.442695
    %v1472 = vpow.pop %v1471
    %v1473 = vmul.f32 %v1470, 1.442695
    %v1474 = vpow.pop %v1473
    %v1475 = vadd.f32 %v1472, 1.0
    %v1476 = vadd.f32 %v1474, 1.0
    %v1477 = vrcp.pop %v1475
    %v1478 = vmul.f32 1.0, %v1477
    %v1479 = vrcp.pop %v1476
    %v1480 = vmul.f32 1.0, %v1479
    %v1481 = vtanh.pop %v1468
    %v1482 = vmul.f32 %v1478, %v1359
    %v1483 = vmul.f32 %v1478, %v1481
    %1485 = vrot.lane.b32.xlu0 %v1483, 64
    %v1486 = vpop.permute.xlu0 %1485
    %v1488 = vadd.f32 %v1482, %v1486
    %v1489 = vtanh.pop %v1488
    %v1490 = vmul.f32 %v1480, %v1489
    %1492 = vrot.lane.b32.xlu0 %v1490, 64
    %v1493 = vpop.permute.xlu0 %1492
    %1495 = vst.msk [vmem:[#allocation3 + $0x7] sm:$0x1] %vm584, %v1493
    %1496 = vst.msk [vmem:[#allocation3] sm:$0x1] %vm586, %v1493
    %v1497 = vld [vmem:[#allocation3] sm:$0xff]
    %v1498 = vld [vmem:[#allocation16] sm:$0xff]
    %v1499 = vld [vmem:[#allocation16 + $0x8] sm:$0xff]
    %v1500 = vld [vmem:[#allocation16 + $0x10] sm:$0xff]
    %v1501 = vld [vmem:[#allocation16 + $0x18] sm:$0xff]
    %v1502 = vld [vmem:[#allocation16 + $0x20] sm:$0xff]
    %v1503 = vld [vmem:[#allocation16 + $0x28] sm:$0xff]
    %v1504 = vld [vmem:[#allocation16 + $0x30] sm:$0xff]
    %v1505 = vld [vmem:[#allocation16 + $0x38] sm:$0xff]
    %v1506 = vld [vmem:[#allocation16 + $0x40] sm:$0xff]
    %v1507 = vld [vmem:[#allocation16 + $0x48] sm:$0xff]
    %v1508 = vld [vmem:[#allocation16 + $0x50] sm:$0xff]
    %v1509 = vld [vmem:[#allocation16 + $0x58] sm:$0xff]
    %v1510 = vld [vmem:[#allocation16 + $0x60] sm:$0xff]
    %v1511 = vld [vmem:[#allocation16 + $0x68] sm:$0xff]
    %v1512 = vld [vmem:[#allocation16 + $0x70] sm:$0xff]
    %v1513 = vld [vmem:[#allocation16 + $0x78] sm:$0xff]
    %v1514 = vld [vmem:[#allocation19] sm:$0x3]
    %v1516 = vlaneseq
    %v1517 = vshrl.u32 %v1516, 7
    %v1518 = vsub.s32 0, %v1517
    %v1519 = vrot.slane %v1514, %v1518
    %v1520 = vlaneseq
    %v1521 = vshrl.u32 %v1520, 7
    %v1522 = vsub.s32 1, %v1521
    %v1523 = vrot.slane %v1514, %v1522
    %v1527 = vsel %vm454, %v1497, 0
    %1529 = vmatprep.subr.mxu0 %v1499
    %1530 = vmatpush1.msra.mxu0 %v1498
    %1531 = vmatprep.subr.mxu0 %v1501
    %1532 = vmatpush1.msra.mxu0 %v1500
    %1533 = vmatprep.subr.mxu0 %v1503
    %1534 = vmatpush1.msra.mxu0 %v1502
    %1535 = vmatprep.subr.mxu0 %v1505
    %1536 = vmatpush1.msra.mxu0 %v1504
    %1537 = vmatprep.subr.mxu0 %v1507
    %1538 = vmatpush1.msra.mxu0 %v1506
    %1539 = vmatprep.subr.mxu0 %v1509
    %1540 = vmatpush1.msra.mxu0 %v1508
    %1541 = vmatprep.subr.mxu0 %v1511
    %1542 = vmatpush1.msra.mxu0 %v1510
    %1543 = vmatprep.subr.mxu0 %v1513
    %1544 = vmatpush1.msra.mxu0 %v1512
    %1545 = vmatprep.subr.mxu0 0.0
    %1546 = vmatpush1.msra.mxu0 0.0
    %1547 = vmatprep.subr.mxu0 0.0
    %1548 = vmatpush1.msra.mxu0 0.0
    %1549 = vmatprep.subr.mxu0 0.0
    %1550 = vmatpush1.msra.mxu0 0.0
    %1551 = vmatprep.subr.mxu0 0.0
    %1552 = vmatpush1.msra.mxu0 0.0
    %1553 = vmatprep.subr.mxu0 0.0
    %1554 = vmatpush1.msra.mxu0 0.0
    %1555 = vmatprep.subr.mxu0 0.0
    %1556 = vmatpush1.msra.mxu0 0.0
    %1557 = vmatprep.subr.mxu0 0.0
    %1558 = vmatpush1.msra.mxu0 0.0
    %1559 = vmatprep.subr.mxu0 0.0
    %1560 = vmatpush1.msra.mxu0 0.0
    %1561 = vmatprep.subr.mxu0 0.0
    %1562 = vmatpush1.msra.mxu0 0.0
    %1563 = vmatprep.subr.mxu0 0.0
    %1564 = vmatpush1.msra.mxu0 0.0
    %1565 = vmatprep.subr.mxu0 0.0
    %1566 = vmatpush1.msra.mxu0 0.0
    %1567 = vmatprep.subr.mxu0 0.0
    %1568 = vmatpush1.msra.mxu0 0.0
    %1569 = vmatprep.subr.mxu0 0.0
    %1570 = vmatpush1.msra.mxu0 0.0
    %1571 = vmatprep.subr.mxu0 0.0
    %1572 = vmatpush1.msra.mxu0 0.0
    %1573 = vmatprep.subr.mxu0 0.0
    %1574 = vmatpush1.msra.mxu0 0.0
    %1575 = vmatprep.subr.mxu0 0.0
    %1576 = vmatpush1.msra.mxu0 0.0
    %1577 = vmatprep.subr.mxu0 0.0
    %1578 = vmatpush1.msra.mxu0 0.0
    %1579 = vmatprep.subr.mxu0 0.0
    %1580 = vmatpush1.msra.mxu0 0.0
    %1581 = vmatprep.subr.mxu0 0.0
    %1582 = vmatpush1.msra.mxu0 0.0
    %1583 = vmatprep.subr.mxu0 0.0
    %1584 = vmatpush1.msra.mxu0 0.0
    %1585 = vmatprep.subr.mxu0 0.0
    %1586 = vmatpush1.msra.mxu0 0.0
    %1587 = vmatprep.subr.mxu0 0.0
    %1588 = vmatpush1.msra.mxu0 0.0
    %1589 = vmatprep.subr.mxu0 0.0
    %1590 = vmatpush1.msra.mxu0 0.0
    %1591 = vmatprep.subr.mxu0 0.0
    %1592 = vmatpush1.msra.mxu0 0.0
    %1593 = vmatprep.mubr.f32.mxu0 0.0
    %1594 = vmatmul.mubr.f32.gmra.mrb[0].mxu0 %v1527
    %v1595 = vpop.f32.mrb[0].mxu0
    %v1596 = vadd.f32 %v1519, %v1595
    %v1597 = vpop.f32.mrb[0].mxu0
    %v1598 = vadd.f32 %v1523, %v1597
    %1599 = vdwg.mxu0
    %1600 = vst [vmem:[#allocation2] sm:$0xff] %v1596
    %1601 = vst [vmem:[#allocation2 + $0x8] sm:$0xff] %v1598
    %v1602 = vld [vmem:[#allocation18] sm:$0xff]
    %v1603 = vld [vmem:[#allocation18 + $0x8] sm:$0xff]
    %v1604 = vld [vmem:[#allocation18 + $0x10] sm:$0xff]
    %v1605 = vld [vmem:[#allocation18 + $0x18] sm:$0xff]
    %v1606 = vld [vmem:[#allocation18 + $0x20] sm:$0xff]
    %v1607 = vld [vmem:[#allocation18 + $0x28] sm:$0xff]
    %v1608 = vld [vmem:[#allocation18 + $0x30] sm:$0xff]
    %v1609 = vld [vmem:[#allocation18 + $0x38] sm:$0xff]
    %v1610 = vld [vmem:[#allocation18 + $0x40] sm:$0xff]
    %v1611 = vld [vmem:[#allocation18 + $0x48] sm:$0xff]
    %v1612 = vld [vmem:[#allocation18 + $0x50] sm:$0xff]
    %v1613 = vld [vmem:[#allocation18 + $0x58] sm:$0xff]
    %v1614 = vld [vmem:[#allocation18 + $0x60] sm:$0xff]
    %v1615 = vld [vmem:[#allocation18 + $0x68] sm:$0xff]
    %v1616 = vld [vmem:[#allocation18 + $0x70] sm:$0xff]
    %v1617 = vld [vmem:[#allocation18 + $0x78] sm:$0xff]
    %1618 = vmatprep.subr.mxu0 %v1603
    %1619 = vmatpush1.msra.mxu0 %v1602
    %1620 = vmatprep.subr.mxu0 %v1605
    %1621 = vmatpush1.msra.mxu0 %v1604
    %1622 = vmatprep.subr.mxu0 %v1607
    %1623 = vmatpush1.msra.mxu0 %v1606
    %1624 = vmatprep.subr.mxu0 %v1609
    %1625 = vmatpush1.msra.mxu0 %v1608
    %1626 = vmatprep.subr.mxu0 %v1611
    %1627 = vmatpush1.msra.mxu0 %v1610
    %1628 = vmatprep.subr.mxu0 %v1613
    %1629 = vmatpush1.msra.mxu0 %v1612
    %1630 = vmatprep.subr.mxu0 %v1615
    %1631 = vmatpush1.msra.mxu0 %v1614
    %1632 = vmatprep.subr.mxu0 %v1617
    %1633 = vmatpush1.msra.mxu0 %v1616
    %1634 = vmatprep.subr.mxu0 0.0
    %1635 = vmatpush1.msra.mxu0 0.0
    %1636 = vmatprep.subr.mxu0 0.0
    %1637 = vmatpush1.msra.mxu0 0.0
    %1638 = vmatprep.subr.mxu0 0.0
    %1639 = vmatpush1.msra.mxu0 0.0
    %1640 = vmatprep.subr.mxu0 0.0
    %1641 = vmatpush1.msra.mxu0 0.0
    %1642 = vmatprep.subr.mxu0 0.0
    %1643 = vmatpush1.msra.mxu0 0.0
    %1644 = vmatprep.subr.mxu0 0.0
    %1645 = vmatpush1.msra.mxu0 0.0
    %1646 = vmatprep.subr.mxu0 0.0
    %1647 = vmatpush1.msra.mxu0 0.0
    %1648 = vmatprep.subr.mxu0 0.0
    %1649 = vmatpush1.msra.mxu0 0.0
    %1650 = vmatprep.subr.mxu0 0.0
    %1651 = vmatpush1.msra.mxu0 0.0
    %1652 = vmatprep.subr.mxu0 0.0
    %1653 = vmatpush1.msra.mxu0 0.0
    %1654 = vmatprep.subr.mxu0 0.0
    %1655 = vmatpush1.msra.mxu0 0.0
    %1656 = vmatprep.subr.mxu0 0.0
    %1657 = vmatpush1.msra.mxu0 0.0
    %1658 = vmatprep.subr.mxu0 0.0
    %1659 = vmatpush1.msra.mxu0 0.0
    %1660 = vmatprep.subr.mxu0 0.0
    %1661 = vmatpush1.msra.mxu0 0.0
    %1662 = vmatprep.subr.mxu0 0.0
    %1663 = vmatpush1.msra.mxu0 0.0
    %1664 = vmatprep.subr.mxu0 0.0
    %1665 = vmatpush1.msra.mxu0 0.0
    %1666 = vmatprep.subr.mxu0 0.0
    %1667 = vmatpush1.msra.mxu0 0.0
    %1668 = vmatprep.subr.mxu0 0.0
    %1669 = vmatpush1.msra.mxu0 0.0
    %1670 = vmatprep.subr.mxu0 0.0
    %1671 = vmatpush1.msra.mxu0 0.0
    %1672 = vmatprep.subr.mxu0 0.0
    %1673 = vmatpush1.msra.mxu0 0.0
    %1674 = vmatprep.subr.mxu0 0.0
    %1675 = vmatpush1.msra.mxu0 0.0
    %1676 = vmatprep.subr.mxu0 0.0
    %1677 = vmatpush1.msra.mxu0 0.0
    %1678 = vmatprep.subr.mxu0 0.0
    %1679 = vmatpush1.msra.mxu0 0.0
    %1680 = vmatprep.subr.mxu0 0.0
    %1681 = vmatpush1.msra.mxu0 0.0
    %1682 = vmatprep.mubr.f32.mxu0 0.0
    %1683 = vmatmul.mubr.f32.gmra.mrb[0].mxu0 %v456
    %v1684 = vpop.f32.mrb[0].mxu0
    %v1685 = vadd.f32 0.0, %v1684
    %v1686 = vpop.f32.mrb[0].mxu0
    %v1687 = vadd.f32 0.0, %v1686
    %1688 = vdwg.mxu0
    %v1689 = vld [vmem:[#allocation2] ss:$8 sm:$0x3]
    %v1690 = vld [vmem:[%s530] ss:$8 sm:$0x3]
    %v1692 = vlaneseq
    %v1693 = vshrl.u32 %v1692, 7
    %v1694 = vsub.s32 0, %v1693
    %v1695 = vrot.slane %v1689, %v1694
    %v1696 = vlaneseq
    %v1697 = vshrl.u32 %v1696, 7
    %v1698 = vsub.s32 1, %v1697
    %v1699 = vrot.slane %v1689, %v1698
    %v1703 = vlaneseq
    %v1704 = vshrl.u32 %v1703, 7
    %v1705 = vsub.s32 0, %v1704
    %v1706 = vrot.slane %v1690, %v1705
    %v1707 = vlaneseq
    %v1708 = vshrl.u32 %v1707, 7
    %v1709 = vsub.s32 1, %v1708
    %v1710 = vrot.slane %v1690, %v1709
    %v1713 = vsel %vm338, %v1695, %v1706
    %v1714 = vsel %vm339, %v1699, %v1710
    %v1715 = vadd.f32 %v1713, %v1685
    %v1716 = vadd.f32 %v1714, %v1687
    %v1717 = vxor.u32 %v1715, 2147483648
    %v1718 = vxor.u32 %v1716, 2147483648
    %v1719 = vmul.f32 %v1717, 1.442695
    %v1720 = vpow.pop %v1719
    %v1721 = vmul.f32 %v1718, 1.442695
    %v1722 = vpow.pop %v1721
    %v1723 = vadd.f32 %v1720, 1.0
    %v1724 = vadd.f32 %v1722, 1.0
    %v1725 = vrcp.pop %v1723
    %v1726 = vmul.f32 1.0, %v1725
    %v1727 = vrcp.pop %v1724
    %v1728 = vmul.f32 1.0, %v1727
    %v1729 = vtanh.pop %v1716
    %v1730 = vmul.f32 %v1726, 0.0
    %v1731 = vmul.f32 %v1726, %v1729
    %1733 = vrot.lane.b32.xlu0 %v1731, 64
    %v1734 = vpop.permute.xlu0 %1733
    %v1736 = vadd.f32 %v1730, %v1734
    %v1737 = vtanh.pop %v1736
    %v1738 = vmul.f32 %v1728, %v1737
    %1740 = vrot.lane.b32.xlu0 %v1738, 64
    %v1741 = vpop.permute.xlu0 %1740
    %1743 = vst.msk [vmem:[#allocation4] sm:$0x1] %vm584, %v1741
    %1744 = vst.msk [vmem:[#allocation4 + $0x7] sm:$0x1] %vm586, %v1741
    %v1745 = vsel %vm454, %v1741, 0
    %1747 = vmatprep.subr.mxu0 %v1603
    %1748 = vmatpush1.msra.mxu0 %v1602
    %1749 = vmatprep.subr.mxu0 %v1605
    %1750 = vmatpush1.msra.mxu0 %v1604
    %1751 = vmatprep.subr.mxu0 %v1607
    %1752 = vmatpush1.msra.mxu0 %v1606
    %1753 = vmatprep.subr.mxu0 %v1609
    %1754 = vmatpush1.msra.mxu0 %v1608
    %1755 = vmatprep.subr.mxu0 %v1611
    %1756 = vmatpush1.msra.mxu0 %v1610
    %1757 = vmatprep.subr.mxu0 %v1613
    %1758 = vmatpush1.msra.mxu0 %v1612
    %1759 = vmatprep.subr.mxu0 %v1615
    %1760 = vmatpush1.msra.mxu0 %v1614
    %1761 = vmatprep.subr.mxu0 %v1617
    %1762 = vmatpush1.msra.mxu0 %v1616
    %1763 = vmatprep.subr.mxu0 0.0
    %1764 = vmatpush1.msra.mxu0 0.0
    %1765 = vmatprep.subr.mxu0 0.0
    %1766 = vmatpush1.msra.mxu0 0.0
    %1767 = vmatprep.subr.mxu0 0.0
    %1768 = vmatpush1.msra.mxu0 0.0
    %1769 = vmatprep.subr.mxu0 0.0
    %1770 = vmatpush1.msra.mxu0 0.0
    %1771 = vmatprep.subr.mxu0 0.0
    %1772 = vmatpush1.msra.mxu0 0.0
    %1773 = vmatprep.subr.mxu0 0.0
    %1774 = vmatpush1.msra.mxu0 0.0
    %1775 = vmatprep.subr.mxu0 0.0
    %1776 = vmatpush1.msra.mxu0 0.0
    %1777 = vmatprep.subr.mxu0 0.0
    %1778 = vmatpush1.msra.mxu0 0.0
    %1779 = vmatprep.subr.mxu0 0.0
    %1780 = vmatpush1.msra.mxu0 0.0
    %1781 = vmatprep.subr.mxu0 0.0
    %1782 = vmatpush1.msra.mxu0 0.0
    %1783 = vmatprep.subr.mxu0 0.0
    %1784 = vmatpush1.msra.mxu0 0.0
    %1785 = vmatprep.subr.mxu0 0.0
    %1786 = vmatpush1.msra.mxu0 0.0
    %1787 = vmatprep.subr.mxu0 0.0
    %1788 = vmatpush1.msra.mxu0 0.0
    %1789 = vmatprep.subr.mxu0 0.0
    %1790 = vmatpush1.msra.mxu0 0.0
    %1791 = vmatprep.subr.mxu0 0.0
    %1792 = vmatpush1.msra.mxu0 0.0
    %1793 = vmatprep.subr.mxu0 0.0
    %1794 = vmatpush1.msra.mxu0 0.0
    %1795 = vmatprep.subr.mxu0 0.0
    %1796 = vmatpush1.msra.mxu0 0.0
    %1797 = vmatprep.subr.mxu0 0.0
    %1798 = vmatpush1.msra.mxu0 0.0
    %1799 = vmatprep.subr.mxu0 0.0
    %1800 = vmatpush1.msra.mxu0 0.0
    %1801 = vmatprep.subr.mxu0 0.0
    %1802 = vmatpush1.msra.mxu0 0.0
    %1803 = vmatprep.subr.mxu0 0.0
    %1804 = vmatpush1.msra.mxu0 0.0
    %1805 = vmatprep.subr.mxu0 0.0
    %1806 = vmatpush1.msra.mxu0 0.0
    %1807 = vmatprep.subr.mxu0 0.0
    %1808 = vmatpush1.msra.mxu0 0.0
    %1809 = vmatprep.subr.mxu0 0.0
    %1810 = vmatpush1.msra.mxu0 0.0
    %1811 = vmatprep.mubr.f32.mxu0 0.0
    %1812 = vmatmul.mubr.f32.gmra.mrb[0].mxu0 %v1745
    %v1813 = vpop.f32.mrb[0].mxu0
    %v1814 = vadd.f32 0.0, %v1813
    %v1815 = vpop.f32.mrb[0].mxu0
    %v1816 = vadd.f32 0.0, %v1815
    %1817 = vdwg.mxu0
    %v1818 = vld [vmem:[%s661] ss:$8 sm:$0x3]
    %v1819 = vld [vmem:[%s663] ss:$8 sm:$0x3]
    %v1821 = vlaneseq
    %v1822 = vshrl.u32 %v1821, 7
    %v1823 = vsub.s32 0, %v1822
    %v1824 = vrot.slane %v1818, %v1823
    %v1825 = vlaneseq
    %v1826 = vshrl.u32 %v1825, 7
    %v1827 = vsub.s32 1, %v1826
    %v1828 = vrot.slane %v1818, %v1827
    %v1832 = vlaneseq
    %v1833 = vshrl.u32 %v1832, 7
    %v1834 = vsub.s32 0, %v1833
    %v1835 = vrot.slane %v1819, %v1834
    %v1836 = vlaneseq
    %v1837 = vshrl.u32 %v1836, 7
    %v1838 = vsub.s32 1, %v1837
    %v1839 = vrot.slane %v1819, %v1838
    %v1842 = vsel %vm338, %v1824, %v1835
    %v1843 = vsel %vm339, %v1828, %v1839
    %v1844 = vadd.f32 %v1842, %v1814
    %v1845 = vadd.f32 %v1843, %v1816
    %v1846 = vxor.u32 %v1844, 2147483648
    %v1847 = vxor.u32 %v1845, 2147483648
    %v1848 = vmul.f32 %v1846, 1.442695
    %v1849 = vpow.pop %v1848
    %v1850 = vmul.f32 %v1847, 1.442695
    %v1851 = vpow.pop %v1850
    %v1852 = vadd.f32 %v1849, 1.0
    %v1853 = vadd.f32 %v1851, 1.0
    %v1854 = vrcp.pop %v1852
    %v1855 = vmul.f32 1.0, %v1854
    %v1856 = vrcp.pop %v1853
    %v1857 = vmul.f32 1.0, %v1856
    %v1858 = vtanh.pop %v1845
    %v1859 = vmul.f32 %v1855, %v1736
    %v1860 = vmul.f32 %v1855, %v1858
    %1862 = vrot.lane.b32.xlu0 %v1860, 64
    %v1863 = vpop.permute.xlu0 %1862
    %v1865 = vadd.f32 %v1859, %v1863
    %v1866 = vtanh.pop %v1865
    %v1867 = vmul.f32 %v1857, %v1866
    %1869 = vrot.lane.b32.xlu0 %v1867, 64
    %v1870 = vpop.permute.xlu0 %1869
    %1872 = vst.msk [vmem:[#allocation4 + $0x1] sm:$0x1] %vm584, %v1870
    %1873 = vst.msk [vmem:[#allocation4 + $0x6] sm:$0x1] %vm586, %v1870
    %v1874 = vsel %vm454, %v1870, 0
    %1876 = vmatprep.subr.mxu0 %v1603
    %1877 = vmatpush1.msra.mxu0 %v1602
    %1878 = vmatprep.subr.mxu0 %v1605
    %1879 = vmatpush1.msra.mxu0 %v1604
    %1880 = vmatprep.subr.mxu0 %v1607
    %1881 = vmatpush1.msra.mxu0 %v1606
    %1882 = vmatprep.subr.mxu0 %v1609
    %1883 = vmatpush1.msra.mxu0 %v1608
    %1884 = vmatprep.subr.mxu0 %v1611
    %1885 = vmatpush1.msra.mxu0 %v1610
    %1886 = vmatprep.subr.mxu0 %v1613
    %1887 = vmatpush1.msra.mxu0 %v1612
    %1888 = vmatprep.subr.mxu0 %v1615
    %1889 = vmatpush1.msra.mxu0 %v1614
    %1890 = vmatprep.subr.mxu0 %v1617
    %1891 = vmatpush1.msra.mxu0 %v1616
    %1892 = vmatprep.subr.mxu0 0.0
    %1893 = vmatpush1.msra.mxu0 0.0
    %1894 = vmatprep.subr.mxu0 0.0
    %1895 = vmatpush1.msra.mxu0 0.0
    %1896 = vmatprep.subr.mxu0 0.0
    %1897 = vmatpush1.msra.mxu0 0.0
    %1898 = vmatprep.subr.mxu0 0.0
    %1899 = vmatpush1.msra.mxu0 0.0
    %1900 = vmatprep.subr.mxu0 0.0
    %1901 = vmatpush1.msra.mxu0 0.0
    %1902 = vmatprep.subr.mxu0 0.0
    %1903 = vmatpush1.msra.mxu0 0.0
    %1904 = vmatprep.subr.mxu0 0.0
    %1905 = vmatpush1.msra.mxu0 0.0
    %1906 = vmatprep.subr.mxu0 0.0
    %1907 = vmatpush1.msra.mxu0 0.0
    %1908 = vmatprep.subr.mxu0 0.0
    %1909 = vmatpush1.msra.mxu0 0.0
    %1910 = vmatprep.subr.mxu0 0.0
    %1911 = vmatpush1.msra.mxu0 0.0
    %1912 = vmatprep.subr.mxu0 0.0
    %1913 = vmatpush1.msra.mxu0 0.0
    %1914 = vmatprep.subr.mxu0 0.0
    %1915 = vmatpush1.msra.mxu0 0.0
    %1916 = vmatprep.subr.mxu0 0.0
    %1917 = vmatpush1.msra.mxu0 0.0
    %1918 = vmatprep.subr.mxu0 0.0
    %1919 = vmatpush1.msra.mxu0 0.0
    %1920 = vmatprep.subr.mxu0 0.0
    %1921 = vmatpush1.msra.mxu0 0.0
    %1922 = vmatprep.subr.mxu0 0.0
    %1923 = vmatpush1.msra.mxu0 0.0
    %1924 = vmatprep.subr.mxu0 0.0
    %1925 = vmatpush1.msra.mxu0 0.0
    %1926 = vmatprep.subr.mxu0 0.0
    %1927 = vmatpush1.msra.mxu0 0.0
    %1928 = vmatprep.subr.mxu0 0.0
    %1929 = vmatpush1.msra.mxu0 0.0
    %1930 = vmatprep.subr.mxu0 0.0
    %1931 = vmatpush1.msra.mxu0 0.0
    %1932 = vmatprep.subr.mxu0 0.0
    %1933 = vmatpush1.msra.mxu0 0.0
    %1934 = vmatprep.subr.mxu0 0.0
    %1935 = vmatpush1.msra.mxu0 0.0
    %1936 = vmatprep.subr.mxu0 0.0
    %1937 = vmatpush1.msra.mxu0 0.0
    %1938 = vmatprep.subr.mxu0 0.0
    %1939 = vmatpush1.msra.mxu0 0.0
    %1940 = vmatprep.mubr.f32.mxu0 0.0
    %1941 = vmatmul.mubr.f32.gmra.mrb[0].mxu0 %v1874
    %v1942 = vpop.f32.mrb[0].mxu0
    %v1943 = vadd.f32 0.0, %v1942
    %v1944 = vpop.f32.mrb[0].mxu0
    %v1945 = vadd.f32 0.0, %v1944
    %1946 = vdwg.mxu0
    %v1947 = vld [vmem:[%s792] ss:$8 sm:$0x3]
    %v1948 = vld [vmem:[%s794] ss:$8 sm:$0x3]
    %v1950 = vlaneseq
    %v1951 = vshrl.u32 %v1950, 7
    %v1952 = vsub.s32 0, %v1951
    %v1953 = vrot.slane %v1947, %v1952
    %v1954 = vlaneseq
    %v1955 = vshrl.u32 %v1954, 7
    %v1956 = vsub.s32 1, %v1955
    %v1957 = vrot.slane %v1947, %v1956
    %v1961 = vlaneseq
    %v1962 = vshrl.u32 %v1961, 7
    %v1963 = vsub.s32 0, %v1962
    %v1964 = vrot.slane %v1948, %v1963
    %v1965 = vlaneseq
    %v1966 = vshrl.u32 %v1965, 7
    %v1967 = vsub.s32 1, %v1966
    %v1968 = vrot.slane %v1948, %v1967
    %v1971 = vsel %vm338, %v1953, %v1964
    %v1972 = vsel %vm339, %v1957, %v1968
    %v1973 = vadd.f32 %v1971, %v1943
    %v1974 = vadd.f32 %v1972, %v1945
    %v1975 = vxor.u32 %v1973, 2147483648
    %v1976 = vxor.u32 %v1974, 2147483648
    %v1977 = vmul.f32 %v1975, 1.442695
    %v1978 = vpow.pop %v1977
    %v1979 = vmul.f32 %v1976, 1.442695
    %v1980 = vpow.pop %v1979
    %v1981 = vadd.f32 %v1978, 1.0
    %v1982 = vadd.f32 %v1980, 1.0
    %v1983 = vrcp.pop %v1981
    %v1984 = vmul.f32 1.0, %v1983
    %v1985 = vrcp.pop %v1982
    %v1986 = vmul.f32 1.0, %v1985
    %v1987 = vtanh.pop %v1974
    %v1988 = vmul.f32 %v1984, %v1865
    %v1989 = vmul.f32 %v1984, %v1987
    %1991 = vrot.lane.b32.xlu0 %v1989, 64
    %v1992 = vpop.permute.xlu0 %1991
    %v1994 = vadd.f32 %v1988, %v1992
    %v1995 = vtanh.pop %v1994
    %v1996 = vmul.f32 %v1986, %v1995
    %1998 = vrot.lane.b32.xlu0 %v1996, 64
    %v1999 = vpop.permute.xlu0 %1998
    %2001 = vst.msk [vmem:[#allocation4 + $0x2] sm:$0x1] %vm584, %v1999
    %2002 = vst.msk [vmem:[#allocation4 + $0x5] sm:$0x1] %vm586, %v1999
    %v2003 = vsel %vm454, %v1999, 0
    %2005 = vmatprep.subr.mxu0 %v1603
    %2006 = vmatpush1.msra.mxu0 %v1602
    %2007 = vmatprep.subr.mxu0 %v1605
    %2008 = vmatpush1.msra.mxu0 %v1604
    %2009 = vmatprep.subr.mxu0 %v1607
    %2010 = vmatpush1.msra.mxu0 %v1606
    %2011 = vmatprep.subr.mxu0 %v1609
    %2012 = vmatpush1.msra.mxu0 %v1608
    %2013 = vmatprep.subr.mxu0 %v1611
    %2014 = vmatpush1.msra.mxu0 %v1610
    %2015 = vmatprep.subr.mxu0 %v1613
    %2016 = vmatpush1.msra.mxu0 %v1612
    %2017 = vmatprep.subr.mxu0 %v1615
    %2018 = vmatpush1.msra.mxu0 %v1614
    %2019 = vmatprep.subr.mxu0 %v1617
    %2020 = vmatpush1.msra.mxu0 %v1616
    %2021 = vmatprep.subr.mxu0 0.0
    %2022 = vmatpush1.msra.mxu0 0.0
    %2023 = vmatprep.subr.mxu0 0.0
    %2024 = vmatpush1.msra.mxu0 0.0
    %2025 = vmatprep.subr.mxu0 0.0
    %2026 = vmatpush1.msra.mxu0 0.0
    %2027 = vmatprep.subr.mxu0 0.0
    %2028 = vmatpush1.msra.mxu0 0.0
    %2029 = vmatprep.subr.mxu0 0.0
    %2030 = vmatpush1.msra.mxu0 0.0
    %2031 = vmatprep.subr.mxu0 0.0
    %2032 = vmatpush1.msra.mxu0 0.0
    %2033 = vmatprep.subr.mxu0 0.0
    %2034 = vmatpush1.msra.mxu0 0.0
    %2035 = vmatprep.subr.mxu0 0.0
    %2036 = vmatpush1.msra.mxu0 0.0
    %2037 = vmatprep.subr.mxu0 0.0
    %2038 = vmatpush1.msra.mxu0 0.0
    %2039 = vmatprep.subr.mxu0 0.0
    %2040 = vmatpush1.msra.mxu0 0.0
    %2041 = vmatprep.subr.mxu0 0.0
    %2042 = vmatpush1.msra.mxu0 0.0
    %2043 = vmatprep.subr.mxu0 0.0
    %2044 = vmatpush1.msra.mxu0 0.0
    %2045 = vmatprep.subr.mxu0 0.0
    %2046 = vmatpush1.msra.mxu0 0.0
    %2047 = vmatprep.subr.mxu0 0.0
    %2048 = vmatpush1.msra.mxu0 0.0
    %2049 = vmatprep.subr.mxu0 0.0
    %2050 = vmatpush1.msra.mxu0 0.0
    %2051 = vmatprep.subr.mxu0 0.0
    %2052 = vmatpush1.msra.mxu0 0.0
    %2053 = vmatprep.subr.mxu0 0.0
    %2054 = vmatpush1.msra.mxu0 0.0
    %2055 = vmatprep.subr.mxu0 0.0
    %2056 = vmatpush1.msra.mxu0 0.0
    %2057 = vmatprep.subr.mxu0 0.0
    %2058 = vmatpush1.msra.mxu0 0.0
    %2059 = vmatprep.subr.mxu0 0.0
    %2060 = vmatpush1.msra.mxu0 0.0
    %2061 = vmatprep.subr.mxu0 0.0
    %2062 = vmatpush1.msra.mxu0 0.0
    %2063 = vmatprep.subr.mxu0 0.0
    %2064 = vmatpush1.msra.mxu0 0.0
    %2065 = vmatprep.subr.mxu0 0.0
    %2066 = vmatpush1.msra.mxu0 0.0
    %2067 = vmatprep.subr.mxu0 0.0
    %2068 = vmatpush1.msra.mxu0 0.0
    %2069 = vmatprep.mubr.f32.mxu0 0.0
    %2070 = vmatmul.mubr.f32.gmra.mrb[0].mxu0 %v2003
    %v2071 = vpop.f32.mrb[0].mxu0
    %v2072 = vadd.f32 0.0, %v2071
    %v2073 = vpop.f32.mrb[0].mxu0
    %v2074 = vadd.f32 0.0, %v2073
    %2075 = vdwg.mxu0
    %v2076 = vld [vmem:[%s923] ss:$8 sm:$0x3]
    %v2077 = vld [vmem:[%s925] ss:$8 sm:$0x3]
    %v2079 = vlaneseq
    %v2080 = vshrl.u32 %v2079, 7
    %v2081 = vsub.s32 0, %v2080
    %v2082 = vrot.slane %v2076, %v2081
    %v2083 = vlaneseq
    %v2084 = vshrl.u32 %v2083, 7
    %v2085 = vsub.s32 1, %v2084
    %v2086 = vrot.slane %v2076, %v2085
    %v2090 = vlaneseq
    %v2091 = vshrl.u32 %v2090, 7
    %v2092 = vsub.s32 0, %v2091
    %v2093 = vrot.slane %v2077, %v2092
    %v2094 = vlaneseq
    %v2095 = vshrl.u32 %v2094, 7
    %v2096 = vsub.s32 1, %v2095
    %v2097 = vrot.slane %v2077, %v2096
    %v2100 = vsel %vm338, %v2082, %v2093
    %v2101 = vsel %vm339, %v2086, %v2097
    %v2102 = vadd.f32 %v2100, %v2072
    %v2103 = vadd.f32 %v2101, %v2074
    %v2104 = vxor.u32 %v2102, 2147483648
    %v2105 = vxor.u32 %v2103, 2147483648
    %v2106 = vmul.f32 %v2104, 1.442695
    %v2107 = vpow.pop %v2106
    %v2108 = vmul.f32 %v2105, 1.442695
    %v2109 = vpow.pop %v2108
    %v2110 = vadd.f32 %v2107, 1.0
    %v2111 = vadd.f32 %v2109, 1.0
    %v2112 = vrcp.pop %v2110
    %v2113 = vmul.f32 1.0, %v2112
    %v2114 = vrcp.pop %v2111
    %v2115 = vmul.f32 1.0, %v2114
    %v2116 = vtanh.pop %v2103
    %v2117 = vmul.f32 %v2113, %v1994
    %v2118 = vmul.f32 %v2113, %v2116
    %2120 = vrot.lane.b32.xlu0 %v2118, 64
    %v2121 = vpop.permute.xlu0 %2120
    %v2123 = vadd.f32 %v2117, %v2121
    %v2124 = vtanh.pop %v2123
    %v2125 = vmul.f32 %v2115, %v2124
    %2127 = vrot.lane.b32.xlu0 %v2125, 64
    %v2128 = vpop.permute.xlu0 %2127
    %2130 = vst.msk [vmem:[#allocation4 + $0x3] sm:$0x1] %vm584, %v2128
    %2131 = vst.msk [vmem:[#allocation4 + $0x4] sm:$0x1] %vm586, %v2128
    %v2132 = vsel %vm454, %v2128, 0
    %2134 = vmatprep.subr.mxu0 %v1603
    %2135 = vmatpush1.msra.mxu0 %v1602
    %2136 = vmatprep.subr.mxu0 %v1605
    %2137 = vmatpush1.msra.mxu0 %v1604
    %2138 = vmatprep.subr.mxu0 %v1607
    %2139 = vmatpush1.msra.mxu0 %v1606
    %2140 = vmatprep.subr.mxu0 %v1609
    %2141 = vmatpush1.msra.mxu0 %v1608
    %2142 = vmatprep.subr.mxu0 %v1611
    %2143 = vmatpush1.msra.mxu0 %v1610
    %2144 = vmatprep.subr.mxu0 %v1613
    %2145 = vmatpush1.msra.mxu0 %v1612
    %2146 = vmatprep.subr.mxu0 %v1615
    %2147 = vmatpush1.msra.mxu0 %v1614
    %2148 = vmatprep.subr.mxu0 %v1617
    %2149 = vmatpush1.msra.mxu0 %v1616
    %2150 = vmatprep.subr.mxu0 0.0
    %2151 = vmatpush1.msra.mxu0 0.0
    %2152 = vmatprep.subr.mxu0 0.0
    %2153 = vmatpush1.msra.mxu0 0.0
    %2154 = vmatprep.subr.mxu0 0.0
    %2155 = vmatpush1.msra.mxu0 0.0
    %2156 = vmatprep.subr.mxu0 0.0
    %2157 = vmatpush1.msra.mxu0 0.0
    %2158 = vmatprep.subr.mxu0 0.0
    %2159 = vmatpush1.msra.mxu0 0.0
    %2160 = vmatprep.subr.mxu0 0.0
    %2161 = vmatpush1.msra.mxu0 0.0
    %2162 = vmatprep.subr.mxu0 0.0
    %2163 = vmatpush1.msra.mxu0 0.0
    %2164 = vmatprep.subr.mxu0 0.0
    %2165 = vmatpush1.msra.mxu0 0.0
    %2166 = vmatprep.subr.mxu0 0.0
    %2167 = vmatpush1.msra.mxu0 0.0
    %2168 = vmatprep.subr.mxu0 0.0
    %2169 = vmatpush1.msra.mxu0 0.0
    %2170 = vmatprep.subr.mxu0 0.0
    %2171 = vmatpush1.msra.mxu0 0.0
    %2172 = vmatprep.subr.mxu0 0.0
    %2173 = vmatpush1.msra.mxu0 0.0
    %2174 = vmatprep.subr.mxu0 0.0
    %2175 = vmatpush1.msra.mxu0 0.0
    %2176 = vmatprep.subr.mxu0 0.0
    %2177 = vmatpush1.msra.mxu0 0.0
    %2178 = vmatprep.subr.mxu0 0.0
    %2179 = vmatpush1.msra.mxu0 0.0
    %2180 = vmatprep.subr.mxu0 0.0
    %2181 = vmatpush1.msra.mxu0 0.0
    %2182 = vmatprep.subr.mxu0 0.0
    %2183 = vmatpush1.msra.mxu0 0.0
    %2184 = vmatprep.subr.mxu0 0.0
    %2185 = vmatpush1.msra.mxu0 0.0
    %2186 = vmatprep.subr.mxu0 0.0
    %2187 = vmatpush1.msra.mxu0 0.0
    %2188 = vmatprep.subr.mxu0 0.0
    %2189 = vmatpush1.msra.mxu0 0.0
    %2190 = vmatprep.subr.mxu0 0.0
    %2191 = vmatpush1.msra.mxu0 0.0
    %2192 = vmatprep.subr.mxu0 0.0
    %2193 = vmatpush1.msra.mxu0 0.0
    %2194 = vmatprep.subr.mxu0 0.0
    %2195 = vmatpush1.msra.mxu0 0.0
    %2196 = vmatprep.subr.mxu0 0.0
    %2197 = vmatpush1.msra.mxu0 0.0
    %2198 = vmatprep.mubr.f32.mxu0 0.0
    %2199 = vmatmul.mubr.f32.gmra.mrb[0].mxu0 %v2132
    %v2200 = vpop.f32.mrb[0].mxu0
    %v2201 = vadd.f32 0.0, %v2200
    %v2202 = vpop.f32.mrb[0].mxu0
    %v2203 = vadd.f32 0.0, %v2202
    %2204 = vdwg.mxu0
    %v2205 = vld [vmem:[%s925] ss:$8 sm:$0x3]
    %v2206 = vld [vmem:[%s923] ss:$8 sm:$0x3]
    %v2208 = vlaneseq
    %v2209 = vshrl.u32 %v2208, 7
    %v2210 = vsub.s32 0, %v2209
    %v2211 = vrot.slane %v2205, %v2210
    %v2212 = vlaneseq
    %v2213 = vshrl.u32 %v2212, 7
    %v2214 = vsub.s32 1, %v2213
    %v2215 = vrot.slane %v2205, %v2214
    %v2219 = vlaneseq
    %v2220 = vshrl.u32 %v2219, 7
    %v2221 = vsub.s32 0, %v2220
    %v2222 = vrot.slane %v2206, %v2221
    %v2223 = vlaneseq
    %v2224 = vshrl.u32 %v2223, 7
    %v2225 = vsub.s32 1, %v2224
    %v2226 = vrot.slane %v2206, %v2225
    %v2229 = vsel %vm338, %v2211, %v2222
    %v2230 = vsel %vm339, %v2215, %v2226
    %v2231 = vadd.f32 %v2229, %v2201
    %v2232 = vadd.f32 %v2230, %v2203
    %v2233 = vxor.u32 %v2231, 2147483648
    %v2234 = vxor.u32 %v2232, 2147483648
    %v2235 = vmul.f32 %v2233, 1.442695
    %v2236 = vpow.pop %v2235
    %v2237 = vmul.f32 %v2234, 1.442695
    %v2238 = vpow.pop %v2237
    %v2239 = vadd.f32 %v2236, 1.0
    %v2240 = vadd.f32 %v2238, 1.0
    %v2241 = vrcp.pop %v2239
    %v2242 = vmul.f32 1.0, %v2241
    %v2243 = vrcp.pop %v2240
    %v2244 = vmul.f32 1.0, %v2243
    %v2245 = vtanh.pop %v2232
    %v2246 = vmul.f32 %v2242, %v2123
    %v2247 = vmul.f32 %v2242, %v2245
    %2249 = vrot.lane.b32.xlu0 %v2247, 64
    %v2250 = vpop.permute.xlu0 %2249
    %v2252 = vadd.f32 %v2246, %v2250
    %v2253 = vtanh.pop %v2252
    %v2254 = vmul.f32 %v2244, %v2253
    %2256 = vrot.lane.b32.xlu0 %v2254, 64
    %v2257 = vpop.permute.xlu0 %2256
    %2259 = vst.msk [vmem:[#allocation4 + $0x4] sm:$0x1] %vm584, %v2257
    %2260 = vst.msk [vmem:[#allocation4 + $0x3] sm:$0x1] %vm586, %v2257
    %v2261 = vsel %vm454, %v2257, 0
    %2263 = vmatprep.subr.mxu0 %v1603
    %2264 = vmatpush1.msra.mxu0 %v1602
    %2265 = vmatprep.subr.mxu0 %v1605
    %2266 = vmatpush1.msra.mxu0 %v1604
    %2267 = vmatprep.subr.mxu0 %v1607
    %2268 = vmatpush1.msra.mxu0 %v1606
    %2269 = vmatprep.subr.mxu0 %v1609
    %2270 = vmatpush1.msra.mxu0 %v1608
    %2271 = vmatprep.subr.mxu0 %v1611
    %2272 = vmatpush1.msra.mxu0 %v1610
    %2273 = vmatprep.subr.mxu0 %v1613
    %2274 = vmatpush1.msra.mxu0 %v1612
    %2275 = vmatprep.subr.mxu0 %v1615
    %2276 = vmatpush1.msra.mxu0 %v1614
    %2277 = vmatprep.subr.mxu0 %v1617
    %2278 = vmatpush1.msra.mxu0 %v1616
    %2279 = vmatprep.subr.mxu0 0.0
    %2280 = vmatpush1.msra.mxu0 0.0
    %2281 = vmatprep.subr.mxu0 0.0
    %2282 = vmatpush1.msra.mxu0 0.0
    %2283 = vmatprep.subr.mxu0 0.0
    %2284 = vmatpush1.msra.mxu0 0.0
    %2285 = vmatprep.subr.mxu0 0.0
    %2286 = vmatpush1.msra.mxu0 0.0
    %2287 = vmatprep.subr.mxu0 0.0
    %2288 = vmatpush1.msra.mxu0 0.0
    %2289 = vmatprep.subr.mxu0 0.0
    %2290 = vmatpush1.msra.mxu0 0.0
    %2291 = vmatprep.subr.mxu0 0.0
    %2292 = vmatpush1.msra.mxu0 0.0
    %2293 = vmatprep.subr.mxu0 0.0
    %2294 = vmatpush1.msra.mxu0 0.0
    %2295 = vmatprep.subr.mxu0 0.0
    %2296 = vmatpush1.msra.mxu0 0.0
    %2297 = vmatprep.subr.mxu0 0.0
    %2298 = vmatpush1.msra.mxu0 0.0
    %2299 = vmatprep.subr.mxu0 0.0
    %2300 = vmatpush1.msra.mxu0 0.0
    %2301 = vmatprep.subr.mxu0 0.0
    %2302 = vmatpush1.msra.mxu0 0.0
    %2303 = vmatprep.subr.mxu0 0.0
    %2304 = vmatpush1.msra.mxu0 0.0
    %2305 = vmatprep.subr.mxu0 0.0
    %2306 = vmatpush1.msra.mxu0 0.0
    %2307 = vmatprep.subr.mxu0 0.0
    %2308 = vmatpush1.msra.mxu0 0.0
    %2309 = vmatprep.subr.mxu0 0.0
    %2310 = vmatpush1.msra.mxu0 0.0
    %2311 = vmatprep.subr.mxu0 0.0
    %2312 = vmatpush1.msra.mxu0 0.0
    %2313 = vmatprep.subr.mxu0 0.0
    %2314 = vmatpush1.msra.mxu0 0.0
    %2315 = vmatprep.subr.mxu0 0.0
    %2316 = vmatpush1.msra.mxu0 0.0
    %2317 = vmatprep.subr.mxu0 0.0
    %2318 = vmatpush1.msra.mxu0 0.0
    %2319 = vmatprep.subr.mxu0 0.0
    %2320 = vmatpush1.msra.mxu0 0.0
    %2321 = vmatprep.subr.mxu0 0.0
    %2322 = vmatpush1.msra.mxu0 0.0
    %2323 = vmatprep.subr.mxu0 0.0
    %2324 = vmatpush1.msra.mxu0 0.0
    %2325 = vmatprep.subr.mxu0 0.0
    %2326 = vmatpush1.msra.mxu0 0.0
    %2327 = vmatprep.mubr.f32.mxu0 0.0
    %2328 = vmatmul.mubr.f32.gmra.mrb[0].mxu0 %v2261
    %v2329 = vpop.f32.mrb[0].mxu0
    %v2330 = vadd.f32 0.0, %v2329
    %v2331 = vpop.f32.mrb[0].mxu0
    %v2332 = vadd.f32 0.0, %v2331
    %2333 = vdwg.mxu0
    %v2334 = vld [vmem:[%s794] ss:$8 sm:$0x3]
    %v2335 = vld [vmem:[%s792] ss:$8 sm:$0x3]
    %v2337 = vlaneseq
    %v2338 = vshrl.u32 %v2337, 7
    %v2339 = vsub.s32 0, %v2338
    %v2340 = vrot.slane %v2334, %v2339
    %v2341 = vlaneseq
    %v2342 = vshrl.u32 %v2341, 7
    %v2343 = vsub.s32 1, %v2342
    %v2344 = vrot.slane %v2334, %v2343
    %v2348 = vlaneseq
    %v2349 = vshrl.u32 %v2348, 7
    %v2350 = vsub.s32 0, %v2349
    %v2351 = vrot.slane %v2335, %v2350
    %v2352 = vlaneseq
    %v2353 = vshrl.u32 %v2352, 7
    %v2354 = vsub.s32 1, %v2353
    %v2355 = vrot.slane %v2335, %v2354
    %v2358 = vsel %vm338, %v2340, %v2351
    %v2359 = vsel %vm339, %v2344, %v2355
    %v2360 = vadd.f32 %v2358, %v2330
    %v2361 = vadd.f32 %v2359, %v2332
    %v2362 = vxor.u32 %v2360, 2147483648
    %v2363 = vxor.u32 %v2361, 2147483648
    %v2364 = vmul.f32 %v2362, 1.442695
    %v2365 = vpow.pop %v2364
    %v2366 = vmul.f32 %v2363, 1.442695
    %v2367 = vpow.pop %v2366
    %v2368 = vadd.f32 %v2365, 1.0
    %v2369 = vadd.f32 %v2367, 1.0
    %v2370 = vrcp.pop %v2368
    %v2371 = vmul.f32 1.0, %v2370
    %v2372 = vrcp.pop %v2369
    %v2373 = vmul.f32 1.0, %v2372
    %v2374 = vtanh.pop %v2361
    %v2375 = vmul.f32 %v2371, %v2252
    %v2376 = vmul.f32 %v2371, %v2374
    %2378 = vrot.lane.b32.xlu0 %v2376, 64
    %v2379 = vpop.permute.xlu0 %2378
    %v2381 = vadd.f32 %v2375, %v2379
    %v2382 = vtanh.pop %v2381
    %v2383 = vmul.f32 %v2373, %v2382
    %2385 = vrot.lane.b32.xlu0 %v2383, 64
    %v2386 = vpop.permute.xlu0 %2385
    %2388 = vst.msk [vmem:[#allocation4 + $0x5] sm:$0x1] %vm584, %v2386
    %2389 = vst.msk [vmem:[#allocation4 + $0x2] sm:$0x1] %vm586, %v2386
    %v2390 = vsel %vm454, %v2386, 0
    %2392 = vmatprep.subr.mxu0 %v1603
    %2393 = vmatpush1.msra.mxu0 %v1602
    %2394 = vmatprep.subr.mxu0 %v1605
    %2395 = vmatpush1.msra.mxu0 %v1604
    %2396 = vmatprep.subr.mxu0 %v1607
    %2397 = vmatpush1.msra.mxu0 %v1606
    %2398 = vmatprep.subr.mxu0 %v1609
    %2399 = vmatpush1.msra.mxu0 %v1608
    %2400 = vmatprep.subr.mxu0 %v1611
    %2401 = vmatpush1.msra.mxu0 %v1610
    %2402 = vmatprep.subr.mxu0 %v1613
    %2403 = vmatpush1.msra.mxu0 %v1612
    %2404 = vmatprep.subr.mxu0 %v1615
    %2405 = vmatpush1.msra.mxu0 %v1614
    %2406 = vmatprep.subr.mxu0 %v1617
    %2407 = vmatpush1.msra.mxu0 %v1616
    %2408 = vmatprep.subr.mxu0 0.0
    %2409 = vmatpush1.msra.mxu0 0.0
    %2410 = vmatprep.subr.mxu0 0.0
    %2411 = vmatpush1.msra.mxu0 0.0
    %2412 = vmatprep.subr.mxu0 0.0
    %2413 = vmatpush1.msra.mxu0 0.0
    %2414 = vmatprep.subr.mxu0 0.0
    %2415 = vmatpush1.msra.mxu0 0.0
    %2416 = vmatprep.subr.mxu0 0.0
    %2417 = vmatpush1.msra.mxu0 0.0
    %2418 = vmatprep.subr.mxu0 0.0
    %2419 = vmatpush1.msra.mxu0 0.0
    %2420 = vmatprep.subr.mxu0 0.0
    %2421 = vmatpush1.msra.mxu0 0.0
    %2422 = vmatprep.subr.mxu0 0.0
    %2423 = vmatpush1.msra.mxu0 0.0
    %2424 = vmatprep.subr.mxu0 0.0
    %2425 = vmatpush1.msra.mxu0 0.0
    %2426 = vmatprep.subr.mxu0 0.0
    %2427 = vmatpush1.msra.mxu0 0.0
    %2428 = vmatprep.subr.mxu0 0.0
    %2429 = vmatpush1.msra.mxu0 0.0
    %2430 = vmatprep.subr.mxu0 0.0
    %2431 = vmatpush1.msra.mxu0 0.0
    %2432 = vmatprep.subr.mxu0 0.0
    %2433 = vmatpush1.msra.mxu0 0.0
    %2434 = vmatprep.subr.mxu0 0.0
    %2435 = vmatpush1.msra.mxu0 0.0
    %2436 = vmatprep.subr.mxu0 0.0
    %2437 = vmatpush1.msra.mxu0 0.0
    %2438 = vmatprep.subr.mxu0 0.0
    %2439 = vmatpush1.msra.mxu0 0.0
    %2440 = vmatprep.subr.mxu0 0.0
    %2441 = vmatpush1.msra.mxu0 0.0
    %2442 = vmatprep.subr.mxu0 0.0
    %2443 = vmatpush1.msra.mxu0 0.0
    %2444 = vmatprep.subr.mxu0 0.0
    %2445 = vmatpush1.msra.mxu0 0.0
    %2446 = vmatprep.subr.mxu0 0.0
    %2447 = vmatpush1.msra.mxu0 0.0
    %2448 = vmatprep.subr.mxu0 0.0
    %2449 = vmatpush1.msra.mxu0 0.0
    %2450 = vmatprep.subr.mxu0 0.0
    %2451 = vmatpush1.msra.mxu0 0.0
    %2452 = vmatprep.subr.mxu0 0.0
    %2453 = vmatpush1.msra.mxu0 0.0
    %2454 = vmatprep.subr.mxu0 0.0
    %2455 = vmatpush1.msra.mxu0 0.0
    %2456 = vmatprep.mubr.f32.mxu0 0.0
    %2457 = vmatmul.mubr.f32.gmra.mrb[0].mxu0 %v2390
    %v2458 = vpop.f32.mrb[0].mxu0
    %v2459 = vadd.f32 0.0, %v2458
    %v2460 = vpop.f32.mrb[0].mxu0
    %v2461 = vadd.f32 0.0, %v2460
    %2462 = vdwg.mxu0
    %v2463 = vld [vmem:[%s663] ss:$8 sm:$0x3]
    %v2464 = vld [vmem:[%s661] ss:$8 sm:$0x3]
    %v2466 = vlaneseq
    %v2467 = vshrl.u32 %v2466, 7
    %v2468 = vsub.s32 0, %v2467
    %v2469 = vrot.slane %v2463, %v2468
    %v2470 = vlaneseq
    %v2471 = vshrl.u32 %v2470, 7
    %v2472 = vsub.s32 1, %v2471
    %v2473 = vrot.slane %v2463, %v2472
    %v2477 = vlaneseq
    %v2478 = vshrl.u32 %v2477, 7
    %v2479 = vsub.s32 0, %v2478
    %v2480 = vrot.slane %v2464, %v2479
    %v2481 = vlaneseq
    %v2482 = vshrl.u32 %v2481, 7
    %v2483 = vsub.s32 1, %v2482
    %v2484 = vrot.slane %v2464, %v2483
    %v2487 = vsel %vm338, %v2469, %v2480
    %v2488 = vsel %vm339, %v2473, %v2484
    %v2489 = vadd.f32 %v2487, %v2459
    %v2490 = vadd.f32 %v2488, %v2461
    %v2491 = vxor.u32 %v2489, 2147483648
    %v2492 = vxor.u32 %v2490, 2147483648
    %v2493 = vmul.f32 %v2491, 1.442695
    %v2494 = vpow.pop %v2493
    %v2495 = vmul.f32 %v2492, 1.442695
    %v2496 = vpow.pop %v2495
    %v2497 = vadd.f32 %v2494, 1.0
    %v2498 = vadd.f32 %v2496, 1.0
    %v2499 = vrcp.pop %v2497
    %v2500 = vmul.f32 1.0, %v2499
    %v2501 = vrcp.pop %v2498
    %v2502 = vmul.f32 1.0, %v2501
    %v2503 = vtanh.pop %v2490
    %v2504 = vmul.f32 %v2500, %v2381
    %v2505 = vmul.f32 %v2500, %v2503
    %2507 = vrot.lane.b32.xlu0 %v2505, 64
    %v2508 = vpop.permute.xlu0 %2507
    %v2510 = vadd.f32 %v2504, %v2508
    %v2511 = vtanh.pop %v2510
    %v2512 = vmul.f32 %v2502, %v2511
    %2514 = vrot.lane.b32.xlu0 %v2512, 64
    %v2515 = vpop.permute.xlu0 %2514
    %2517 = vst.msk [vmem:[#allocation4 + $0x6] sm:$0x1] %vm584, %v2515
    %2518 = vst.msk [vmem:[#allocation4 + $0x1] sm:$0x1] %vm586, %v2515
    %v2519 = vsel %vm454, %v2515, 0
    %2521 = vmatprep.subr.mxu0 %v1603
    %2522 = vmatpush1.msra.mxu0 %v1602
    %2523 = vmatprep.subr.mxu0 %v1605
    %2524 = vmatpush1.msra.mxu0 %v1604
    %2525 = vmatprep.subr.mxu0 %v1607
    %2526 = vmatpush1.msra.mxu0 %v1606
    %2527 = vmatprep.subr.mxu0 %v1609
    %2528 = vmatpush1.msra.mxu0 %v1608
    %2529 = vmatprep.subr.mxu0 %v1611
    %2530 = vmatpush1.msra.mxu0 %v1610
    %2531 = vmatprep.subr.mxu0 %v1613
    %2532 = vmatpush1.msra.mxu0 %v1612
    %2533 = vmatprep.subr.mxu0 %v1615
    %2534 = vmatpush1.msra.mxu0 %v1614
    %2535 = vmatprep.subr.mxu0 %v1617
    %2536 = vmatpush1.msra.mxu0 %v1616
    %2537 = vmatprep.subr.mxu0 0.0
    %2538 = vmatpush1.msra.mxu0 0.0
    %2539 = vmatprep.subr.mxu0 0.0
    %2540 = vmatpush1.msra.mxu0 0.0
    %2541 = vmatprep.subr.mxu0 0.0
    %2542 = vmatpush1.msra.mxu0 0.0
    %2543 = vmatprep.subr.mxu0 0.0
    %2544 = vmatpush1.msra.mxu0 0.0
    %2545 = vmatprep.subr.mxu0 0.0
    %2546 = vmatpush1.msra.mxu0 0.0
    %2547 = vmatprep.subr.mxu0 0.0
    %2548 = vmatpush1.msra.mxu0 0.0
    %2549 = vmatprep.subr.mxu0 0.0
    %2550 = vmatpush1.msra.mxu0 0.0
    %2551 = vmatprep.subr.mxu0 0.0
    %2552 = vmatpush1.msra.mxu0 0.0
    %2553 = vmatprep.subr.mxu0 0.0
    %2554 = vmatpush1.msra.mxu0 0.0
    %2555 = vmatprep.subr.mxu0 0.0
    %2556 = vmatpush1.msra.mxu0 0.0
    %2557 = vmatprep.subr.mxu0 0.0
    %2558 = vmatpush1.msra.mxu0 0.0
    %2559 = vmatprep.subr.mxu0 0.0
    %2560 = vmatpush1.msra.mxu0 0.0
    %2561 = vmatprep.subr.mxu0 0.0
    %2562 = vmatpush1.msra.mxu0 0.0
    %2563 = vmatprep.subr.mxu0 0.0
    %2564 = vmatpush1.msra.mxu0 0.0
    %2565 = vmatprep.subr.mxu0 0.0
    %2566 = vmatpush1.msra.mxu0 0.0
    %2567 = vmatprep.subr.mxu0 0.0
    %2568 = vmatpush1.msra.mxu0 0.0
    %2569 = vmatprep.subr.mxu0 0.0
    %2570 = vmatpush1.msra.mxu0 0.0
    %2571 = vmatprep.subr.mxu0 0.0
    %2572 = vmatpush1.msra.mxu0 0.0
    %2573 = vmatprep.subr.mxu0 0.0
    %2574 = vmatpush1.msra.mxu0 0.0
    %2575 = vmatprep.subr.mxu0 0.0
    %2576 = vmatpush1.msra.mxu0 0.0
    %2577 = vmatprep.subr.mxu0 0.0
    %2578 = vmatpush1.msra.mxu0 0.0
    %2579 = vmatprep.subr.mxu0 0.0
    %2580 = vmatpush1.msra.mxu0 0.0
    %2581 = vmatprep.subr.mxu0 0.0
    %2582 = vmatpush1.msra.mxu0 0.0
    %2583 = vmatprep.subr.mxu0 0.0
    %2584 = vmatpush1.msra.mxu0 0.0
    %2585 = vmatprep.mubr.f32.mxu0 0.0
    %2586 = vmatmul.mubr.f32.gmra.mrb[0].mxu0 %v2519
    %v2587 = vpop.f32.mrb[0].mxu0
    %v2588 = vadd.f32 0.0, %v2587
    %v2589 = vpop.f32.mrb[0].mxu0
    %v2590 = vadd.f32 0.0, %v2589
    %2591 = vdwg.mxu0
    %v2592 = vld [vmem:[%s530] ss:$8 sm:$0x3]
    %v2593 = vld [vmem:[#allocation2] ss:$8 sm:$0x3]
    %v2595 = vlaneseq
    %v2596 = vshrl.u32 %v2595, 7
    %v2597 = vsub.s32 0, %v2596
    %v2598 = vrot.slane %v2592, %v2597
    %v2599 = vlaneseq
    %v2600 = vshrl.u32 %v2599, 7
    %v2601 = vsub.s32 1, %v2600
    %v2602 = vrot.slane %v2592, %v2601
    %v2606 = vlaneseq
    %v2607 = vshrl.u32 %v2606, 7
    %v2608 = vsub.s32 0, %v2607
    %v2609 = vrot.slane %v2593, %v2608
    %v2610 = vlaneseq
    %v2611 = vshrl.u32 %v2610, 7
    %v2612 = vsub.s32 1, %v2611
    %v2613 = vrot.slane %v2593, %v2612
    %v2616 = vsel %vm338, %v2598, %v2609
    %v2617 = vsel %vm339, %v2602, %v2613
    %v2618 = vadd.f32 %v2616, %v2588
    %v2619 = vadd.f32 %v2617, %v2590
    %v2620 = vxor.u32 %v2618, 2147483648
    %v2621 = vxor.u32 %v2619, 2147483648
    %v2622 = vmul.f32 %v2620, 1.442695
    %v2623 = vpow.pop %v2622
    %v2624 = vmul.f32 %v2621, 1.442695
    %v2625 = vpow.pop %v2624
    %v2626 = vadd.f32 %v2623, 1.0
    %v2627 = vadd.f32 %v2625, 1.0
    %v2628 = vrcp.pop %v2626
    %v2629 = vmul.f32 1.0, %v2628
    %v2630 = vrcp.pop %v2627
    %v2631 = vmul.f32 1.0, %v2630
    %v2632 = vtanh.pop %v2619
    %v2633 = vmul.f32 %v2629, %v2510
    %v2634 = vmul.f32 %v2629, %v2632
    %2636 = vrot.lane.b32.xlu0 %v2634, 64
    %v2637 = vpop.permute.xlu0 %2636
    %v2639 = vadd.f32 %v2633, %v2637
    %v2640 = vtanh.pop %v2639
    %v2641 = vmul.f32 %v2631, %v2640
    %2643 = vrot.lane.b32.xlu0 %v2641, 64
    %v2644 = vpop.permute.xlu0 %2643
    %2646 = vst.msk [vmem:[#allocation4 + $0x7] sm:$0x1] %vm584, %v2644
    %2647 = vst.msk [vmem:[#allocation4] sm:$0x1] %vm586, %v2644
    %2648 = vst [vmem:[#allocation5] sm:$0xff] 0.0
    %s2649 = sld [smem:[#allocation6]]
    %s2650 = sld [smem:[#allocation10]]
    %s2651 = scalar_lea.vmem [#allocation4], %s2649
    %v2652 = vld [vmem:[%s2651] sm:$0x1]
    %vm2653 = vcmask 516096
    %2654 = vst.msk [vmem:[#allocation5] sm:$0x1] %vm2653, %v2652
    %s2655 = scalar_lea.vmem [#allocation4], %s2650
    %v2656 = vld [vmem:[%s2655] sm:$0x1]
    %2658 = vrot.lane.b32.xlu0 %v2656, 64
    %v2659 = vpop.permute.xlu0 %2658
    %vm2661 = vcmask 1040896
    %2662 = vst.msk [vmem:[#allocation5] sm:$0x1] %vm2661, %v2659
    %s2663 = sld [smem:[#allocation6 + $0x1]]
    %s2664 = sld [smem:[#allocation10 + $0x1]]
    %s2665 = scalar_lea.vmem [#allocation4], %s2663
    %v2666 = vld [vmem:[%s2665] sm:$0x1]
    %2667 = vst.msk [vmem:[#allocation5 + $0x1] sm:$0x1] %vm2653, %v2666
    %s2668 = scalar_lea.vmem [#allocation4], %s2664
    %v2669 = vld [vmem:[%s2668] sm:$0x1]
    %2671 = vrot.lane.b32.xlu0 %v2669, 64
    %v2672 = vpop.permute.xlu0 %2671
    %2674 = vst.msk [vmem:[#allocation5 + $0x1] sm:$0x1] %vm2661, %v2672
    %s2675 = sld [smem:[#allocation6 + $0x2]]
    %s2676 = sld [smem:[#allocation10 + $0x2]]
    %s2677 = scalar_lea.vmem [#allocation4], %s2675
    %v2678 = vld [vmem:[%s2677] sm:$0x1]
    %2679 = vst.msk [vmem:[#allocation5 + $0x2] sm:$0x1] %vm2653, %v2678
    %s2680 = scalar_lea.vmem [#allocation4], %s2676
    %v2681 = vld [vmem:[%s2680] sm:$0x1]
    %2683 = vrot.lane.b32.xlu0 %v2681, 64
    %v2684 = vpop.permute.xlu0 %2683
    %2686 = vst.msk [vmem:[#allocation5 + $0x2] sm:$0x1] %vm2661, %v2684
    %s2687 = sld [smem:[#allocation6 + $0x3]]
    %s2688 = sld [smem:[#allocation10 + $0x3]]
    %s2689 = scalar_lea.vmem [#allocation4], %s2687
    %v2690 = vld [vmem:[%s2689] sm:$0x1]
    %2691 = vst.msk [vmem:[#allocation5 + $0x3] sm:$0x1] %vm2653, %v2690
    %s2692 = scalar_lea.vmem [#allocation4], %s2688
    %v2693 = vld [vmem:[%s2692] sm:$0x1]
    %2695 = vrot.lane.b32.xlu0 %v2693, 64
    %v2696 = vpop.permute.xlu0 %2695
    %2698 = vst.msk [vmem:[#allocation5 + $0x3] sm:$0x1] %vm2661, %v2696
    %v2699 = vld [vmem:[#allocation5] sm:$0xff]
    %v2700 = vld [vmem:[#allocation21] sm:$0xff]
    %v2701 = vld [vmem:[#allocation21 + $0x8] sm:$0xff]
    %v2702 = vld [vmem:[#allocation21 + $0x10] sm:$0xff]
    %v2703 = vld [vmem:[#allocation21 + $0x18] sm:$0xff]
    %v2704 = vld [vmem:[#allocation21 + $0x20] sm:$0xff]
    %v2705 = vld [vmem:[#allocation21 + $0x28] sm:$0xff]
    %v2706 = vld [vmem:[#allocation21 + $0x30] sm:$0xff]
    %v2707 = vld [vmem:[#allocation21 + $0x38] sm:$0xff]
    %v2708 = vld [vmem:[#allocation21 + $0x40] sm:$0xff]
    %v2709 = vld [vmem:[#allocation21 + $0x48] sm:$0xff]
    %v2710 = vld [vmem:[#allocation21 + $0x50] sm:$0xff]
    %v2711 = vld [vmem:[#allocation21 + $0x58] sm:$0xff]
    %v2712 = vld [vmem:[#allocation21 + $0x60] sm:$0xff]
    %v2713 = vld [vmem:[#allocation21 + $0x68] sm:$0xff]
    %v2714 = vld [vmem:[#allocation21 + $0x70] sm:$0xff]
    %v2715 = vld [vmem:[#allocation21 + $0x78] sm:$0xff]
    %v2716 = vld [vmem:[#allocation22] sm:$0x1]
    %v2718 = vlaneseq
    %v2719 = vshrl.u32 %v2718, 7
    %v2720 = vsub.s32 0, %v2719
    %v2721 = vrot.slane %v2716, %v2720
    %2723 = vmatprep.subr.mxu0 0.0
    %2724 = vmatpush1.msra.mxu0 %v2700
    %2725 = vmatprep.subr.mxu0 0.0
    %2726 = vmatpush1.msra.mxu0 %v2701
    %2727 = vmatprep.subr.mxu0 0.0
    %2728 = vmatpush1.msra.mxu0 %v2702
    %2729 = vmatprep.subr.mxu0 0.0
    %2730 = vmatpush1.msra.mxu0 %v2703
    %2731 = vmatprep.subr.mxu0 0.0
    %2732 = vmatpush1.msra.mxu0 %v2704
    %2733 = vmatprep.subr.mxu0 0.0
    %2734 = vmatpush1.msra.mxu0 %v2705
    %2735 = vmatprep.subr.mxu0 0.0
    %2736 = vmatpush1.msra.mxu0 %v2706
    %2737 = vmatprep.subr.mxu0 0.0
    %2738 = vmatpush1.msra.mxu0 %v2707
    %2739 = vmatprep.subr.mxu0 0.0
    %2740 = vmatpush1.msra.mxu0 %v2708
    %2741 = vmatprep.subr.mxu0 0.0
    %2742 = vmatpush1.msra.mxu0 %v2709
    %2743 = vmatprep.subr.mxu0 0.0
    %2744 = vmatpush1.msra.mxu0 %v2710
    %2745 = vmatprep.subr.mxu0 0.0
    %2746 = vmatpush1.msra.mxu0 %v2711
    %2747 = vmatprep.subr.mxu0 0.0
    %2748 = vmatpush1.msra.mxu0 %v2712
    %2749 = vmatprep.subr.mxu0 0.0
    %2750 = vmatpush1.msra.mxu0 %v2713
    %2751 = vmatprep.subr.mxu0 0.0
    %2752 = vmatpush1.msra.mxu0 %v2714
    %2753 = vmatprep.subr.mxu0 0.0
    %2754 = vmatpush1.msra.mxu0 %v2715
    %2755 = vmatprep.subr.mxu0 0.0
    %2756 = vmatpush1.msra.mxu0 0.0
    %2757 = vmatprep.subr.mxu0 0.0
    %2758 = vmatpush1.msra.mxu0 0.0
    %2759 = vmatprep.subr.mxu0 0.0
    %2760 = vmatpush1.msra.mxu0 0.0
    %2761 = vmatprep.subr.mxu0 0.0
    %2762 = vmatpush1.msra.mxu0 0.0
    %2763 = vmatprep.subr.mxu0 0.0
    %2764 = vmatpush1.msra.mxu0 0.0
    %2765 = vmatprep.subr.mxu0 0.0
    %2766 = vmatpush1.msra.mxu0 0.0
    %2767 = vmatprep.subr.mxu0 0.0
    %2768 = vmatpush1.msra.mxu0 0.0
    %2769 = vmatprep.subr.mxu0 0.0
    %2770 = vmatpush1.msra.mxu0 0.0
    %2771 = vmatprep.subr.mxu0 0.0
    %2772 = vmatpush1.msra.mxu0 0.0
    %2773 = vmatprep.subr.mxu0 0.0
    %2774 = vmatpush1.msra.mxu0 0.0
    %2775 = vmatprep.subr.mxu0 0.0
    %2776 = vmatpush1.msra.mxu0 0.0
    %2777 = vmatprep.subr.mxu0 0.0
    %2778 = vmatpush1.msra.mxu0 0.0
    %2779 = vmatprep.subr.mxu0 0.0
    %2780 = vmatpush1.msra.mxu0 0.0
    %2781 = vmatprep.subr.mxu0 0.0
    %2782 = vmatpush1.msra.mxu0 0.0
    %2783 = vmatprep.subr.mxu0 0.0
    %2784 = vmatpush1.msra.mxu0 0.0
    %2785 = vmatprep.subr.mxu0 0.0
    %2786 = vmatpush1.msra.mxu0 0.0
    %2787 = vmatprep.mubr.f32.mxu0 0.0
    %2788 = vmatmul.mubr.f32.gmra.mrb[0].mxu0 %v2699
    %v2789 = vpop.f32.mrb[0].mxu0
    %v2790 = vadd.f32 %v2721, %v2789
    %v2791 = vpop.f32.mrb[0].mxu0
    %2792 = vdwg.mxu0
    %v2793 = vld [vmem:[#allocation24] sm:$0xff]
    %v2794 = vld [vmem:[#allocation24 + $0x8] sm:$0xff]
    %v2795 = vld [vmem:[#allocation24 + $0x10] sm:$0xff]
    %v2796 = vld [vmem:[#allocation24 + $0x18] sm:$0xff]
    %v2797 = vld [vmem:[#allocation24 + $0x20] sm:$0xff]
    %v2798 = vld [vmem:[#allocation24 + $0x28] sm:$0xff]
    %v2799 = vld [vmem:[#allocation24 + $0x30] sm:$0xff]
    %v2800 = vld [vmem:[#allocation24 + $0x38] sm:$0xff]
    %v2801 = vld [vmem:[#allocation24 + $0x40] sm:$0xff]
    %v2802 = vld [vmem:[#allocation24 + $0x48] sm:$0xff]
    %v2803 = vld [vmem:[#allocation24 + $0x50] sm:$0xff]
    %v2804 = vld [vmem:[#allocation24 + $0x58] sm:$0xff]
    %v2805 = vld [vmem:[#allocation24 + $0x60] sm:$0xff]
    %v2806 = vld [vmem:[#allocation24 + $0x68] sm:$0xff]
    %v2807 = vld [vmem:[#allocation24 + $0x70] sm:$0xff]
    %v2808 = vld [vmem:[#allocation24 + $0x78] sm:$0xff]
    %v2809 = vld [vmem:[#allocation25] sm:$0x1]
    %v2811 = vlaneseq
    %v2812 = vshrl.u32 %v2811, 7
    %v2813 = vsub.s32 0, %v2812
    %v2814 = vrot.slane %v2809, %v2813
    %2816 = vmatprep.subr.mxu0 0.0
    %2817 = vmatpush1.msra.mxu0 %v2793
    %2818 = vmatprep.subr.mxu0 0.0
    %2819 = vmatpush1.msra.mxu0 %v2794
    %2820 = vmatprep.subr.mxu0 0.0
    %2821 = vmatpush1.msra.mxu0 %v2795
    %2822 = vmatprep.subr.mxu0 0.0
    %2823 = vmatpush1.msra.mxu0 %v2796
    %2824 = vmatprep.subr.mxu0 0.0
    %2825 = vmatpush1.msra.mxu0 %v2797
    %2826 = vmatprep.subr.mxu0 0.0
    %2827 = vmatpush1.msra.mxu0 %v2798
    %2828 = vmatprep.subr.mxu0 0.0
    %2829 = vmatpush1.msra.mxu0 %v2799
    %2830 = vmatprep.subr.mxu0 0.0
    %2831 = vmatpush1.msra.mxu0 %v2800
    %2832 = vmatprep.subr.mxu0 0.0
    %2833 = vmatpush1.msra.mxu0 %v2801
    %2834 = vmatprep.subr.mxu0 0.0
    %2835 = vmatpush1.msra.mxu0 %v2802
    %2836 = vmatprep.subr.mxu0 0.0
    %2837 = vmatpush1.msra.mxu0 %v2803
    %2838 = vmatprep.subr.mxu0 0.0
    %2839 = vmatpush1.msra.mxu0 %v2804
    %2840 = vmatprep.subr.mxu0 0.0
    %2841 = vmatpush1.msra.mxu0 %v2805
    %2842 = vmatprep.subr.mxu0 0.0
    %2843 = vmatpush1.msra.mxu0 %v2806
    %2844 = vmatprep.subr.mxu0 0.0
    %2845 = vmatpush1.msra.mxu0 %v2807
    %2846 = vmatprep.subr.mxu0 0.0
    %2847 = vmatpush1.msra.mxu0 %v2808
    %2848 = vmatprep.subr.mxu0 0.0
    %2849 = vmatpush1.msra.mxu0 0.0
    %2850 = vmatprep.subr.mxu0 0.0
    %2851 = vmatpush1.msra.mxu0 0.0
    %2852 = vmatprep.subr.mxu0 0.0
    %2853 = vmatpush1.msra.mxu0 0.0
    %2854 = vmatprep.subr.mxu0 0.0
    %2855 = vmatpush1.msra.mxu0 0.0
    %2856 = vmatprep.subr.mxu0 0.0
    %2857 = vmatpush1.msra.mxu0 0.0
    %2858 = vmatprep.subr.mxu0 0.0
    %2859 = vmatpush1.msra.mxu0 0.0
    %2860 = vmatprep.subr.mxu0 0.0
    %2861 = vmatpush1.msra.mxu0 0.0
    %2862 = vmatprep.subr.mxu0 0.0
    %2863 = vmatpush1.msra.mxu0 0.0
    %2864 = vmatprep.subr.mxu0 0.0
    %2865 = vmatpush1.msra.mxu0 0.0
    %2866 = vmatprep.subr.mxu0 0.0
    %2867 = vmatpush1.msra.mxu0 0.0
    %2868 = vmatprep.subr.mxu0 0.0
    %2869 = vmatpush1.msra.mxu0 0.0
    %2870 = vmatprep.subr.mxu0 0.0
    %2871 = vmatpush1.msra.mxu0 0.0
    %2872 = vmatprep.subr.mxu0 0.0
    %2873 = vmatpush1.msra.mxu0 0.0
    %2874 = vmatprep.subr.mxu0 0.0
    %2875 = vmatpush1.msra.mxu0 0.0
    %2876 = vmatprep.subr.mxu0 0.0
    %2877 = vmatpush1.msra.mxu0 0.0
    %2878 = vmatprep.subr.mxu0 0.0
    %2879 = vmatpush1.msra.mxu0 0.0
    %2880 = vmatprep.mubr.f32.mxu0 0.0
    %2881 = vmatmul.mubr.f32.gmra.mrb[0].mxu0 %v2790
    %v2882 = vpop.f32.mrb[0].mxu0
    %v2883 = vadd.f32 %v2814, %v2882
    %v2884 = vpop.f32.mrb[0].mxu0
    %2885 = vdwg.mxu0
    %v2886 = vld [vmem:[#allocation27] sm:$0xff]
    %v2887 = vld [vmem:[#allocation27 + $0x8] sm:$0xff]
    %v2888 = vld [vmem:[#allocation27 + $0x10] sm:$0xff]
    %v2889 = vld [vmem:[#allocation27 + $0x18] sm:$0xff]
    %v2890 = vld [vmem:[#allocation27 + $0x20] sm:$0xff]
    %v2891 = vld [vmem:[#allocation27 + $0x28] sm:$0xff]
    %v2892 = vld [vmem:[#allocation27 + $0x30] sm:$0xff]
    %v2893 = vld [vmem:[#allocation27 + $0x38] sm:$0xff]
    %v2894 = vld [vmem:[#allocation27 + $0x40] sm:$0xff]
    %v2895 = vld [vmem:[#allocation27 + $0x48] sm:$0xff]
    %v2896 = vld [vmem:[#allocation27 + $0x50] sm:$0xff]
    %v2897 = vld [vmem:[#allocation27 + $0x58] sm:$0xff]
    %v2898 = vld [vmem:[#allocation27 + $0x60] sm:$0xff]
    %v2899 = vld [vmem:[#allocation27 + $0x68] sm:$0xff]
    %v2900 = vld [vmem:[#allocation27 + $0x70] sm:$0xff]
    %v2901 = vld [vmem:[#allocation27 + $0x78] sm:$0xff]
    %v2902 = vld [vmem:[#allocation28] sm:$0x1]
    %v2904 = vlaneseq
    %v2905 = vshrl.u32 %v2904, 7
    %v2906 = vsub.s32 0, %v2905
    %v2907 = vrot.slane %v2902, %v2906
    %2909 = vmatprep.subr.mxu0 0.0
    %2910 = vmatpush1.msra.mxu0 %v2886
    %2911 = vmatprep.subr.mxu0 0.0
    %2912 = vmatpush1.msra.mxu0 %v2887
    %2913 = vmatprep.subr.mxu0 0.0
    %2914 = vmatpush1.msra.mxu0 %v2888
    %2915 = vmatprep.subr.mxu0 0.0
    %2916 = vmatpush1.msra.mxu0 %v2889
    %2917 = vmatprep.subr.mxu0 0.0
    %2918 = vmatpush1.msra.mxu0 %v2890
    %2919 = vmatprep.subr.mxu0 0.0
    %2920 = vmatpush1.msra.mxu0 %v2891
    %2921 = vmatprep.subr.mxu0 0.0
    %2922 = vmatpush1.msra.mxu0 %v2892
    %2923 = vmatprep.subr.mxu0 0.0
    %2924 = vmatpush1.msra.mxu0 %v2893
    %2925 = vmatprep.subr.mxu0 0.0
    %2926 = vmatpush1.msra.mxu0 %v2894
    %2927 = vmatprep.subr.mxu0 0.0
    %2928 = vmatpush1.msra.mxu0 %v2895
    %2929 = vmatprep.subr.mxu0 0.0
    %2930 = vmatpush1.msra.mxu0 %v2896
    %2931 = vmatprep.subr.mxu0 0.0
    %2932 = vmatpush1.msra.mxu0 %v2897
    %2933 = vmatprep.subr.mxu0 0.0
    %2934 = vmatpush1.msra.mxu0 %v2898
    %2935 = vmatprep.subr.mxu0 0.0
    %2936 = vmatpush1.msra.mxu0 %v2899
    %2937 = vmatprep.subr.mxu0 0.0
    %2938 = vmatpush1.msra.mxu0 %v2900
    %2939 = vmatprep.subr.mxu0 0.0
    %2940 = vmatpush1.msra.mxu0 %v2901
    %2941 = vmatprep.subr.mxu0 0.0
    %2942 = vmatpush1.msra.mxu0 0.0
    %2943 = vmatprep.subr.mxu0 0.0
    %2944 = vmatpush1.msra.mxu0 0.0
    %2945 = vmatprep.subr.mxu0 0.0
    %2946 = vmatpush1.msra.mxu0 0.0
    %2947 = vmatprep.subr.mxu0 0.0
    %2948 = vmatpush1.msra.mxu0 0.0
    %2949 = vmatprep.subr.mxu0 0.0
    %2950 = vmatpush1.msra.mxu0 0.0
    %2951 = vmatprep.subr.mxu0 0.0
    %2952 = vmatpush1.msra.mxu0 0.0
    %2953 = vmatprep.subr.mxu0 0.0
    %2954 = vmatpush1.msra.mxu0 0.0
    %2955 = vmatprep.subr.mxu0 0.0
    %2956 = vmatpush1.msra.mxu0 0.0
    %2957 = vmatprep.subr.mxu0 0.0
    %2958 = vmatpush1.msra.mxu0 0.0
    %2959 = vmatprep.subr.mxu0 0.0
    %2960 = vmatpush1.msra.mxu0 0.0
    %2961 = vmatprep.subr.mxu0 0.0
    %2962 = vmatpush1.msra.mxu0 0.0
    %2963 = vmatprep.subr.mxu0 0.0
    %2964 = vmatpush1.msra.mxu0 0.0
    %2965 = vmatprep.subr.mxu0 0.0
    %2966 = vmatpush1.msra.mxu0 0.0
    %2967 = vmatprep.subr.mxu0 0.0
    %2968 = vmatpush1.msra.mxu0 0.0
    %2969 = vmatprep.subr.mxu0 0.0
    %2970 = vmatpush1.msra.mxu0 0.0
    %2971 = vmatprep.subr.mxu0 0.0
    %2972 = vmatpush1.msra.mxu0 0.0
    %2973 = vmatprep.mubr.f32.mxu0 0.0
    %2974 = vmatmul.mubr.f32.gmra.mrb[0].mxu0 %v2883
    %v2975 = vpop.f32.mrb[0].mxu0
    %v2976 = vadd.f32 %v2907, %v2975
    %v2977 = vpop.f32.mrb[0].mxu0
    %2978 = vdwg.mxu0
    %v2979 = vld [vmem:[#allocation30] sm:$0xff]
    %v2980 = vld [vmem:[#allocation30 + $0x8] sm:$0xff]
    %v2981 = vld [vmem:[#allocation30 + $0x10] sm:$0xff]
    %v2982 = vld [vmem:[#allocation30 + $0x18] sm:$0xff]
    %v2983 = vld [vmem:[#allocation30 + $0x20] sm:$0xff]
    %v2984 = vld [vmem:[#allocation30 + $0x28] sm:$0xff]
    %v2985 = vld [vmem:[#allocation30 + $0x30] sm:$0xff]
    %v2986 = vld [vmem:[#allocation30 + $0x38] sm:$0xff]
    %v2987 = vld [vmem:[#allocation30 + $0x40] sm:$0xff]
    %v2988 = vld [vmem:[#allocation30 + $0x48] sm:$0xff]
    %v2989 = vld [vmem:[#allocation30 + $0x50] sm:$0xff]
    %v2990 = vld [vmem:[#allocation30 + $0x58] sm:$0xff]
    %v2991 = vld [vmem:[#allocation30 + $0x60] sm:$0xff]
    %v2992 = vld [vmem:[#allocation30 + $0x68] sm:$0xff]
    %v2993 = vld [vmem:[#allocation30 + $0x70] sm:$0xff]
    %v2994 = vld [vmem:[#allocation30 + $0x78] sm:$0xff]
    %v2995 = vld [vmem:[#allocation31] sm:$0x1]
    %v2997 = vlaneseq
    %v2998 = vshrl.u32 %v2997, 7
    %v2999 = vsub.s32 0, %v2998
    %v3000 = vrot.slane %v2995, %v2999
    %3002 = vmatprep.subr.mxu0 0.0
    %3003 = vmatpush1.msra.mxu0 %v2979
    %3004 = vmatprep.subr.mxu0 0.0
    %3005 = vmatpush1.msra.mxu0 %v2980
    %3006 = vmatprep.subr.mxu0 0.0
    %3007 = vmatpush1.msra.mxu0 %v2981
    %3008 = vmatprep.subr.mxu0 0.0
    %3009 = vmatpush1.msra.mxu0 %v2982
    %3010 = vmatprep.subr.mxu0 0.0
    %3011 = vmatpush1.msra.mxu0 %v2983
    %3012 = vmatprep.subr.mxu0 0.0
    %3013 = vmatpush1.msra.mxu0 %v2984
    %3014 = vmatprep.subr.mxu0 0.0
    %3015 = vmatpush1.msra.mxu0 %v2985
    %3016 = vmatprep.subr.mxu0 0.0
    %3017 = vmatpush1.msra.mxu0 %v2986
    %3018 = vmatprep.subr.mxu0 0.0
    %3019 = vmatpush1.msra.mxu0 %v2987
    %3020 = vmatprep.subr.mxu0 0.0
    %3021 = vmatpush1.msra.mxu0 %v2988
    %3022 = vmatprep.subr.mxu0 0.0
    %3023 = vmatpush1.msra.mxu0 %v2989
    %3024 = vmatprep.subr.mxu0 0.0
    %3025 = vmatpush1.msra.mxu0 %v2990
    %3026 = vmatprep.subr.mxu0 0.0
    %3027 = vmatpush1.msra.mxu0 %v2991
    %3028 = vmatprep.subr.mxu0 0.0
    %3029 = vmatpush1.msra.mxu0 %v2992
    %3030 = vmatprep.subr.mxu0 0.0
    %3031 = vmatpush1.msra.mxu0 %v2993
    %3032 = vmatprep.subr.mxu0 0.0
    %3033 = vmatpush1.msra.mxu0 %v2994
    %3034 = vmatprep.subr.mxu0 0.0
    %3035 = vmatpush1.msra.mxu0 0.0
    %3036 = vmatprep.subr.mxu0 0.0
    %3037 = vmatpush1.msra.mxu0 0.0
    %3038 = vmatprep.subr.mxu0 0.0
    %3039 = vmatpush1.msra.mxu0 0.0
    %3040 = vmatprep.subr.mxu0 0.0
    %3041 = vmatpush1.msra.mxu0 0.0
    %3042 = vmatprep.subr.mxu0 0.0
    %3043 = vmatpush1.msra.mxu0 0.0
    %3044 = vmatprep.subr.mxu0 0.0
    %3045 = vmatpush1.msra.mxu0 0.0
    %3046 = vmatprep.subr.mxu0 0.0
    %3047 = vmatpush1.msra.mxu0 0.0
    %3048 = vmatprep.subr.mxu0 0.0
    %3049 = vmatpush1.msra.mxu0 0.0
    %3050 = vmatprep.subr.mxu0 0.0
    %3051 = vmatpush1.msra.mxu0 0.0
    %3052 = vmatprep.subr.mxu0 0.0
    %3053 = vmatpush1.msra.mxu0 0.0
    %3054 = vmatprep.subr.mxu0 0.0
    %3055 = vmatpush1.msra.mxu0 0.0
    %3056 = vmatprep.subr.mxu0 0.0
    %3057 = vmatpush1.msra.mxu0 0.0
    %3058 = vmatprep.subr.mxu0 0.0
    %3059 = vmatpush1.msra.mxu0 0.0
    %3060 = vmatprep.subr.mxu0 0.0
    %3061 = vmatpush1.msra.mxu0 0.0
    %3062 = vmatprep.subr.mxu0 0.0
    %3063 = vmatpush1.msra.mxu0 0.0
    %3064 = vmatprep.subr.mxu0 0.0
    %3065 = vmatpush1.msra.mxu0 0.0
    %3066 = vmatprep.mubr.f32.mxu0 0.0
    %3067 = vmatmul.mubr.f32.gmra.mrb[0].mxu0 %v2976
    %v3068 = vpop.f32.mrb[0].mxu0
    %v3069 = vadd.f32 %v3000, %v3068
    %v3070 = vpop.f32.mrb[0].mxu0
    %3071 = vdwg.mxu0
    %v3072 = vld [vmem:[#allocation33] sm:$0xff]
    %v3073 = vld [vmem:[#allocation33 + $0x8] sm:$0xff]
    %v3074 = vld [vmem:[#allocation33 + $0x10] sm:$0xff]
    %v3075 = vld [vmem:[#allocation33 + $0x18] sm:$0xff]
    %v3076 = vld [vmem:[#allocation33 + $0x20] sm:$0xff]
    %v3077 = vld [vmem:[#allocation33 + $0x28] sm:$0xff]
    %v3078 = vld [vmem:[#allocation33 + $0x30] sm:$0xff]
    %v3079 = vld [vmem:[#allocation33 + $0x38] sm:$0xff]
    %v3080 = vld [vmem:[#allocation33 + $0x40] sm:$0xff]
    %v3081 = vld [vmem:[#allocation33 + $0x48] sm:$0xff]
    %v3082 = vld [vmem:[#allocation33 + $0x50] sm:$0xff]
    %v3083 = vld [vmem:[#allocation33 + $0x58] sm:$0xff]
    %v3084 = vld [vmem:[#allocation33 + $0x60] sm:$0xff]
    %v3085 = vld [vmem:[#allocation33 + $0x68] sm:$0xff]
    %v3086 = vld [vmem:[#allocation33 + $0x70] sm:$0xff]
    %v3087 = vld [vmem:[#allocation33 + $0x78] sm:$0xff]
    %v3088 = vld [vmem:[%s18] sm:$0x1]
    %v3090 = vlaneseq
    %v3091 = vshrl.u32 %v3090, 7
    %v3092 = vsub.s32 0, %v3091
    %v3093 = vrot.slane %v3088, %v3092
    %3095 = vmatprep.subr.mxu0 0.0
    %3096 = vmatpush1.msra.mxu0 %v3072
    %3097 = vmatprep.subr.mxu0 0.0
    %3098 = vmatpush1.msra.mxu0 %v3073
    %3099 = vmatprep.subr.mxu0 0.0
    %3100 = vmatpush1.msra.mxu0 %v3074
    %3101 = vmatprep.subr.mxu0 0.0
    %3102 = vmatpush1.msra.mxu0 %v3075
    %3103 = vmatprep.subr.mxu0 0.0
    %3104 = vmatpush1.msra.mxu0 %v3076
    %3105 = vmatprep.subr.mxu0 0.0
    %3106 = vmatpush1.msra.mxu0 %v3077
    %3107 = vmatprep.subr.mxu0 0.0
    %3108 = vmatpush1.msra.mxu0 %v3078
    %3109 = vmatprep.subr.mxu0 0.0
    %3110 = vmatpush1.msra.mxu0 %v3079
    %3111 = vmatprep.subr.mxu0 0.0
    %3112 = vmatpush1.msra.mxu0 %v3080
    %3113 = vmatprep.subr.mxu0 0.0
    %3114 = vmatpush1.msra.mxu0 %v3081
    %3115 = vmatprep.subr.mxu0 0.0
    %3116 = vmatpush1.msra.mxu0 %v3082
    %3117 = vmatprep.subr.mxu0 0.0
    %3118 = vmatpush1.msra.mxu0 %v3083
    %3119 = vmatprep.subr.mxu0 0.0
    %3120 = vmatpush1.msra.mxu0 %v3084
    %3121 = vmatprep.subr.mxu0 0.0
    %3122 = vmatpush1.msra.mxu0 %v3085
    %3123 = vmatprep.subr.mxu0 0.0
    %3124 = vmatpush1.msra.mxu0 %v3086
    %3125 = vmatprep.subr.mxu0 0.0
    %3126 = vmatpush1.msra.mxu0 %v3087
    %3127 = vmatprep.subr.mxu0 0.0
    %3128 = vmatpush1.msra.mxu0 0.0
    %3129 = vmatprep.subr.mxu0 0.0
    %3130 = vmatpush1.msra.mxu0 0.0
    %3131 = vmatprep.subr.mxu0 0.0
    %3132 = vmatpush1.msra.mxu0 0.0
    %3133 = vmatprep.subr.mxu0 0.0
    %3134 = vmatpush1.msra.mxu0 0.0
    %3135 = vmatprep.subr.mxu0 0.0
    %3136 = vmatpush1.msra.mxu0 0.0
    %3137 = vmatprep.subr.mxu0 0.0
    %3138 = vmatpush1.msra.mxu0 0.0
    %3139 = vmatprep.subr.mxu0 0.0
    %3140 = vmatpush1.msra.mxu0 0.0
    %3141 = vmatprep.subr.mxu0 0.0
    %3142 = vmatpush1.msra.mxu0 0.0
    %3143 = vmatprep.subr.mxu0 0.0
    %3144 = vmatpush1.msra.mxu0 0.0
    %3145 = vmatprep.subr.mxu0 0.0
    %3146 = vmatpush1.msra.mxu0 0.0
    %3147 = vmatprep.subr.mxu0 0.0
    %3148 = vmatpush1.msra.mxu0 0.0
    %3149 = vmatprep.subr.mxu0 0.0
    %3150 = vmatpush1.msra.mxu0 0.0
    %3151 = vmatprep.subr.mxu0 0.0
    %3152 = vmatpush1.msra.mxu0 0.0
    %3153 = vmatprep.subr.mxu0 0.0
    %3154 = vmatpush1.msra.mxu0 0.0
    %3155 = vmatprep.subr.mxu0 0.0
    %3156 = vmatpush1.msra.mxu0 0.0
    %3157 = vmatprep.subr.mxu0 0.0
    %3158 = vmatpush1.msra.mxu0 0.0
    %3159 = vmatprep.mubr.f32.mxu0 0.0
    %3160 = vmatmul.mubr.f32.gmra.mrb[0].mxu0 %v3069
    %v3161 = vpop.f32.mrb[0].mxu0
    %v3162 = vadd.f32 %v3093, %v3161
    %v3163 = vpop.f32.mrb[0].mxu0
    %3164 = vdwg.mxu0
    %v3165 = vld [vmem:[%s19] sm:$0xff]
    %v3166 = vld [vmem:[%s19 + $0x8] sm:$0xff]
    %v3167 = vld [vmem:[%s19 + $0x10] sm:$0xff]
    %v3168 = vld [vmem:[%s19 + $0x18] sm:$0xff]
    %v3169 = vld [vmem:[%s19 + $0x20] sm:$0xff]
    %v3170 = vld [vmem:[%s19 + $0x28] sm:$0xff]
    %v3171 = vld [vmem:[%s19 + $0x30] sm:$0xff]
    %v3172 = vld [vmem:[%s19 + $0x38] sm:$0xff]
    %v3173 = vld [vmem:[%s19 + $0x40] sm:$0xff]
    %v3174 = vld [vmem:[%s19 + $0x48] sm:$0xff]
    %v3175 = vld [vmem:[%s19 + $0x50] sm:$0xff]
    %v3176 = vld [vmem:[%s19 + $0x58] sm:$0xff]
    %v3177 = vld [vmem:[%s19 + $0x60] sm:$0xff]
    %v3178 = vld [vmem:[%s19 + $0x68] sm:$0xff]
    %v3179 = vld [vmem:[%s19 + $0x70] sm:$0xff]
    %v3180 = vld [vmem:[%s19 + $0x78] sm:$0xff]
    %v3181 = vld [vmem:[%s20] sm:$0x1]
    %v3183 = vlaneseq
    %v3184 = vshrl.u32 %v3183, 7
    %v3185 = vsub.s32 0, %v3184
    %v3186 = vrot.slane %v3181, %v3185
    %3188 = vmatprep.subr.mxu0 0.0
    %3189 = vmatpush1.msra.mxu0 %v3165
    %3190 = vmatprep.subr.mxu0 0.0
    %3191 = vmatpush1.msra.mxu0 %v3166
    %3192 = vmatprep.subr.mxu0 0.0
    %3193 = vmatpush1.msra.mxu0 %v3167
    %3194 = vmatprep.subr.mxu0 0.0
    %3195 = vmatpush1.msra.mxu0 %v3168
    %3196 = vmatprep.subr.mxu0 0.0
    %3197 = vmatpush1.msra.mxu0 %v3169
    %3198 = vmatprep.subr.mxu0 0.0
    %3199 = vmatpush1.msra.mxu0 %v3170
    %3200 = vmatprep.subr.mxu0 0.0
    %3201 = vmatpush1.msra.mxu0 %v3171
    %3202 = vmatprep.subr.mxu0 0.0
    %3203 = vmatpush1.msra.mxu0 %v3172
    %3204 = vmatprep.subr.mxu0 0.0
    %3205 = vmatpush1.msra.mxu0 %v3173
    %3206 = vmatprep.subr.mxu0 0.0
    %3207 = vmatpush1.msra.mxu0 %v3174
    %3208 = vmatprep.subr.mxu0 0.0
    %3209 = vmatpush1.msra.mxu0 %v3175
    %3210 = vmatprep.subr.mxu0 0.0
    %3211 = vmatpush1.msra.mxu0 %v3176
    %3212 = vmatprep.subr.mxu0 0.0
    %3213 = vmatpush1.msra.mxu0 %v3177
    %3214 = vmatprep.subr.mxu0 0.0
    %3215 = vmatpush1.msra.mxu0 %v3178
    %3216 = vmatprep.subr.mxu0 0.0
    %3217 = vmatpush1.msra.mxu0 %v3179
    %3218 = vmatprep.subr.mxu0 0.0
    %3219 = vmatpush1.msra.mxu0 %v3180
    %3220 = vmatprep.subr.mxu0 0.0
    %3221 = vmatpush1.msra.mxu0 0.0
    %3222 = vmatprep.subr.mxu0 0.0
    %3223 = vmatpush1.msra.mxu0 0.0
    %3224 = vmatprep.subr.mxu0 0.0
    %3225 = vmatpush1.msra.mxu0 0.0
    %3226 = vmatprep.subr.mxu0 0.0
    %3227 = vmatpush1.msra.mxu0 0.0
    %3228 = vmatprep.subr.mxu0 0.0
    %3229 = vmatpush1.msra.mxu0 0.0
    %3230 = vmatprep.subr.mxu0 0.0
    %3231 = vmatpush1.msra.mxu0 0.0
    %3232 = vmatprep.subr.mxu0 0.0
    %3233 = vmatpush1.msra.mxu0 0.0
    %3234 = vmatprep.subr.mxu0 0.0
    %3235 = vmatpush1.msra.mxu0 0.0
    %3236 = vmatprep.subr.mxu0 0.0
    %3237 = vmatpush1.msra.mxu0 0.0
    %3238 = vmatprep.subr.mxu0 0.0
    %3239 = vmatpush1.msra.mxu0 0.0
    %3240 = vmatprep.subr.mxu0 0.0
    %3241 = vmatpush1.msra.mxu0 0.0
    %3242 = vmatprep.subr.mxu0 0.0
    %3243 = vmatpush1.msra.mxu0 0.0
    %3244 = vmatprep.subr.mxu0 0.0
    %3245 = vmatpush1.msra.mxu0 0.0
    %3246 = vmatprep.subr.mxu0 0.0
    %3247 = vmatpush1.msra.mxu0 0.0
    %3248 = vmatprep.subr.mxu0 0.0
    %3249 = vmatpush1.msra.mxu0 0.0
    %3250 = vmatprep.subr.mxu0 0.0
    %3251 = vmatpush1.msra.mxu0 0.0
    %3252 = vmatprep.mubr.f32.mxu0 0.0
    %3253 = vmatmul.mubr.f32.gmra.mrb[0].mxu0 %v3162
    %v3254 = vpop.f32.mrb[0].mxu0
    %v3255 = vadd.f32 %v3186, %v3254
    %v3256 = vpop.f32.mrb[0].mxu0
    %3257 = vdwg.mxu0
    %v3258 = vld [vmem:[%s21] sm:$0xff]
    %v3259 = vld [vmem:[%s21 + $0x8] sm:$0xff]
    %v3260 = vld [vmem:[%s21 + $0x10] sm:$0xff]
    %v3261 = vld [vmem:[%s21 + $0x18] sm:$0xff]
    %v3262 = vld [vmem:[%s22] sm:$0x1]
    %v3264 = vlaneseq
    %v3265 = vshrl.u32 %v3264, 7
    %v3266 = vsub.s32 0, %v3265
    %v3267 = vrot.slane %v3262, %v3266
    %v3270 = vsel %vm361, %v3255, 0
    %3272 = vmatprep.subr.mxu0 0.0
    %3273 = vmatpush1.msra.mxu0 %v3258
    %3274 = vmatprep.subr.mxu0 0.0
    %3275 = vmatpush1.msra.mxu0 %v3259
    %3276 = vmatprep.subr.mxu0 0.0
    %3277 = vmatpush1.msra.mxu0 %v3260
    %3278 = vmatprep.subr.mxu0 0.0
    %3279 = vmatpush1.msra.mxu0 %v3261
    %3280 = vmatprep.subr.mxu0 0.0
    %3281 = vmatpush1.msra.mxu0 0.0
    %3282 = vmatprep.subr.mxu0 0.0
    %3283 = vmatpush1.msra.mxu0 0.0
    %3284 = vmatprep.subr.mxu0 0.0
    %3285 = vmatpush1.msra.mxu0 0.0
    %3286 = vmatprep.subr.mxu0 0.0
    %3287 = vmatpush1.msra.mxu0 0.0
    %3288 = vmatprep.subr.mxu0 0.0
    %3289 = vmatpush1.msra.mxu0 0.0
    %3290 = vmatprep.subr.mxu0 0.0
    %3291 = vmatpush1.msra.mxu0 0.0
    %3292 = vmatprep.subr.mxu0 0.0
    %3293 = vmatpush1.msra.mxu0 0.0
    %3294 = vmatprep.subr.mxu0 0.0
    %3295 = vmatpush1.msra.mxu0 0.0
    %3296 = vmatprep.subr.mxu0 0.0
    %3297 = vmatpush1.msra.mxu0 0.0
    %3298 = vmatprep.subr.mxu0 0.0
    %3299 = vmatpush1.msra.mxu0 0.0
    %3300 = vmatprep.subr.mxu0 0.0
    %3301 = vmatpush1.msra.mxu0 0.0
    %3302 = vmatprep.subr.mxu0 0.0
    %3303 = vmatpush1.msra.mxu0 0.0
    %3304 = vmatprep.subr.mxu0 0.0
    %3305 = vmatpush1.msra.mxu0 0.0
    %3306 = vmatprep.subr.mxu0 0.0
    %3307 = vmatpush1.msra.mxu0 0.0
    %3308 = vmatprep.subr.mxu0 0.0
    %3309 = vmatpush1.msra.mxu0 0.0
    %3310 = vmatprep.subr.mxu0 0.0
    %3311 = vmatpush1.msra.mxu0 0.0
    %3312 = vmatprep.subr.mxu0 0.0
    %3313 = vmatpush1.msra.mxu0 0.0
    %3314 = vmatprep.subr.mxu0 0.0
    %3315 = vmatpush1.msra.mxu0 0.0
    %3316 = vmatprep.subr.mxu0 0.0
    %3317 = vmatpush1.msra.mxu0 0.0
    %3318 = vmatprep.subr.mxu0 0.0
    %3319 = vmatpush1.msra.mxu0 0.0
    %3320 = vmatprep.subr.mxu0 0.0
    %3321 = vmatpush1.msra.mxu0 0.0
    %3322 = vmatprep.subr.mxu0 0.0
    %3323 = vmatpush1.msra.mxu0 0.0
    %3324 = vmatprep.subr.mxu0 0.0
    %3325 = vmatpush1.msra.mxu0 0.0
    %3326 = vmatprep.subr.mxu0 0.0
    %3327 = vmatpush1.msra.mxu0 0.0
    %3328 = vmatprep.subr.mxu0 0.0
    %3329 = vmatpush1.msra.mxu0 0.0
    %3330 = vmatprep.subr.mxu0 0.0
    %3331 = vmatpush1.msra.mxu0 0.0
    %3332 = vmatprep.subr.mxu0 0.0
    %3333 = vmatpush1.msra.mxu0 0.0
    %3334 = vmatprep.subr.mxu0 0.0
    %3335 = vmatpush1.msra.mxu0 0.0
    %3336 = vmatprep.mubr.f32.mxu0 0.0
    %3337 = vmatmul.mubr.f32.gmra.mrb[0].mxu0 %v3270
    %v3338 = vpop.f32.mrb[0].mxu0
    %v3339 = vadd.f32 %v3267, %v3338
    %v3340 = vpop.f32.mrb[0].mxu0
    %3341 = vdwg.mxu0
    %v3342 = vld [vmem:[%s23] sm:$0xff]
    %v3343 = vld [vmem:[%s23 + $0x8] sm:$0xff]
    %v3344 = vld [vmem:[%s23 + $0x10] sm:$0xff]
    %v3345 = vld [vmem:[%s23 + $0x18] sm:$0xff]
    %v3346 = vld [vmem:[%s24] sm:$0x1]
    %v3348 = vlaneseq
    %v3349 = vshrl.u32 %v3348, 7
    %v3350 = vsub.s32 0, %v3349
    %v3351 = vrot.slane %v3346, %v3350
    %v3354 = vsel %vm361, %v3339, 0
    %3356 = vmatprep.subr.mxu0 0.0
    %3357 = vmatpush1.msra.mxu0 %v3342
    %3358 = vmatprep.subr.mxu0 0.0
    %3359 = vmatpush1.msra.mxu0 %v3343
    %3360 = vmatprep.subr.mxu0 0.0
    %3361 = vmatpush1.msra.mxu0 %v3344
    %3362 = vmatprep.subr.mxu0 0.0
    %3363 = vmatpush1.msra.mxu0 %v3345
    %3364 = vmatprep.subr.mxu0 0.0
    %3365 = vmatpush1.msra.mxu0 0.0
    %3366 = vmatprep.subr.mxu0 0.0
    %3367 = vmatpush1.msra.mxu0 0.0
    %3368 = vmatprep.subr.mxu0 0.0
    %3369 = vmatpush1.msra.mxu0 0.0
    %3370 = vmatprep.subr.mxu0 0.0
    %3371 = vmatpush1.msra.mxu0 0.0
    %3372 = vmatprep.subr.mxu0 0.0
    %3373 = vmatpush1.msra.mxu0 0.0
    %3374 = vmatprep.subr.mxu0 0.0
    %3375 = vmatpush1.msra.mxu0 0.0
    %3376 = vmatprep.subr.mxu0 0.0
    %3377 = vmatpush1.msra.mxu0 0.0
    %3378 = vmatprep.subr.mxu0 0.0
    %3379 = vmatpush1.msra.mxu0 0.0
    %3380 = vmatprep.subr.mxu0 0.0
    %3381 = vmatpush1.msra.mxu0 0.0
    %3382 = vmatprep.subr.mxu0 0.0
    %3383 = vmatpush1.msra.mxu0 0.0
    %3384 = vmatprep.subr.mxu0 0.0
    %3385 = vmatpush1.msra.mxu0 0.0
    %3386 = vmatprep.subr.mxu0 0.0
    %3387 = vmatpush1.msra.mxu0 0.0
    %3388 = vmatprep.subr.mxu0 0.0
    %3389 = vmatpush1.msra.mxu0 0.0
    %3390 = vmatprep.subr.mxu0 0.0
    %3391 = vmatpush1.msra.mxu0 0.0
    %3392 = vmatprep.subr.mxu0 0.0
    %3393 = vmatpush1.msra.mxu0 0.0
    %3394 = vmatprep.subr.mxu0 0.0
    %3395 = vmatpush1.msra.mxu0 0.0
    %3396 = vmatprep.subr.mxu0 0.0
    %3397 = vmatpush1.msra.mxu0 0.0
    %3398 = vmatprep.subr.mxu0 0.0
    %3399 = vmatpush1.msra.mxu0 0.0
    %3400 = vmatprep.subr.mxu0 0.0
    %3401 = vmatpush1.msra.mxu0 0.0
    %3402 = vmatprep.subr.mxu0 0.0
    %3403 = vmatpush1.msra.mxu0 0.0
    %3404 = vmatprep.subr.mxu0 0.0
    %3405 = vmatpush1.msra.mxu0 0.0
    %3406 = vmatprep.subr.mxu0 0.0
    %3407 = vmatpush1.msra.mxu0 0.0
    %3408 = vmatprep.subr.mxu0 0.0
    %3409 = vmatpush1.msra.mxu0 0.0
    %3410 = vmatprep.subr.mxu0 0.0
    %3411 = vmatpush1.msra.mxu0 0.0
    %3412 = vmatprep.subr.mxu0 0.0
    %3413 = vmatpush1.msra.mxu0 0.0
    %3414 = vmatprep.subr.mxu0 0.0
    %3415 = vmatpush1.msra.mxu0 0.0
    %3416 = vmatprep.subr.mxu0 0.0
    %3417 = vmatpush1.msra.mxu0 0.0
    %3418 = vmatprep.subr.mxu0 0.0
    %3419 = vmatpush1.msra.mxu0 0.0
    %3420 = vmatprep.mubr.f32.mxu0 0.0
    %3421 = vmatmul.mubr.f32.gmra.mrb[0].mxu0 %v3354
    %v3422 = vpop.f32.mrb[0].mxu0
    %v3423 = vadd.f32 %v3351, %v3422
    %v3424 = vpop.f32.mrb[0].mxu0
    %3425 = vdwg.mxu0
    %v3426 = vld [vmem:[#allocation34] sm:$0xff]
    %v3427 = vld [vmem:[#allocation34 + $0x8] sm:$0xff]
    %v3428 = vld [vmem:[#allocation34 + $0x10] sm:$0xff]
    %v3429 = vld [vmem:[#allocation34 + $0x18] sm:$0xff]
    %v3430 = vld [vmem:[%s26] sm:$0x1]
    %v3432 = vlaneseq
    %v3433 = vshrl.u32 %v3432, 7
    %v3434 = vsub.s32 0, %v3433
    %v3435 = vrot.slane %v3430, %v3434
    %v3438 = vsel %vm361, %v3423, 0
    %3440 = vmatprep.subr.mxu0 0.0
    %3441 = vmatpush1.msra.mxu0 %v3426
    %3442 = vmatprep.subr.mxu0 0.0
    %3443 = vmatpush1.msra.mxu0 %v3427
    %3444 = vmatprep.subr.mxu0 0.0
    %3445 = vmatpush1.msra.mxu0 %v3428
    %3446 = vmatprep.subr.mxu0 0.0
    %3447 = vmatpush1.msra.mxu0 %v3429
    %3448 = vmatprep.subr.mxu0 0.0
    %3449 = vmatpush1.msra.mxu0 0.0
    %3450 = vmatprep.subr.mxu0 0.0
    %3451 = vmatpush1.msra.mxu0 0.0
    %3452 = vmatprep.subr.mxu0 0.0
    %3453 = vmatpush1.msra.mxu0 0.0
    %3454 = vmatprep.subr.mxu0 0.0
    %3455 = vmatpush1.msra.mxu0 0.0
    %3456 = vmatprep.subr.mxu0 0.0
    %3457 = vmatpush1.msra.mxu0 0.0
    %3458 = vmatprep.subr.mxu0 0.0
    %3459 = vmatpush1.msra.mxu0 0.0
    %3460 = vmatprep.subr.mxu0 0.0
    %3461 = vmatpush1.msra.mxu0 0.0
    %3462 = vmatprep.subr.mxu0 0.0
    %3463 = vmatpush1.msra.mxu0 0.0
    %3464 = vmatprep.subr.mxu0 0.0
    %3465 = vmatpush1.msra.mxu0 0.0
    %3466 = vmatprep.subr.mxu0 0.0
    %3467 = vmatpush1.msra.mxu0 0.0
    %3468 = vmatprep.subr.mxu0 0.0
    %3469 = vmatpush1.msra.mxu0 0.0
    %3470 = vmatprep.subr.mxu0 0.0
    %3471 = vmatpush1.msra.mxu0 0.0
    %3472 = vmatprep.subr.mxu0 0.0
    %3473 = vmatpush1.msra.mxu0 0.0
    %3474 = vmatprep.subr.mxu0 0.0
    %3475 = vmatpush1.msra.mxu0 0.0
    %3476 = vmatprep.subr.mxu0 0.0
    %3477 = vmatpush1.msra.mxu0 0.0
    %3478 = vmatprep.subr.mxu0 0.0
    %3479 = vmatpush1.msra.mxu0 0.0
    %3480 = vmatprep.subr.mxu0 0.0
    %3481 = vmatpush1.msra.mxu0 0.0
    %3482 = vmatprep.subr.mxu0 0.0
    %3483 = vmatpush1.msra.mxu0 0.0
    %3484 = vmatprep.subr.mxu0 0.0
    %3485 = vmatpush1.msra.mxu0 0.0
    %3486 = vmatprep.subr.mxu0 0.0
    %3487 = vmatpush1.msra.mxu0 0.0
    %3488 = vmatprep.subr.mxu0 0.0
    %3489 = vmatpush1.msra.mxu0 0.0
    %3490 = vmatprep.subr.mxu0 0.0
    %3491 = vmatpush1.msra.mxu0 0.0
    %3492 = vmatprep.subr.mxu0 0.0
    %3493 = vmatpush1.msra.mxu0 0.0
    %3494 = vmatprep.subr.mxu0 0.0
    %3495 = vmatpush1.msra.mxu0 0.0
    %3496 = vmatprep.subr.mxu0 0.0
    %3497 = vmatpush1.msra.mxu0 0.0
    %3498 = vmatprep.subr.mxu0 0.0
    %3499 = vmatpush1.msra.mxu0 0.0
    %3500 = vmatprep.subr.mxu0 0.0
    %3501 = vmatpush1.msra.mxu0 0.0
    %3502 = vmatprep.subr.mxu0 0.0
    %3503 = vmatpush1.msra.mxu0 0.0
    %3504 = vmatprep.mubr.f32.mxu0 0.0
    %3505 = vmatmul.mubr.f32.gmra.mrb[0].mxu0 %v3438
    %v3506 = vpop.f32.mrb[0].mxu0
    %v3507 = vadd.f32 %v3435, %v3506
    %v3508 = vpop.f32.mrb[0].mxu0
    %3509 = vdwg.mxu0
    %3510 = vst [vmem:[#allocation36] sm:$0xff] %v3507
    // Predicated region
    $region182: #{tpu_custom_call.1} parent=1 // pred_check
      _
    $region183: #{tpu_custom_call.1} parent=1 // pred_check_branch
      %3512 = sbr.rel (0) target = $region185
    $region184: #{tpu_custom_call.1} parent=1 // pred_region
      %s3514 = ssub.s32 128, 128
      %3515 = vsyncadd [#allocation8], %s3514
      %s3517 = sshll.u32 [#allocation36], 4
      %s3518 = int_to_ptr.vmem [resolvable:$true] %s3517
      %3520 = dma.vmem_to_hbm [thread:$0]  %s3518, 128, %s27, [#allocation8]
    $region185: #{tpu_custom_call.1} parent=1 // pred_fallthru
      _
    // Predicated region
    $region186: #{tpu_custom_call.1} parent=1 // pred_check
      _
    $region187: #{tpu_custom_call.1} parent=1 // pred_check_branch
      %3522 = sbr.rel (0) target = $region189
    $region188: #{tpu_custom_call.1} parent=1 // pred_region
      %3523 = dma.done [#allocation8], 128
    $region189: #{tpu_custom_call.1} parent=1 // pred_fallthru
      _
    %3524 = vsyncpa [#allocation7], 1
    %3525 = vsyncpa [#allocation14], 1
    %3526 = vsyncpa [#allocation17], 1
    %3527 = vsyncpa [#allocation20], 1
    %3528 = vsyncpa [#allocation23], 1
    %3529 = vsyncpa [#allocation26], 1
    %3530 = vsyncpa [#allocation29], 1
    %3531 = vsyncpa [#allocation32], 1
    %3532 = vsyncpa [#allocation35], 1
    %3533 = vsyncpa [#allocation8], 1
    %3534 = vsyncpa [#allocation9], 1
    %3535 = vsyncpa [#allocation11], 1

</llo_original>
